<compile_context>
chip_gen: v6e
topology: v6e:2x2x1
jax: 0.10.0
libtpu: 0.0.40
codegen_flags: <defaults>
</compile_context>

<pallas_src>
import functools

import jax
import jax.numpy as jnp
from jax import lax
from jax.experimental import pallas as pl
from jax.experimental.pallas import tpu as pltpu


# ---------------------------------------------------------------------------
# Kernel 1: 1x1 conv + folded BatchNorm + optional ReLU.
#   - fused channel split: reads x[:, c_off:c_off+C_in] (static slice in VMEM)
#   - fused stride-2 decimation: optional right-multiply by a constant 0/1
#     spatial selection matrix (MXU matmul).
# ---------------------------------------------------------------------------
def _pw_kernel(x_ref, w_ref, s_ref, b_ref, o_ref, *, c_off, c_in, relu):
    xv = x_ref[0].astype(jnp.float32)                 # (C_total, S)
    xt = xv[c_off:c_off + c_in, :]                    # fused Split (no HBM copy)
    y = jnp.dot(w_ref[...], xt, preferred_element_type=jnp.float32)
    y = y * s_ref[...] + b_ref[...]
    if relu:
        y = jnp.maximum(y, 0.0)
    o_ref[0] = y.astype(o_ref.dtype)


def _pw_sel_kernel(x_ref, w_ref, d_ref, s_ref, b_ref, o_ref, *, c_off, c_in, relu):
    xv = x_ref[0].astype(jnp.float32)                 # (C_total, S)
    xt = xv[c_off:c_off + c_in, :]                    # fused Split
    xd = jnp.dot(xt, d_ref[...], preferred_element_type=jnp.float32)  # stride-2 decimation
    y = jnp.dot(w_ref[...], xd, preferred_element_type=jnp.float32)
    y = y * s_ref[...] + b_ref[...]
    if relu:
        y = jnp.maximum(y, 0.0)
    o_ref[0] = y.astype(o_ref.dtype)


def pointwise_conv_bn_act(x, w, scale, bias, *, c_off=0, relu=True, spatial_sel=None):
    """x: (N, C_total, S) channel-major.  Returns (N, C_out, S_out)."""
    N, C_total, S = x.shape
    C_out, C_in = w.shape
    w2 = w.astype(jnp.float32)
    s2 = scale.reshape(C_out, 1).astype(jnp.float32)
    b2 = bias.reshape(C_out, 1).astype(jnp.float32)

    base_specs = [
        pl.BlockSpec((1, C_total, S), lambda n: (n, 0, 0)),
        pl.BlockSpec((C_out, C_in), lambda n: (0, 0)),
    ]
    tail_specs = [
        pl.BlockSpec((C_out, 1), lambda n: (0, 0)),
        pl.BlockSpec((C_out, 1), lambda n: (0, 0)),
    ]

    if spatial_sel is None:
        S_out = S
        kernel = functools.partial(_pw_kernel, c_off=c_off, c_in=C_in, relu=relu)
        in_specs = base_specs + tail_specs
        args = (x, w2, s2, b2)
    else:
        S_out = spatial_sel.shape[1]
        kernel = functools.partial(_pw_sel_kernel, c_off=c_off, c_in=C_in, relu=relu)
        in_specs = base_specs + [pl.BlockSpec((S, S_out), lambda n: (0, 0))] + tail_specs
        args = (x, w2, spatial_sel.astype(jnp.float32), s2, b2)

    return pl.pallas_call(
        kernel,
        out_shape=jax.ShapeDtypeStruct((N, C_out, S_out), jnp.float32),
        grid=(N,),
        in_specs=in_specs,
        out_specs=pl.BlockSpec((1, C_out, S_out), lambda n: (n, 0, 0)),
        compiler_params=pltpu.CompilerParams(dimension_semantics=("parallel",)),
    )(*args)


# ---------------------------------------------------------------------------
# Kernel 2: depthwise 3x3 conv (pad 1, computed at stride 1) + folded BatchNorm.
# Stride-2 users fold the spatial decimation into the *next* 1x1-conv kernel.
# ---------------------------------------------------------------------------
def _dw_kernel(x_ref, w_ref, s_ref, b_ref, o_ref, *, C, H, W):
    xv = x_ref[0].astype(jnp.float32)                           # (C, H, W)
    zrow = jnp.zeros((C, 1, W), jnp.float32)
    zcol = jnp.zeros((C, H + 2, 1), jnp.float32)
    pv = jnp.concatenate([zrow, xv, zrow], axis=1)              # pad rows
    pv = jnp.concatenate([zcol, pv, zcol], axis=2)              # pad cols -> (C, H+2, W+2)
    wt = w_ref[...]                                             # (C, 1, 9)
    acc = jnp.zeros((C, H, W), jnp.float32)
    for dy in range(3):
        for dx in range(3):
            k = dy * 3 + dx
            acc = acc + wt[:, :, k:k + 1] * pv[:, dy:dy + H, dx:dx + W]
    o_ref[0] = (acc * s_ref[...] + b_ref[...]).astype(o_ref.dtype)


def depthwise3x3_bn(x_nchw, w33, scale, bias):
    """x: (N, C, H, W); w33: (C, 3, 3).  Stride-1, pad-1 depthwise conv + BN."""
    N, C, H, W = x_nchw.shape
    w9 = w33.reshape(C, 1, 9).astype(jnp.float32)
    s3 = scale.reshape(C, 1, 1).astype(jnp.float32)
    b3 = bias.reshape(C, 1, 1).astype(jnp.float32)
    kernel = functools.partial(_dw_kernel, C=C, H=H, W=W)
    return pl.pallas_call(
        kernel,
        out_shape=jax.ShapeDtypeStruct((N, C, H, W), jnp.float32),
        grid=(N,),
        in_specs=[
            pl.BlockSpec((1, C, H, W), lambda n: (n, 0, 0, 0)),
            pl.BlockSpec((C, 1, 9), lambda n: (0, 0, 0)),
            pl.BlockSpec((C, 1, 1), lambda n: (0, 0, 0)),
            pl.BlockSpec((C, 1, 1), lambda n: (0, 0, 0)),
        ],
        out_specs=pl.BlockSpec((1, C, H, W), lambda n: (n, 0, 0, 0)),
        compiler_params=pltpu.CompilerParams(dimension_semantics=("parallel",)),
    )(x_nchw, w9, s3, b3)


# ---------------------------------------------------------------------------
# Kernel 3: fused torch.cat([a_half, b], 1) + channel Shuffle(groups=2).
# Writes the interleaved channel layout directly:  out[2i] = a[a_off+i],
# out[2i+1] = b[i].  The split's x1 pass-through is read here from the original
# block input (a_ref), so Split never materializes.
# ---------------------------------------------------------------------------
def _concat_shuffle_kernel(a_ref, b_ref, o_ref, *, a_off, c_half):
    av = a_ref[0]
    bv = b_ref[0]
    rows = []
    for i in range(c_half):
        rows.append(av[a_off + i:a_off + i + 1, :])
        rows.append(bv[i:i + 1, :])
    # TODO(synk): for large channel counts replace this unrolled interleave with
    # a strided-DMA / relayout based implementation.
    o_ref[0] = jnp.concatenate(rows, axis=0)


def concat_shuffle(a, b, *, a_off=0):
    """a: (N, Ca, S), b: (N, Cb, S) -> shuffle2(cat([a[:, a_off:a_off+Cb], b]))."""
    N, Ca, S = a.shape
    _, Cb, _ = b.shape
    kernel = functools.partial(_concat_shuffle_kernel, a_off=a_off, c_half=Cb)
    return pl.pallas_call(
        kernel,
        out_shape=jax.ShapeDtypeStruct((N, 2 * Cb, S), jnp.float32),
        grid=(N,),
        in_specs=[
            pl.BlockSpec((1, Ca, S), lambda n: (n, 0, 0)),
            pl.BlockSpec((1, Cb, S), lambda n: (n, 0, 0)),
        ],
        out_specs=pl.BlockSpec((1, 2 * Cb, S), lambda n: (n, 0, 0)),
        compiler_params=pltpu.CompilerParams(dimension_semantics=("parallel",)),
    )(a, b)


# ---------------------------------------------------------------------------
# Stage composition (DownBlock + num_blocks * BasicBlock)
# ---------------------------------------------------------------------------
def make_decimation_matrix(H, W):
    """0/1 matrix D (H*W, H/2*W/2): (x_flat @ D)[q] = x[2*i, 2*j] for q=(i, j)."""
    assert H % 2 == 0 and W % 2 == 0
    Ho, Wo = H // 2, W // 2
    q = jnp.arange(Ho * Wo)
    rows = (q // Wo) * 2 * W + (q % Wo) * 2
    return jax.nn.one_hot(rows, H * W, dtype=jnp.float32).T


def stage_forward_pallas(x_nchw, params):
    N, C_in, H, W = x_nchw.shape
    mid = params["down"]["left_pw"]["w"].shape[0]
    Ho, Wo = H // 2, W // 2
    S_full, S_half = H * W, Ho * Wo
    D = make_decimation_matrix(H, W)

    x_flat = x_nchw.reshape(N, C_in, S_full)
    d = params["down"]

    # ---- DownBlock ----
    # left: DW3x3(s=2)+BN -> 1x1+BN+ReLU (stride-2 decimation fused into the 1x1)
    l_dw = depthwise3x3_bn(x_nchw, d["left_dw"]["w"], d["left_dw"]["scale"], d["left_dw"]["bias"])
    l_out = pointwise_conv_bn_act(l_dw.reshape(N, C_in, S_full), d["left_pw"]["w"],
                                  d["left_pw"]["scale"], d["left_pw"]["bias"],
                                  relu=True, spatial_sel=D)
    # right: 1x1+BN+ReLU -> DW3x3(s=2)+BN -> 1x1+BN+ReLU (decimation fused)
    r1 = pointwise_conv_bn_act(x_flat, d["right_pw1"]["w"], d["right_pw1"]["scale"],
                               d["right_pw1"]["bias"], relu=True)
    r_dw = depthwise3x3_bn(r1.reshape(N, mid, H, W), d["right_dw"]["w"],
                           d["right_dw"]["scale"], d["right_dw"]["bias"])
    r_out = pointwise_conv_bn_act(r_dw.reshape(N, mid, S_full), d["right_pw2"]["w"],
                                  d["right_pw2"]["scale"], d["right_pw2"]["bias"],
                                  relu=True, spatial_sel=D)
    y = concat_shuffle(l_out, r_out, a_off=0)                  # (N, 2*mid, S_half)

    # ---- BasicBlocks (Split fused into consumers) ----
    C = 2 * mid
    c = C // 2
    for blk in params["blocks"]:
        b1 = pointwise_conv_bn_act(y, blk["pw1"]["w"], blk["pw1"]["scale"], blk["pw1"]["bias"],
                                   c_off=c, relu=True)          # reads x2 = y[:, c:]
        b_dw = depthwise3x3_bn(b1.reshape(N, c, Ho, Wo), blk["dw"]["w"],
                               blk["dw"]["scale"], blk["dw"]["bias"])
        b2 = pointwise_conv_bn_act(b_dw.reshape(N, c, S_half), blk["pw2"]["w"],
                                   blk["pw2"]["scale"], blk["pw2"]["bias"], relu=True)
        y = concat_shuffle(y, b2, a_off=0)                      # x1 = y[:, :c] read in-kernel
    return y.reshape(N, C, Ho, Wo)


# ---------------------------------------------------------------------------
# Parameters (inference-mode BN folded into per-channel scale/bias)
# ---------------------------------------------------------------------------
def _cbr_params(key, cin, cout):
    kw, ks, kb = jax.random.split(key, 3)
    return {
        "w": jax.random.normal(kw, (cout, cin), jnp.float32) / jnp.sqrt(float(cin)),
        "scale": 1.0 + 0.1 * jax.random.normal(ks, (cout,), jnp.float32),
        "bias": 0.1 * jax.random.normal(kb, (cout,), jnp.float32),
    }


def _dw_params(key, c):
    kw, ks, kb = jax.random.split(key, 3)
    return {
        "w": jax.random.normal(kw, (c, 3, 3), jnp.float32) / 3.0,
        "scale": 1.0 + 0.1 * jax.random.normal(ks, (c,), jnp.float32),
        "bias": 0.1 * jax.random.normal(kb, (c,), jnp.float32),
    }


def init_stage_params(key, in_channels, out_channels, num_blocks):
    mid = out_channels // 2
    keys = jax.random.split(key, 5 + 3 * num_blocks)
    params = {
        "down": {
            "left_dw": _dw_params(keys[0], in_channels),
            "left_pw": _cbr_params(keys[1], in_channels, mid),
            "right_pw1": _cbr_params(keys[2], in_channels, mid),
            "right_dw": _dw_params(keys[3], mid),
            "right_pw2": _cbr_params(keys[4], mid, mid),
        },
        "blocks": [],
    }
    for b in range(num_blocks):
        base = 5 + 3 * b
        params["blocks"].append({
            "pw1": _cbr_params(keys[base + 0], mid, mid),
            "dw": _dw_params(keys[base + 1], mid),
            "pw2": _cbr_params(keys[base + 2], mid, mid),
        })
    return params


# ---------------------------------------------------------------------------
# Pure-JAX reference (mirrors the PyTorch module, inference mode)
# ---------------------------------------------------------------------------
def _ref_pointwise(x, w, scale, bias, relu=True):
    y = jnp.einsum("oc,nchw->nohw", w, x, precision=lax.Precision.HIGHEST)
    y = y * scale[None, :, None, None] + bias[None, :, None, None]
    return jnp.maximum(y, 0.0) if relu else y


def _ref_dw3x3(x, w33, scale, bias, stride):
    C = x.shape[1]
    y = lax.conv_general_dilated(
        x, w33.reshape(C, 1, 3, 3), window_strides=(stride, stride),
        padding=((1, 1), (1, 1)), feature_group_count=C,
        dimension_numbers=("NCHW", "OIHW", "NCHW"), precision=lax.Precision.HIGHEST)
    return y * scale[None, :, None, None] + bias[None, :, None, None]


def _ref_shuffle(x, groups=2):
    N, C, H, W = x.shape
    return x.reshape(N, groups, C // groups, H, W).transpose(0, 2, 1, 3, 4).reshape(N, C, H, W)


def stage_forward_ref(x, params):
    d = params["down"]
    left = _ref_dw3x3(x, d["left_dw"]["w"], d["left_dw"]["scale"], d["left_dw"]["bias"], 2)
    left = _ref_pointwise(left, d["left_pw"]["w"], d["left_pw"]["scale"], d["left_pw"]["bias"])
    right = _ref_pointwise(x, d["right_pw1"]["w"], d["right_pw1"]["scale"], d["right_pw1"]["bias"])
    right = _ref_dw3x3(right, d["right_dw"]["w"], d["right_dw"]["scale"], d["right_dw"]["bias"], 2)
    right = _ref_pointwise(right, d["right_pw2"]["w"], d["right_pw2"]["scale"], d["right_pw2"]["bias"])
    y = _ref_shuffle(jnp.concatenate([left, right], axis=1), 2)
    for blk in params["blocks"]:
        C = y.shape[1]
        c = int(C * 0.5)
        x1, x2 = y[:, :c], y[:, c:]
        t = _ref_pointwise(x2, blk["pw1"]["w"], blk["pw1"]["scale"], blk["pw1"]["bias"])
        t = _ref_dw3x3(t, blk["dw"]["w"], blk["dw"]["scale"], blk["dw"]["bias"], 1)
        t = _ref_pointwise(t, blk["pw2"]["w"], blk["pw2"]["scale"], blk["pw2"]["bias"])
        y = _ref_shuffle(jnp.concatenate([x1, t], axis=1), 2)
    return y


if __name__ == "__main__":
    key = jax.random.PRNGKey(0)
    kx, kp = jax.random.split(key)

    N, C_in, H, W = 2, 4, 16, 16
    out_channels, num_blocks = 8, 1

    x = jax.random.normal(kx, (N, C_in, H, W), jnp.float32)
    params = init_stage_params(kp, C_in, out_channels, num_blocks)

    out = jax.jit(stage_forward_pallas)(x, params)
    out = jax.block_until_ready(out)

    ref = stage_forward_ref(x, params)
    assert out.shape == (N, out_channels, H // 2, W // 2), out.shape
    max_err = float(jnp.max(jnp.abs(out - ref)))
    assert jnp.allclose(out, ref, atol=2e-3, rtol=2e-3), max_err

    print("KERNEL_OK")
</pallas_src>

<mosaic_0001>
module attributes {stable_mosaic.version = 11 : i64} {
  func.func @_pw_kernel(%arg0: i32, %arg1: memref<1x4x256xf32, #tpu.memory_space<vmem>>, %arg2: memref<4x4xf32, #tpu.memory_space<vmem>>, %arg3: memref<4x1xf32, #tpu.memory_space<vmem>>, %arg4: memref<4x1xf32, #tpu.memory_space<vmem>>, %arg5: memref<1x4x256xf32, #tpu.memory_space<vmem>>) attributes {dimension_semantics = [#tpu.dimension_semantics<parallel>], iteration_bounds = array<i64: 2>, scalar_prefetch = 0 : i64, scratch_operands = 0 : i64, tpu.core_type = #tpu.core_type<tc>, window_params = [{transform_indices = @transform_0, window_bounds = array<i64: 1, 4, 256>}, {pipeline_mode = #tpu.pipeline_mode<synchronous>, transform_indices = @transform_1, window_bounds = array<i64: 4, 4>}, {pipeline_mode = #tpu.pipeline_mode<synchronous>, transform_indices = @transform_2, window_bounds = array<i64: 4, 1>}, {pipeline_mode = #tpu.pipeline_mode<synchronous>, transform_indices = @transform_3, window_bounds = array<i64: 4, 1>}, {transform_indices = @transform_4, window_bounds = array<i64: 1, 4, 256>}]} {
    %c0 = arith.constant 0 : index
    %c0_0 = arith.constant 0 : index
    %c0_1 = arith.constant 0 : index
    %0 = vector.load %arg1[%c0, %c0_0, %c0_1] : memref<1x4x256xf32, #tpu.memory_space<vmem>>, vector<1x4x256xf32>
    %1 = vector.shape_cast %0 : vector<1x4x256xf32> to vector<4x256xf32>
    %c0_2 = arith.constant 0 : index
    %c0_3 = arith.constant 0 : index
    %2 = vector.load %arg2[%c0_2, %c0_3] : memref<4x4xf32, #tpu.memory_space<vmem>>, vector<4x4xf32>
    %cst = arith.constant dense<0.000000e+00> : vector<4x256xf32>
    %3 = tpu.matmul %2, %1, %cst {dimension_numbers = #tpu.dot_dimension_numbers<[1], [0], [0], [1], [0, 0, 1, 1], [], []>} : vector<4x4xf32>, vector<4x256xf32>, vector<4x256xf32> -> vector<4x256xf32>
    %c0_4 = arith.constant 0 : index
    %c0_5 = arith.constant 0 : index
    %4 = vector.load %arg3[%c0_4, %c0_5] : memref<4x1xf32, #tpu.memory_space<vmem>>, vector<4x1xf32>
    %5 = vector.broadcast %4 : vector<4x1xf32> to vector<4x256xf32>
    %6 = arith.mulf %3, %5 : vector<4x256xf32>
    %c0_6 = arith.constant 0 : index
    %c0_7 = arith.constant 0 : index
    %7 = vector.load %arg4[%c0_6, %c0_7] : memref<4x1xf32, #tpu.memory_space<vmem>>, vector<4x1xf32>
    %8 = vector.broadcast %7 : vector<4x1xf32> to vector<4x256xf32>
    %9 = arith.addf %6, %8 : vector<4x256xf32>
    %cst_8 = arith.constant 0.000000e+00 : f32
    %10 = vector.broadcast %cst_8 : f32 to vector<4x256xf32>
    %11 = arith.maximumf %9, %10 : vector<4x256xf32>
    %c0_9 = arith.constant 0 : index
    %c0_10 = arith.constant 0 : index
    %c0_11 = arith.constant 0 : index
    %12 = vector.load %arg5[%c0_9, %c0_10, %c0_11] : memref<1x4x256xf32, #tpu.memory_space<vmem>>, vector<1x4x256xf32>
    %13 = vector.shape_cast %12 : vector<1x4x256xf32> to vector<4x256xf32>
    %14 = vector.shape_cast %11 : vector<4x256xf32> to vector<1x4x256xf32>
    tpu.vector_store %arg5[%c0_9, %c0_10, %c0_11], %14 {strides = array<i32>} : memref<1x4x256xf32, #tpu.memory_space<vmem>>, vector<1x4x256xf32>,
    return
  }
  func.func @transform_0(%arg0: i32) -> (i32, i32, i32) {
    %c0_i32 = arith.constant 0 : i32
    %c0_i32_0 = arith.constant 0 : i32
    %c0_i32_1 = arith.constant 0 : i32
    return %arg0, %c0_i32, %c0_i32_0 : i32, i32, i32
  }
  func.func @transform_1(%arg0: i32) -> (i32, i32) {
    %c0_i32 = arith.constant 0 : i32
    %c0_i32_0 = arith.constant 0 : i32
    %c0_i32_1 = arith.constant 0 : i32
    return %c0_i32, %c0_i32_0 : i32, i32
  }
  func.func @transform_2(%arg0: i32) -> (i32, i32) {
    %c0_i32 = arith.constant 0 : i32
    %c0_i32_0 = arith.constant 0 : i32
    %c0_i32_1 = arith.constant 0 : i32
    return %c0_i32, %c0_i32_0 : i32, i32
  }
  func.func @transform_3(%arg0: i32) -> (i32, i32) {
    %c0_i32 = arith.constant 0 : i32
    %c0_i32_0 = arith.constant 0 : i32
    %c0_i32_1 = arith.constant 0 : i32
    return %c0_i32, %c0_i32_0 : i32, i32
  }
  func.func @transform_4(%arg0: i32) -> (i32, i32, i32) {
    %c0_i32 = arith.constant 0 : i32
    %c0_i32_0 = arith.constant 0 : i32
    %c0_i32_1 = arith.constant 0 : i32
    return %arg0, %c0_i32, %c0_i32_0 : i32, i32, i32
  }
}

module attributes {stable_mosaic.version = 11 : i64} {
  func.func @_dw_kernel(%arg0: i32, %arg1: memref<1x4x16x16xf32, #tpu.memory_space<vmem>>, %arg2: memref<4x1x9xf32, #tpu.memory_space<vmem>>, %arg3: memref<4x1x1xf32, #tpu.memory_space<vmem>>, %arg4: memref<4x1x1xf32, #tpu.memory_space<vmem>>, %arg5: memref<1x4x16x16xf32, #tpu.memory_space<vmem>>) attributes {dimension_semantics = [#tpu.dimension_semantics<parallel>], iteration_bounds = array<i64: 2>, scalar_prefetch = 0 : i64, scratch_operands = 0 : i64, tpu.core_type = #tpu.core_type<tc>, window_params = [{transform_indices = @transform_0, window_bounds = array<i64: 1, 4, 16, 16>}, {pipeline_mode = #tpu.pipeline_mode<synchronous>, transform_indices = @transform_1, window_bounds = array<i64: 4, 1, 9>}, {pipeline_mode = #tpu.pipeline_mode<synchronous>, transform_indices = @transform_2, window_bounds = array<i64: 4, 1, 1>}, {pipeline_mode = #tpu.pipeline_mode<synchronous>, transform_indices = @transform_3, window_bounds = array<i64: 4, 1, 1>}, {transform_indices = @transform_4, window_bounds = array<i64: 1, 4, 16, 16>}]} {
    %c0 = arith.constant 0 : index
    %c0_0 = arith.constant 0 : index
    %c0_1 = arith.constant 0 : index
    %c0_2 = arith.constant 0 : index
    %0 = vector.load %arg1[%c0, %c0_0, %c0_1, %c0_2] : memref<1x4x16x16xf32, #tpu.memory_space<vmem>>, vector<1x4x16x16xf32>
    %1 = vector.shape_cast %0 : vector<1x4x16x16xf32> to vector<4x16x16xf32>
    %cst = arith.constant 0.000000e+00 : f32
    %2 = vector.broadcast %cst : f32 to vector<4x1x16xf32>
    %cst_3 = arith.constant 0.000000e+00 : f32
    %3 = vector.broadcast %cst_3 : f32 to vector<4x18x1xf32>
    %4 = tpu.concatenate %2, %1, %2 in 1 : vector<4x1x16xf32>, vector<4x16x16xf32>, vector<4x1x16xf32> -> vector<4x18x16xf32>
    %5 = tpu.concatenate %3, %4, %3 in 2 : vector<4x18x1xf32>, vector<4x18x16xf32>, vector<4x18x1xf32> -> vector<4x18x18xf32>
    %c0_4 = arith.constant 0 : index
    %c0_5 = arith.constant 0 : index
    %c0_6 = arith.constant 0 : index
    %6 = vector.load %arg2[%c0_4, %c0_5, %c0_6] : memref<4x1x9xf32, #tpu.memory_space<vmem>>, vector<4x1x9xf32>
    %cst_7 = arith.constant 0.000000e+00 : f32
    %7 = vector.broadcast %cst_7 : f32 to vector<4x16x16xf32>
    %8 = vector.extract_strided_slice %6 {offsets = [0, 0, 0], sizes = [4, 1, 1], strides = [1, 1, 1]} : vector<4x1x9xf32> to vector<4x1x1xf32>
    %9 = vector.extract_strided_slice %5 {offsets = [0, 0, 0], sizes = [4, 16, 16], strides = [1, 1, 1]} : vector<4x18x18xf32> to vector<4x16x16xf32>
    %10 = vector.broadcast %8 : vector<4x1x1xf32> to vector<4x16x16xf32>
    %11 = arith.mulf %10, %9 : vector<4x16x16xf32>
    %12 = arith.addf %7, %11 : vector<4x16x16xf32>
    %13 = vector.extract_strided_slice %6 {offsets = [0, 0, 1], sizes = [4, 1, 1], strides = [1, 1, 1]} : vector<4x1x9xf32> to vector<4x1x1xf32>
    %14 = vector.extract_strided_slice %5 {offsets = [0, 0, 1], sizes = [4, 16, 16], strides = [1, 1, 1]} : vector<4x18x18xf32> to vector<4x16x16xf32>
    %15 = vector.broadcast %13 : vector<4x1x1xf32> to vector<4x16x16xf32>
    %16 = arith.mulf %15, %14 : vector<4x16x16xf32>
    %17 = arith.addf %12, %16 : vector<4x16x16xf32>
    %18 = vector.extract_strided_slice %6 {offsets = [0, 0, 2], sizes = [4, 1, 1], strides = [1, 1, 1]} : vector<4x1x9xf32> to vector<4x1x1xf32>
    %19 = vector.extract_strided_slice %5 {offsets = [0, 0, 2], sizes = [4, 16, 16], strides = [1, 1, 1]} : vector<4x18x18xf32> to vector<4x16x16xf32>
    %20 = vector.broadcast %18 : vector<4x1x1xf32> to vector<4x16x16xf32>
    %21 = arith.mulf %20, %19 : vector<4x16x16xf32>
    %22 = arith.addf %17, %21 : vector<4x16x16xf32>
    %23 = vector.extract_strided_slice %6 {offsets = [0, 0, 3], sizes = [4, 1, 1], strides = [1, 1, 1]} : vector<4x1x9xf32> to vector<4x1x1xf32>
    %24 = vector.extract_strided_slice %5 {offsets = [0, 1, 0], sizes = [4, 16, 16], strides = [1, 1, 1]} : vector<4x18x18xf32> to vector<4x16x16xf32>
    %25 = vector.broadcast %23 : vector<4x1x1xf32> to vector<4x16x16xf32>
    %26 = arith.mulf %25, %24 : vector<4x16x16xf32>
    %27 = arith.addf %22, %26 : vector<4x16x16xf32>
    %28 = vector.extract_strided_slice %6 {offsets = [0, 0, 4], sizes = [4, 1, 1], strides = [1, 1, 1]} : vector<4x1x9xf32> to vector<4x1x1xf32>
    %29 = vector.extract_strided_slice %5 {offsets = [0, 1, 1], sizes = [4, 16, 16], strides = [1, 1, 1]} : vector<4x18x18xf32> to vector<4x16x16xf32>
    %30 = vector.broadcast %28 : vector<4x1x1xf32> to vector<4x16x16xf32>
    %31 = arith.mulf %30, %29 : vector<4x16x16xf32>
    %32 = arith.addf %27, %31 : vector<4x16x16xf32>
    %33 = vector.extract_strided_slice %6 {offsets = [0, 0, 5], sizes = [4, 1, 1], strides = [1, 1, 1]} : vector<4x1x9xf32> to vector<4x1x1xf32>
    %34 = vector.extract_strided_slice %5 {offsets = [0, 1, 2], sizes = [4, 16, 16], strides = [1, 1, 1]} : vector<4x18x18xf32> to vector<4x16x16xf32>
    %35 = vector.broadcast %33 : vector<4x1x1xf32> to vector<4x16x16xf32>
    %36 = arith.mulf %35, %34 : vector<4x16x16xf32>
    %37 = arith.addf %32, %36 : vector<4x16x16xf32>
    %38 = vector.extract_strided_slice %6 {offsets = [0, 0, 6], sizes = [4, 1, 1], strides = [1, 1, 1]} : vector<4x1x9xf32> to vector<4x1x1xf32>
    %39 = vector.extract_strided_slice %5 {offsets = [0, 2, 0], sizes = [4, 16, 16], strides = [1, 1, 1]} : vector<4x18x18xf32> to vector<4x16x16xf32>
    %40 = vector.broadcast %38 : vector<4x1x1xf32> to vector<4x16x16xf32>
    %41 = arith.mulf %40, %39 : vector<4x16x16xf32>
    %42 = arith.addf %37, %41 : vector<4x16x16xf32>
    %43 = vector.extract_strided_slice %6 {offsets = [0, 0, 7], sizes = [4, 1, 1], strides = [1, 1, 1]} : vector<4x1x9xf32> to vector<4x1x1xf32>
    %44 = vector.extract_strided_slice %5 {offsets = [0, 2, 1], sizes = [4, 16, 16], strides = [1, 1, 1]} : vector<4x18x18xf32> to vector<4x16x16xf32>
    %45 = vector.broadcast %43 : vector<4x1x1xf32> to vector<4x16x16xf32>
    %46 = arith.mulf %45, %44 : vector<4x16x16xf32>
    %47 = arith.addf %42, %46 : vector<4x16x16xf32>
    %48 = vector.extract_strided_slice %6 {offsets = [0, 0, 8], sizes = [4, 1, 1], strides = [1, 1, 1]} : vector<4x1x9xf32> to vector<4x1x1xf32>
    %49 = vector.extract_strided_slice %5 {offsets = [0, 2, 2], sizes = [4, 16, 16], strides = [1, 1, 1]} : vector<4x18x18xf32> to vector<4x16x16xf32>
    %50 = vector.broadcast %48 : vector<4x1x1xf32> to vector<4x16x16xf32>
    %51 = arith.mulf %50, %49 : vector<4x16x16xf32>
    %52 = arith.addf %47, %51 : vector<4x16x16xf32>
    %c0_8 = arith.constant 0 : index
    %c0_9 = arith.constant 0 : index
    %c0_10 = arith.constant 0 : index
    %53 = vector.load %arg3[%c0_8, %c0_9, %c0_10] : memref<4x1x1xf32, #tpu.memory_space<vmem>>, vector<4x1x1xf32>
    %54 = vector.broadcast %53 : vector<4x1x1xf32> to vector<4x16x16xf32>
    %55 = arith.mulf %52, %54 : vector<4x16x16xf32>
    %c0_11 = arith.constant 0 : index
    %c0_12 = arith.constant 0 : index
    %c0_13 = arith.constant 0 : index
    %56 = vector.load %arg4[%c0_11, %c0_12, %c0_13] : memref<4x1x1xf32, #tpu.memory_space<vmem>>, vector<4x1x1xf32>
    %57 = vector.broadcast %56 : vector<4x1x1xf32> to vector<4x16x16xf32>
    %58 = arith.addf %55, %57 : vector<4x16x16xf32>
    %c0_14 = arith.constant 0 : index
    %c0_15 = arith.constant 0 : index
    %c0_16 = arith.constant 0 : index
    %c0_17 = arith.constant 0 : index
    %59 = vector.load %arg5[%c0_14, %c0_15, %c0_16, %c0_17] : memref<1x4x16x16xf32, #tpu.memory_space<vmem>>, vector<1x4x16x16xf32>
    %60 = vector.shape_cast %59 : vector<1x4x16x16xf32> to vector<4x16x16xf32>
    %61 = vector.shape_cast %58 : vector<4x16x16xf32> to vector<1x4x16x16xf32>
    tpu.vector_store %arg5[%c0_14, %c0_15, %c0_16, %c0_17], %61 {strides = array<i32>} : memref<1x4x16x16xf32, #tpu.memory_space<vmem>>, vector<1x4x16x16xf32>,
    return
  }
  func.func @transform_0(%arg0: i32) -> (i32, i32, i32, i32) {
    %c0_i32 = arith.constant 0 : i32
    %c0_i32_0 = arith.constant 0 : i32
    %c0_i32_1 = arith.constant 0 : i32
    %c0_i32_2 = arith.constant 0 : i32
    return %arg0, %c0_i32, %c0_i32_0, %c0_i32_1 : i32, i32, i32, i32
  }
  func.func @transform_1(%arg0: i32) -> (i32, i32, i32) {
    %c0_i32 = arith.constant 0 : i32
    %c0_i32_0 = arith.constant 0 : i32
    %c0_i32_1 = arith.constant 0 : i32
    %c0_i32_2 = arith.constant 0 : i32
    return %c0_i32, %c0_i32_0, %c0_i32_1 : i32, i32, i32
  }
  func.func @transform_2(%arg0: i32) -> (i32, i32, i32) {
    %c0_i32 = arith.constant 0 : i32
    %c0_i32_0 = arith.constant 0 : i32
    %c0_i32_1 = arith.constant 0 : i32
    %c0_i32_2 = arith.constant 0 : i32
    return %c0_i32, %c0_i32_0, %c0_i32_1 : i32, i32, i32
  }
  func.func @transform_3(%arg0: i32) -> (i32, i32, i32) {
    %c0_i32 = arith.constant 0 : i32
    %c0_i32_0 = arith.constant 0 : i32
    %c0_i32_1 = arith.constant 0 : i32
    %c0_i32_2 = arith.constant 0 : i32
    return %c0_i32, %c0_i32_0, %c0_i32_1 : i32, i32, i32
  }
  func.func @transform_4(%arg0: i32) -> (i32, i32, i32, i32) {
    %c0_i32 = arith.constant 0 : i32
    %c0_i32_0 = arith.constant 0 : i32
    %c0_i32_1 = arith.constant 0 : i32
    %c0_i32_2 = arith.constant 0 : i32
    return %arg0, %c0_i32, %c0_i32_0, %c0_i32_1 : i32, i32, i32, i32
  }
}

module attributes {stable_mosaic.version = 11 : i64} {
  func.func @_pw_sel_kernel(%arg0: i32, %arg1: memref<1x4x256xf32, #tpu.memory_space<vmem>>, %arg2: memref<4x4xf32, #tpu.memory_space<vmem>>, %arg3: memref<256x64xf32, #tpu.memory_space<vmem>>, %arg4: memref<4x1xf32, #tpu.memory_space<vmem>>, %arg5: memref<4x1xf32, #tpu.memory_space<vmem>>, %arg6: memref<1x4x64xf32, #tpu.memory_space<vmem>>) attributes {dimension_semantics = [#tpu.dimension_semantics<parallel>], iteration_bounds = array<i64: 2>, scalar_prefetch = 0 : i64, scratch_operands = 0 : i64, tpu.core_type = #tpu.core_type<tc>, window_params = [{transform_indices = @transform_0, window_bounds = array<i64: 1, 4, 256>}, {pipeline_mode = #tpu.pipeline_mode<synchronous>, transform_indices = @transform_1, window_bounds = array<i64: 4, 4>}, {pipeline_mode = #tpu.pipeline_mode<synchronous>, transform_indices = @transform_2, window_bounds = array<i64: 256, 64>}, {pipeline_mode = #tpu.pipeline_mode<synchronous>, transform_indices = @transform_3, window_bounds = array<i64: 4, 1>}, {pipeline_mode = #tpu.pipeline_mode<synchronous>, transform_indices = @transform_4, window_bounds = array<i64: 4, 1>}, {transform_indices = @transform_5, window_bounds = array<i64: 1, 4, 64>}]} {
    %c0 = arith.constant 0 : index
    %c0_0 = arith.constant 0 : index
    %c0_1 = arith.constant 0 : index
    %0 = vector.load %arg1[%c0, %c0_0, %c0_1] : memref<1x4x256xf32, #tpu.memory_space<vmem>>, vector<1x4x256xf32>
    %1 = vector.shape_cast %0 : vector<1x4x256xf32> to vector<4x256xf32>
    %c0_2 = arith.constant 0 : index
    %c0_3 = arith.constant 0 : index
    %2 = vector.load %arg3[%c0_2, %c0_3] : memref<256x64xf32, #tpu.memory_space<vmem>>, vector<256x64xf32>
    %cst = arith.constant dense<0.000000e+00> : vector<4x64xf32>
    %3 = tpu.matmul %1, %2, %cst {dimension_numbers = #tpu.dot_dimension_numbers<[1], [0], [0], [1], [0, 0, 1, 1], [], []>} : vector<4x256xf32>, vector<256x64xf32>, vector<4x64xf32> -> vector<4x64xf32>
    %c0_4 = arith.constant 0 : index
    %c0_5 = arith.constant 0 : index
    %4 = vector.load %arg2[%c0_4, %c0_5] : memref<4x4xf32, #tpu.memory_space<vmem>>, vector<4x4xf32>
    %cst_6 = arith.constant dense<0.000000e+00> : vector<4x64xf32>
    %5 = tpu.matmul %4, %3, %cst_6 {dimension_numbers = #tpu.dot_dimension_numbers<[1], [0], [0], [1], [0, 0, 1, 1], [], []>} : vector<4x4xf32>, vector<4x64xf32>, vector<4x64xf32> -> vector<4x64xf32>
    %c0_7 = arith.constant 0 : index
    %c0_8 = arith.constant 0 : index
    %6 = vector.load %arg4[%c0_7, %c0_8] : memref<4x1xf32, #tpu.memory_space<vmem>>, vector<4x1xf32>
    %7 = vector.broadcast %6 : vector<4x1xf32> to vector<4x64xf32>
    %8 = arith.mulf %5, %7 : vector<4x64xf32>
    %c0_9 = arith.constant 0 : index
    %c0_10 = arith.constant 0 : index
    %9 = vector.load %arg5[%c0_9, %c0_10] : memref<4x1xf32, #tpu.memory_space<vmem>>, vector<4x1xf32>
    %10 = vector.broadcast %9 : vector<4x1xf32> to vector<4x64xf32>
    %11 = arith.addf %8, %10 : vector<4x64xf32>
    %cst_11 = arith.constant 0.000000e+00 : f32
    %12 = vector.broadcast %cst_11 : f32 to vector<4x64xf32>
    %13 = arith.maximumf %11, %12 : vector<4x64xf32>
    %c0_12 = arith.constant 0 : index
    %c0_13 = arith.constant 0 : index
    %c0_14 = arith.constant 0 : index
    %14 = vector.load %arg6[%c0_12, %c0_13, %c0_14] : memref<1x4x64xf32, #tpu.memory_space<vmem>>, vector<1x4x64xf32>
    %15 = vector.shape_cast %14 : vector<1x4x64xf32> to vector<4x64xf32>
    %16 = vector.shape_cast %13 : vector<4x64xf32> to vector<1x4x64xf32>
    tpu.vector_store %arg6[%c0_12, %c0_13, %c0_14], %16 {strides = array<i32>} : memref<1x4x64xf32, #tpu.memory_space<vmem>>, vector<1x4x64xf32>,
    return
  }
  func.func @transform_0(%arg0: i32) -> (i32, i32, i32) {
    %c0_i32 = arith.constant 0 : i32
    %c0_i32_0 = arith.constant 0 : i32
    %c0_i32_1 = arith.constant 0 : i32
    return %arg0, %c0_i32, %c0_i32_0 : i32, i32, i32
  }
  func.func @transform_1(%arg0: i32) -> (i32, i32) {
    %c0_i32 = arith.constant 0 : i32
    %c0_i32_0 = arith.constant 0 : i32
    %c0_i32_1 = arith.constant 0 : i32
    return %c0_i32, %c0_i32_0 : i32, i32
  }
  func.func @transform_2(%arg0: i32) -> (i32, i32) {
    %c0_i32 = arith.constant 0 : i32
    %c0_i32_0 = arith.constant 0 : i32
    %c0_i32_1 = arith.constant 0 : i32
    return %c0_i32, %c0_i32_0 : i32, i32
  }
  func.func @transform_3(%arg0: i32) -> (i32, i32) {
    %c0_i32 = arith.constant 0 : i32
    %c0_i32_0 = arith.constant 0 : i32
    %c0_i32_1 = arith.constant 0 : i32
    return %c0_i32, %c0_i32_0 : i32, i32
  }
  func.func @transform_4(%arg0: i32) -> (i32, i32) {
    %c0_i32 = arith.constant 0 : i32
    %c0_i32_0 = arith.constant 0 : i32
    %c0_i32_1 = arith.constant 0 : i32
    return %c0_i32, %c0_i32_0 : i32, i32
  }
  func.func @transform_5(%arg0: i32) -> (i32, i32, i32) {
    %c0_i32 = arith.constant 0 : i32
    %c0_i32_0 = arith.constant 0 : i32
    %c0_i32_1 = arith.constant 0 : i32
    return %arg0, %c0_i32, %c0_i32_0 : i32, i32, i32
  }
}

module attributes {stable_mosaic.version = 11 : i64} {
  func.func @_concat_shuffle_kernel(%arg0: i32, %arg1: memref<1x4x64xf32, #tpu.memory_space<vmem>>, %arg2: memref<1x4x64xf32, #tpu.memory_space<vmem>>, %arg3: memref<1x8x64xf32, #tpu.memory_space<vmem>>) attributes {dimension_semantics = [#tpu.dimension_semantics<parallel>], iteration_bounds = array<i64: 2>, scalar_prefetch = 0 : i64, scratch_operands = 0 : i64, tpu.core_type = #tpu.core_type<tc>, window_params = [{transform_indices = @transform_0, window_bounds = array<i64: 1, 4, 64>}, {transform_indices = @transform_1, window_bounds = array<i64: 1, 4, 64>}, {transform_indices = @transform_2, window_bounds = array<i64: 1, 8, 64>}]} {
    %c0 = arith.constant 0 : index
    %c0_0 = arith.constant 0 : index
    %c0_1 = arith.constant 0 : index
    %0 = vector.load %arg1[%c0, %c0_0, %c0_1] : memref<1x4x64xf32, #tpu.memory_space<vmem>>, vector<1x4x64xf32>
    %1 = vector.shape_cast %0 : vector<1x4x64xf32> to vector<4x64xf32>
    %c0_2 = arith.constant 0 : index
    %c0_3 = arith.constant 0 : index
    %c0_4 = arith.constant 0 : index
    %2 = vector.load %arg2[%c0_2, %c0_3, %c0_4] : memref<1x4x64xf32, #tpu.memory_space<vmem>>, vector<1x4x64xf32>
    %3 = vector.shape_cast %2 : vector<1x4x64xf32> to vector<4x64xf32>
    %4 = vector.extract_strided_slice %1 {offsets = [0, 0], sizes = [1, 64], strides = [1, 1]} : vector<4x64xf32> to vector<1x64xf32>
    %5 = vector.extract_strided_slice %3 {offsets = [0, 0], sizes = [1, 64], strides = [1, 1]} : vector<4x64xf32> to vector<1x64xf32>
    %6 = vector.extract_strided_slice %1 {offsets = [1, 0], sizes = [1, 64], strides = [1, 1]} : vector<4x64xf32> to vector<1x64xf32>
    %7 = vector.extract_strided_slice %3 {offsets = [1, 0], sizes = [1, 64], strides = [1, 1]} : vector<4x64xf32> to vector<1x64xf32>
    %8 = vector.extract_strided_slice %1 {offsets = [2, 0], sizes = [1, 64], strides = [1, 1]} : vector<4x64xf32> to vector<1x64xf32>
    %9 = vector.extract_strided_slice %3 {offsets = [2, 0], sizes = [1, 64], strides = [1, 1]} : vector<4x64xf32> to vector<1x64xf32>
    %10 = vector.extract_strided_slice %1 {offsets = [3, 0], sizes = [1, 64], strides = [1, 1]} : vector<4x64xf32> to vector<1x64xf32>
    %11 = vector.extract_strided_slice %3 {offsets = [3, 0], sizes = [1, 64], strides = [1, 1]} : vector<4x64xf32> to vector<1x64xf32>
    %12 = tpu.concatenate %4, %5, %6, %7, %8, %9, %10, %11 in 0 : vector<1x64xf32>, vector<1x64xf32>, vector<1x64xf32>, vector<1x64xf32>, vector<1x64xf32>, vector<1x64xf32>, vector<1x64xf32>, vector<1x64xf32> -> vector<8x64xf32>
    %c0_5 = arith.constant 0 : index
    %c0_6 = arith.constant 0 : index
    %c0_7 = arith.constant 0 : index
    %13 = vector.load %arg3[%c0_5, %c0_6, %c0_7] : memref<1x8x64xf32, #tpu.memory_space<vmem>>, vector<1x8x64xf32>
    %14 = vector.shape_cast %13 : vector<1x8x64xf32> to vector<8x64xf32>
    %15 = vector.shape_cast %12 : vector<8x64xf32> to vector<1x8x64xf32>
    tpu.vector_store %arg3[%c0_5, %c0_6, %c0_7], %15 {strides = array<i32>} : memref<1x8x64xf32, #tpu.memory_space<vmem>>, vector<1x8x64xf32>,
    return
  }
  func.func @transform_0(%arg0: i32) -> (i32, i32, i32) {
    %c0_i32 = arith.constant 0 : i32
    %c0_i32_0 = arith.constant 0 : i32
    %c0_i32_1 = arith.constant 0 : i32
    return %arg0, %c0_i32, %c0_i32_0 : i32, i32, i32
  }
  func.func @transform_1(%arg0: i32) -> (i32, i32, i32) {
    %c0_i32 = arith.constant 0 : i32
    %c0_i32_0 = arith.constant 0 : i32
    %c0_i32_1 = arith.constant 0 : i32
    return %arg0, %c0_i32, %c0_i32_0 : i32, i32, i32
  }
  func.func @transform_2(%arg0: i32) -> (i32, i32, i32) {
    %c0_i32 = arith.constant 0 : i32
    %c0_i32_0 = arith.constant 0 : i32
    %c0_i32_1 = arith.constant 0 : i32
    return %arg0, %c0_i32, %c0_i32_0 : i32, i32, i32
  }
}

module attributes {stable_mosaic.version = 11 : i64} {
  func.func @_pw_kernel(%arg0: i32, %arg1: memref<1x8x64xf32, #tpu.memory_space<vmem>>, %arg2: memref<4x4xf32, #tpu.memory_space<vmem>>, %arg3: memref<4x1xf32, #tpu.memory_space<vmem>>, %arg4: memref<4x1xf32, #tpu.memory_space<vmem>>, %arg5: memref<1x4x64xf32, #tpu.memory_space<vmem>>) attributes {dimension_semantics = [#tpu.dimension_semantics<parallel>], iteration_bounds = array<i64: 2>, scalar_prefetch = 0 : i64, scratch_operands = 0 : i64, tpu.core_type = #tpu.core_type<tc>, window_params = [{transform_indices = @transform_0, window_bounds = array<i64: 1, 8, 64>}, {pipeline_mode = #tpu.pipeline_mode<synchronous>, transform_indices = @transform_1, window_bounds = array<i64: 4, 4>}, {pipeline_mode = #tpu.pipeline_mode<synchronous>, transform_indices = @transform_2, window_bounds = array<i64: 4, 1>}, {pipeline_mode = #tpu.pipeline_mode<synchronous>, transform_indices = @transform_3, window_bounds = array<i64: 4, 1>}, {transform_indices = @transform_4, window_bounds = array<i64: 1, 4, 64>}]} {
    %c0 = arith.constant 0 : index
    %c0_0 = arith.constant 0 : index
    %c0_1 = arith.constant 0 : index
    %0 = vector.load %arg1[%c0, %c0_0, %c0_1] : memref<1x8x64xf32, #tpu.memory_space<vmem>>, vector<1x8x64xf32>
    %1 = vector.shape_cast %0 : vector<1x8x64xf32> to vector<8x64xf32>
    %2 = vector.extract_strided_slice %1 {offsets = [4, 0], sizes = [4, 64], strides = [1, 1]} : vector<8x64xf32> to vector<4x64xf32>
    %c0_2 = arith.constant 0 : index
    %c0_3 = arith.constant 0 : index
    %3 = vector.load %arg2[%c0_2, %c0_3] : memref<4x4xf32, #tpu.memory_space<vmem>>, vector<4x4xf32>
    %cst = arith.constant dense<0.000000e+00> : vector<4x64xf32>
    %4 = tpu.matmul %3, %2, %cst {dimension_numbers = #tpu.dot_dimension_numbers<[1], [0], [0], [1], [0, 0, 1, 1], [], []>} : vector<4x4xf32>, vector<4x64xf32>, vector<4x64xf32> -> vector<4x64xf32>
    %c0_4 = arith.constant 0 : index
    %c0_5 = arith.constant 0 : index
    %5 = vector.load %arg3[%c0_4, %c0_5] : memref<4x1xf32, #tpu.memory_space<vmem>>, vector<4x1xf32>
    %6 = vector.broadcast %5 : vector<4x1xf32> to vector<4x64xf32>
    %7 = arith.mulf %4, %6 : vector<4x64xf32>
    %c0_6 = arith.constant 0 : index
    %c0_7 = arith.constant 0 : index
    %8 = vector.load %arg4[%c0_6, %c0_7] : memref<4x1xf32, #tpu.memory_space<vmem>>, vector<4x1xf32>
    %9 = vector.broadcast %8 : vector<4x1xf32> to vector<4x64xf32>
    %10 = arith.addf %7, %9 : vector<4x64xf32>
    %cst_8 = arith.constant 0.000000e+00 : f32
    %11 = vector.broadcast %cst_8 : f32 to vector<4x64xf32>
    %12 = arith.maximumf %10, %11 : vector<4x64xf32>
    %c0_9 = arith.constant 0 : index
    %c0_10 = arith.constant 0 : index
    %c0_11 = arith.constant 0 : index
    %13 = vector.load %arg5[%c0_9, %c0_10, %c0_11] : memref<1x4x64xf32, #tpu.memory_space<vmem>>, vector<1x4x64xf32>
    %14 = vector.shape_cast %13 : vector<1x4x64xf32> to vector<4x64xf32>
    %15 = vector.shape_cast %12 : vector<4x64xf32> to vector<1x4x64xf32>
    tpu.vector_store %arg5[%c0_9, %c0_10, %c0_11], %15 {strides = array<i32>} : memref<1x4x64xf32, #tpu.memory_space<vmem>>, vector<1x4x64xf32>,
    return
  }
  func.func @transform_0(%arg0: i32) -> (i32, i32, i32) {
    %c0_i32 = arith.constant 0 : i32
    %c0_i32_0 = arith.constant 0 : i32
    %c0_i32_1 = arith.constant 0 : i32
    return %arg0, %c0_i32, %c0_i32_0 : i32, i32, i32
  }
  func.func @transform_1(%arg0: i32) -> (i32, i32) {
    %c0_i32 = arith.constant 0 : i32
    %c0_i32_0 = arith.constant 0 : i32
    %c0_i32_1 = arith.constant 0 : i32
    return %c0_i32, %c0_i32_0 : i32, i32
  }
  func.func @transform_2(%arg0: i32) -> (i32, i32) {
    %c0_i32 = arith.constant 0 : i32
    %c0_i32_0 = arith.constant 0 : i32
    %c0_i32_1 = arith.constant 0 : i32
    return %c0_i32, %c0_i32_0 : i32, i32
  }
  func.func @transform_3(%arg0: i32) -> (i32, i32) {
    %c0_i32 = arith.constant 0 : i32
    %c0_i32_0 = arith.constant 0 : i32
    %c0_i32_1 = arith.constant 0 : i32
    return %c0_i32, %c0_i32_0 : i32, i32
  }
  func.func @transform_4(%arg0: i32) -> (i32, i32, i32) {
    %c0_i32 = arith.constant 0 : i32
    %c0_i32_0 = arith.constant 0 : i32
    %c0_i32_1 = arith.constant 0 : i32
    return %arg0, %c0_i32, %c0_i32_0 : i32, i32, i32
  }
}

module attributes {stable_mosaic.version = 11 : i64} {
  func.func @_dw_kernel(%arg0: i32, %arg1: memref<1x4x8x8xf32, #tpu.memory_space<vmem>>, %arg2: memref<4x1x9xf32, #tpu.memory_space<vmem>>, %arg3: memref<4x1x1xf32, #tpu.memory_space<vmem>>, %arg4: memref<4x1x1xf32, #tpu.memory_space<vmem>>, %arg5: memref<1x4x8x8xf32, #tpu.memory_space<vmem>>) attributes {dimension_semantics = [#tpu.dimension_semantics<parallel>], iteration_bounds = array<i64: 2>, scalar_prefetch = 0 : i64, scratch_operands = 0 : i64, tpu.core_type = #tpu.core_type<tc>, window_params = [{transform_indices = @transform_0, window_bounds = array<i64: 1, 4, 8, 8>}, {pipeline_mode = #tpu.pipeline_mode<synchronous>, transform_indices = @transform_1, window_bounds = array<i64: 4, 1, 9>}, {pipeline_mode = #tpu.pipeline_mode<synchronous>, transform_indices = @transform_2, window_bounds = array<i64: 4, 1, 1>}, {pipeline_mode = #tpu.pipeline_mode<synchronous>, transform_indices = @transform_3, window_bounds = array<i64: 4, 1, 1>}, {transform_indices = @transform_4, window_bounds = array<i64: 1, 4, 8, 8>}]} {
    %c0 = arith.constant 0 : index
    %c0_0 = arith.constant 0 : index
    %c0_1 = arith.constant 0 : index
    %c0_2 = arith.constant 0 : index
    %0 = vector.load %arg1[%c0, %c0_0, %c0_1, %c0_2] : memref<1x4x8x8xf32, #tpu.memory_space<vmem>>, vector<1x4x8x8xf32>
    %1 = vector.shape_cast %0 : vector<1x4x8x8xf32> to vector<4x8x8xf32>
    %cst = arith.constant 0.000000e+00 : f32
    %2 = vector.broadcast %cst : f32 to vector<4x1x8xf32>
    %cst_3 = arith.constant 0.000000e+00 : f32
    %3 = vector.broadcast %cst_3 : f32 to vector<4x10x1xf32>
    %4 = tpu.concatenate %2, %1, %2 in 1 : vector<4x1x8xf32>, vector<4x8x8xf32>, vector<4x1x8xf32> -> vector<4x10x8xf32>
    %5 = tpu.concatenate %3, %4, %3 in 2 : vector<4x10x1xf32>, vector<4x10x8xf32>, vector<4x10x1xf32> -> vector<4x10x10xf32>
    %c0_4 = arith.constant 0 : index
    %c0_5 = arith.constant 0 : index
    %c0_6 = arith.constant 0 : index
    %6 = vector.load %arg2[%c0_4, %c0_5, %c0_6] : memref<4x1x9xf32, #tpu.memory_space<vmem>>, vector<4x1x9xf32>
    %cst_7 = arith.constant 0.000000e+00 : f32
    %7 = vector.broadcast %cst_7 : f32 to vector<4x8x8xf32>
    %8 = vector.extract_strided_slice %6 {offsets = [0, 0, 0], sizes = [4, 1, 1], strides = [1, 1, 1]} : vector<4x1x9xf32> to vector<4x1x1xf32>
    %9 = vector.extract_strided_slice %5 {offsets = [0, 0, 0], sizes = [4, 8, 8], strides = [1, 1, 1]} : vector<4x10x10xf32> to vector<4x8x8xf32>
    %10 = vector.broadcast %8 : vector<4x1x1xf32> to vector<4x8x8xf32>
    %11 = arith.mulf %10, %9 : vector<4x8x8xf32>
    %12 = arith.addf %7, %11 : vector<4x8x8xf32>
    %13 = vector.extract_strided_slice %6 {offsets = [0, 0, 1], sizes = [4, 1, 1], strides = [1, 1, 1]} : vector<4x1x9xf32> to vector<4x1x1xf32>
    %14 = vector.extract_strided_slice %5 {offsets = [0, 0, 1], sizes = [4, 8, 8], strides = [1, 1, 1]} : vector<4x10x10xf32> to vector<4x8x8xf32>
    %15 = vector.broadcast %13 : vector<4x1x1xf32> to vector<4x8x8xf32>
    %16 = arith.mulf %15, %14 : vector<4x8x8xf32>
    %17 = arith.addf %12, %16 : vector<4x8x8xf32>
    %18 = vector.extract_strided_slice %6 {offsets = [0, 0, 2], sizes = [4, 1, 1], strides = [1, 1, 1]} : vector<4x1x9xf32> to vector<4x1x1xf32>
    %19 = vector.extract_strided_slice %5 {offsets = [0, 0, 2], sizes = [4, 8, 8], strides = [1, 1, 1]} : vector<4x10x10xf32> to vector<4x8x8xf32>
    %20 = vector.broadcast %18 : vector<4x1x1xf32> to vector<4x8x8xf32>
    %21 = arith.mulf %20, %19 : vector<4x8x8xf32>
    %22 = arith.addf %17, %21 : vector<4x8x8xf32>
    %23 = vector.extract_strided_slice %6 {offsets = [0, 0, 3], sizes = [4, 1, 1], strides = [1, 1, 1]} : vector<4x1x9xf32> to vector<4x1x1xf32>
    %24 = vector.extract_strided_slice %5 {offsets = [0, 1, 0], sizes = [4, 8, 8], strides = [1, 1, 1]} : vector<4x10x10xf32> to vector<4x8x8xf32>
    %25 = vector.broadcast %23 : vector<4x1x1xf32> to vector<4x8x8xf32>
    %26 = arith.mulf %25, %24 : vector<4x8x8xf32>
    %27 = arith.addf %22, %26 : vector<4x8x8xf32>
    %28 = vector.extract_strided_slice %6 {offsets = [0, 0, 4], sizes = [4, 1, 1], strides = [1, 1, 1]} : vector<4x1x9xf32> to vector<4x1x1xf32>
    %29 = vector.extract_strided_slice %5 {offsets = [0, 1, 1], sizes = [4, 8, 8], strides = [1, 1, 1]} : vector<4x10x10xf32> to vector<4x8x8xf32>
    %30 = vector.broadcast %28 : vector<4x1x1xf32> to vector<4x8x8xf32>
    %31 = arith.mulf %30, %29 : vector<4x8x8xf32>
    %32 = arith.addf %27, %31 : vector<4x8x8xf32>
    %33 = vector.extract_strided_slice %6 {offsets = [0, 0, 5], sizes = [4, 1, 1], strides = [1, 1, 1]} : vector<4x1x9xf32> to vector<4x1x1xf32>
    %34 = vector.extract_strided_slice %5 {offsets = [0, 1, 2], sizes = [4, 8, 8], strides = [1, 1, 1]} : vector<4x10x10xf32> to vector<4x8x8xf32>
    %35 = vector.broadcast %33 : vector<4x1x1xf32> to vector<4x8x8xf32>
    %36 = arith.mulf %35, %34 : vector<4x8x8xf32>
    %37 = arith.addf %32, %36 : vector<4x8x8xf32>
    %38 = vector.extract_strided_slice %6 {offsets = [0, 0, 6], sizes = [4, 1, 1], strides = [1, 1, 1]} : vector<4x1x9xf32> to vector<4x1x1xf32>
    %39 = vector.extract_strided_slice %5 {offsets = [0, 2, 0], sizes = [4, 8, 8], strides = [1, 1, 1]} : vector<4x10x10xf32> to vector<4x8x8xf32>
    %40 = vector.broadcast %38 : vector<4x1x1xf32> to vector<4x8x8xf32>
    %41 = arith.mulf %40, %39 : vector<4x8x8xf32>
    %42 = arith.addf %37, %41 : vector<4x8x8xf32>
    %43 = vector.extract_strided_slice %6 {offsets = [0, 0, 7], sizes = [4, 1, 1], strides = [1, 1, 1]} : vector<4x1x9xf32> to vector<4x1x1xf32>
    %44 = vector.extract_strided_slice %5 {offsets = [0, 2, 1], sizes = [4, 8, 8], strides = [1, 1, 1]} : vector<4x10x10xf32> to vector<4x8x8xf32>
    %45 = vector.broadcast %43 : vector<4x1x1xf32> to vector<4x8x8xf32>
    %46 = arith.mulf %45, %44 : vector<4x8x8xf32>
    %47 = arith.addf %42, %46 : vector<4x8x8xf32>
    %48 = vector.extract_strided_slice %6 {offsets = [0, 0, 8], sizes = [4, 1, 1], strides = [1, 1, 1]} : vector<4x1x9xf32> to vector<4x1x1xf32>
    %49 = vector.extract_strided_slice %5 {offsets = [0, 2, 2], sizes = [4, 8, 8], strides = [1, 1, 1]} : vector<4x10x10xf32> to vector<4x8x8xf32>
    %50 = vector.broadcast %48 : vector<4x1x1xf32> to vector<4x8x8xf32>
    %51 = arith.mulf %50, %49 : vector<4x8x8xf32>
    %52 = arith.addf %47, %51 : vector<4x8x8xf32>
    %c0_8 = arith.constant 0 : index
    %c0_9 = arith.constant 0 : index
    %c0_10 = arith.constant 0 : index
    %53 = vector.load %arg3[%c0_8, %c0_9, %c0_10] : memref<4x1x1xf32, #tpu.memory_space<vmem>>, vector<4x1x1xf32>
    %54 = vector.broadcast %53 : vector<4x1x1xf32> to vector<4x8x8xf32>
    %55 = arith.mulf %52, %54 : vector<4x8x8xf32>
    %c0_11 = arith.constant 0 : index
    %c0_12 = arith.constant 0 : index
    %c0_13 = arith.constant 0 : index
    %56 = vector.load %arg4[%c0_11, %c0_12, %c0_13] : memref<4x1x1xf32, #tpu.memory_space<vmem>>, vector<4x1x1xf32>
    %57 = vector.broadcast %56 : vector<4x1x1xf32> to vector<4x8x8xf32>
    %58 = arith.addf %55, %57 : vector<4x8x8xf32>
    %c0_14 = arith.constant 0 : index
    %c0_15 = arith.constant 0 : index
    %c0_16 = arith.constant 0 : index
    %c0_17 = arith.constant 0 : index
    %59 = vector.load %arg5[%c0_14, %c0_15, %c0_16, %c0_17] : memref<1x4x8x8xf32, #tpu.memory_space<vmem>>, vector<1x4x8x8xf32>
    %60 = vector.shape_cast %59 : vector<1x4x8x8xf32> to vector<4x8x8xf32>
    %61 = vector.shape_cast %58 : vector<4x8x8xf32> to vector<1x4x8x8xf32>
    tpu.vector_store %arg5[%c0_14, %c0_15, %c0_16, %c0_17], %61 {strides = array<i32>} : memref<1x4x8x8xf32, #tpu.memory_space<vmem>>, vector<1x4x8x8xf32>,
    return
  }
  func.func @transform_0(%arg0: i32) -> (i32, i32, i32, i32) {
    %c0_i32 = arith.constant 0 : i32
    %c0_i32_0 = arith.constant 0 : i32
    %c0_i32_1 = arith.constant 0 : i32
    %c0_i32_2 = arith.constant 0 : i32
    return %arg0, %c0_i32, %c0_i32_0, %c0_i32_1 : i32, i32, i32, i32
  }
  func.func @transform_1(%arg0: i32) -> (i32, i32, i32) {
    %c0_i32 = arith.constant 0 : i32
    %c0_i32_0 = arith.constant 0 : i32
    %c0_i32_1 = arith.constant 0 : i32
    %c0_i32_2 = arith.constant 0 : i32
    return %c0_i32, %c0_i32_0, %c0_i32_1 : i32, i32, i32
  }
  func.func @transform_2(%arg0: i32) -> (i32, i32, i32) {
    %c0_i32 = arith.constant 0 : i32
    %c0_i32_0 = arith.constant 0 : i32
    %c0_i32_1 = arith.constant 0 : i32
    %c0_i32_2 = arith.constant 0 : i32
    return %c0_i32, %c0_i32_0, %c0_i32_1 : i32, i32, i32
  }
  func.func @transform_3(%arg0: i32) -> (i32, i32, i32) {
    %c0_i32 = arith.constant 0 : i32
    %c0_i32_0 = arith.constant 0 : i32
    %c0_i32_1 = arith.constant 0 : i32
    %c0_i32_2 = arith.constant 0 : i32
    return %c0_i32, %c0_i32_0, %c0_i32_1 : i32, i32, i32
  }
  func.func @transform_4(%arg0: i32) -> (i32, i32, i32, i32) {
    %c0_i32 = arith.constant 0 : i32
    %c0_i32_0 = arith.constant 0 : i32
    %c0_i32_1 = arith.constant 0 : i32
    %c0_i32_2 = arith.constant 0 : i32
    return %arg0, %c0_i32, %c0_i32_0, %c0_i32_1 : i32, i32, i32, i32
  }
}

module attributes {stable_mosaic.version = 11 : i64} {
  func.func @_concat_shuffle_kernel(%arg0: i32, %arg1: memref<1x8x64xf32, #tpu.memory_space<vmem>>, %arg2: memref<1x4x64xf32, #tpu.memory_space<vmem>>, %arg3: memref<1x8x64xf32, #tpu.memory_space<vmem>>) attributes {dimension_semantics = [#tpu.dimension_semantics<parallel>], iteration_bounds = array<i64: 2>, scalar_prefetch = 0 : i64, scratch_operands = 0 : i64, tpu.core_type = #tpu.core_type<tc>, window_params = [{transform_indices = @transform_0, window_bounds = array<i64: 1, 8, 64>}, {transform_indices = @transform_1, window_bounds = array<i64: 1, 4, 64>}, {transform_indices = @transform_2, window_bounds = array<i64: 1, 8, 64>}]} {
    %c0 = arith.constant 0 : index
    %c0_0 = arith.constant 0 : index
    %c0_1 = arith.constant 0 : index
    %0 = vector.load %arg1[%c0, %c0_0, %c0_1] : memref<1x8x64xf32, #tpu.memory_space<vmem>>, vector<1x8x64xf32>
    %1 = vector.shape_cast %0 : vector<1x8x64xf32> to vector<8x64xf32>
    %c0_2 = arith.constant 0 : index
    %c0_3 = arith.constant 0 : index
    %c0_4 = arith.constant 0 : index
    %2 = vector.load %arg2[%c0_2, %c0_3, %c0_4] : memref<1x4x64xf32, #tpu.memory_space<vmem>>, vector<1x4x64xf32>
    %3 = vector.shape_cast %2 : vector<1x4x64xf32> to vector<4x64xf32>
    %4 = vector.extract_strided_slice %1 {offsets = [0, 0], sizes = [1, 64], strides = [1, 1]} : vector<8x64xf32> to vector<1x64xf32>
    %5 = vector.extract_strided_slice %3 {offsets = [0, 0], sizes = [1, 64], strides = [1, 1]} : vector<4x64xf32> to vector<1x64xf32>
    %6 = vector.extract_strided_slice %1 {offsets = [1, 0], sizes = [1, 64], strides = [1, 1]} : vector<8x64xf32> to vector<1x64xf32>
    %7 = vector.extract_strided_slice %3 {offsets = [1, 0], sizes = [1, 64], strides = [1, 1]} : vector<4x64xf32> to vector<1x64xf32>
    %8 = vector.extract_strided_slice %1 {offsets = [2, 0], sizes = [1, 64], strides = [1, 1]} : vector<8x64xf32> to vector<1x64xf32>
    %9 = vector.extract_strided_slice %3 {offsets = [2, 0], sizes = [1, 64], strides = [1, 1]} : vector<4x64xf32> to vector<1x64xf32>
    %10 = vector.extract_strided_slice %1 {offsets = [3, 0], sizes = [1, 64], strides = [1, 1]} : vector<8x64xf32> to vector<1x64xf32>
    %11 = vector.extract_strided_slice %3 {offsets = [3, 0], sizes = [1, 64], strides = [1, 1]} : vector<4x64xf32> to vector<1x64xf32>
    %12 = tpu.concatenate %4, %5, %6, %7, %8, %9, %10, %11 in 0 : vector<1x64xf32>, vector<1x64xf32>, vector<1x64xf32>, vector<1x64xf32>, vector<1x64xf32>, vector<1x64xf32>, vector<1x64xf32>, vector<1x64xf32> -> vector<8x64xf32>
    %c0_5 = arith.constant 0 : index
    %c0_6 = arith.constant 0 : index
    %c0_7 = arith.constant 0 : index
    %13 = vector.load %arg3[%c0_5, %c0_6, %c0_7] : memref<1x8x64xf32, #tpu.memory_space<vmem>>, vector<1x8x64xf32>
    %14 = vector.shape_cast %13 : vector<1x8x64xf32> to vector<8x64xf32>
    %15 = vector.shape_cast %12 : vector<8x64xf32> to vector<1x8x64xf32>
    tpu.vector_store %arg3[%c0_5, %c0_6, %c0_7], %15 {strides = array<i32>} : memref<1x8x64xf32, #tpu.memory_space<vmem>>, vector<1x8x64xf32>,
    return
  }
  func.func @transform_0(%arg0: i32) -> (i32, i32, i32) {
    %c0_i32 = arith.constant 0 : i32
    %c0_i32_0 = arith.constant 0 : i32
    %c0_i32_1 = arith.constant 0 : i32
    return %arg0, %c0_i32, %c0_i32_0 : i32, i32, i32
  }
  func.func @transform_1(%arg0: i32) -> (i32, i32, i32) {
    %c0_i32 = arith.constant 0 : i32
    %c0_i32_0 = arith.constant 0 : i32
    %c0_i32_1 = arith.constant 0 : i32
    return %arg0, %c0_i32, %c0_i32_0 : i32, i32, i32
  }
  func.func @transform_2(%arg0: i32) -> (i32, i32, i32) {
    %c0_i32 = arith.constant 0 : i32
    %c0_i32_0 = arith.constant 0 : i32
    %c0_i32_1 = arith.constant 0 : i32
    return %arg0, %c0_i32, %c0_i32_0 : i32, i32, i32
  }
}

module attributes {stable_mosaic.version = 11 : i64} {
  func.func @_pw_kernel(%arg0: i32, %arg1: memref<1x4x64xf32, #tpu.memory_space<vmem>>, %arg2: memref<4x4xf32, #tpu.memory_space<vmem>>, %arg3: memref<4x1xf32, #tpu.memory_space<vmem>>, %arg4: memref<4x1xf32, #tpu.memory_space<vmem>>, %arg5: memref<1x4x64xf32, #tpu.memory_space<vmem>>) attributes {dimension_semantics = [#tpu.dimension_semantics<parallel>], iteration_bounds = array<i64: 2>, scalar_prefetch = 0 : i64, scratch_operands = 0 : i64, tpu.core_type = #tpu.core_type<tc>, window_params = [{transform_indices = @transform_0, window_bounds = array<i64: 1, 4, 64>}, {pipeline_mode = #tpu.pipeline_mode<synchronous>, transform_indices = @transform_1, window_bounds = array<i64: 4, 4>}, {pipeline_mode = #tpu.pipeline_mode<synchronous>, transform_indices = @transform_2, window_bounds = array<i64: 4, 1>}, {pipeline_mode = #tpu.pipeline_mode<synchronous>, transform_indices = @transform_3, window_bounds = array<i64: 4, 1>}, {transform_indices = @transform_4, window_bounds = array<i64: 1, 4, 64>}]} {
    %c0 = arith.constant 0 : index
    %c0_0 = arith.constant 0 : index
    %c0_1 = arith.constant 0 : index
    %0 = vector.load %arg1[%c0, %c0_0, %c0_1] : memref<1x4x64xf32, #tpu.memory_space<vmem>>, vector<1x4x64xf32>
    %1 = vector.shape_cast %0 : vector<1x4x64xf32> to vector<4x64xf32>
    %c0_2 = arith.constant 0 : index
    %c0_3 = arith.constant 0 : index
    %2 = vector.load %arg2[%c0_2, %c0_3] : memref<4x4xf32, #tpu.memory_space<vmem>>, vector<4x4xf32>
    %cst = arith.constant dense<0.000000e+00> : vector<4x64xf32>
    %3 = tpu.matmul %2, %1, %cst {dimension_numbers = #tpu.dot_dimension_numbers<[1], [0], [0], [1], [0, 0, 1, 1], [], []>} : vector<4x4xf32>, vector<4x64xf32>, vector<4x64xf32> -> vector<4x64xf32>
    %c0_4 = arith.constant 0 : index
    %c0_5 = arith.constant 0 : index
    %4 = vector.load %arg3[%c0_4, %c0_5] : memref<4x1xf32, #tpu.memory_space<vmem>>, vector<4x1xf32>
    %5 = vector.broadcast %4 : vector<4x1xf32> to vector<4x64xf32>
    %6 = arith.mulf %3, %5 : vector<4x64xf32>
    %c0_6 = arith.constant 0 : index
    %c0_7 = arith.constant 0 : index
    %7 = vector.load %arg4[%c0_6, %c0_7] : memref<4x1xf32, #tpu.memory_space<vmem>>, vector<4x1xf32>
    %8 = vector.broadcast %7 : vector<4x1xf32> to vector<4x64xf32>
    %9 = arith.addf %6, %8 : vector<4x64xf32>
    %cst_8 = arith.constant 0.000000e+00 : f32
    %10 = vector.broadcast %cst_8 : f32 to vector<4x64xf32>
    %11 = arith.maximumf %9, %10 : vector<4x64xf32>
    %c0_9 = arith.constant 0 : index
    %c0_10 = arith.constant 0 : index
    %c0_11 = arith.constant 0 : index
    %12 = vector.load %arg5[%c0_9, %c0_10, %c0_11] : memref<1x4x64xf32, #tpu.memory_space<vmem>>, vector<1x4x64xf32>
    %13 = vector.shape_cast %12 : vector<1x4x64xf32> to vector<4x64xf32>
    %14 = vector.shape_cast %11 : vector<4x64xf32> to vector<1x4x64xf32>
    tpu.vector_store %arg5[%c0_9, %c0_10, %c0_11], %14 {strides = array<i32>} : memref<1x4x64xf32, #tpu.memory_space<vmem>>, vector<1x4x64xf32>,
    return
  }
  func.func @transform_0(%arg0: i32) -> (i32, i32, i32) {
    %c0_i32 = arith.constant 0 : i32
    %c0_i32_0 = arith.constant 0 : i32
    %c0_i32_1 = arith.constant 0 : i32
    return %arg0, %c0_i32, %c0_i32_0 : i32, i32, i32
  }
  func.func @transform_1(%arg0: i32) -> (i32, i32) {
    %c0_i32 = arith.constant 0 : i32
    %c0_i32_0 = arith.constant 0 : i32
    %c0_i32_1 = arith.constant 0 : i32
    return %c0_i32, %c0_i32_0 : i32, i32
  }
  func.func @transform_2(%arg0: i32) -> (i32, i32) {
    %c0_i32 = arith.constant 0 : i32
    %c0_i32_0 = arith.constant 0 : i32
    %c0_i32_1 = arith.constant 0 : i32
    return %c0_i32, %c0_i32_0 : i32, i32
  }
  func.func @transform_3(%arg0: i32) -> (i32, i32) {
    %c0_i32 = arith.constant 0 : i32
    %c0_i32_0 = arith.constant 0 : i32
    %c0_i32_1 = arith.constant 0 : i32
    return %c0_i32, %c0_i32_0 : i32, i32
  }
  func.func @transform_4(%arg0: i32) -> (i32, i32, i32) {
    %c0_i32 = arith.constant 0 : i32
    %c0_i32_0 = arith.constant 0 : i32
    %c0_i32_1 = arith.constant 0 : i32
    return %arg0, %c0_i32, %c0_i32_0 : i32, i32, i32
  }
}

</mosaic_0001>

<llo_original>
// kernel: stage_forward_pallas.14
$region0: #{stage_forward_pallas.14}
  #allocation0 [shape = 'u32[]', space=smem, size = 0x4, offset = 0x4, fixed_abs, tag = 'smem constant byte address 0x4 - core index']
  #allocation1 [shape = 'u32[144,128]{1,0:T(1,128)}', space=vmem, size = 0x12000, scoped, tag = 'internal scratch']
  %s0 = inlined_call_operand.vmem [shape: f32[2,4,256], index: 0, kind: input, shape index: {}]
  %s1 = inlined_call_operand.vmem [shape: f32[4,4], index: 1, kind: input, shape index: {}]
  %s2 = inlined_call_operand.vmem [shape: f32[256,64], index: 2, kind: input, shape index: {}]
  %s3 = inlined_call_operand.vmem [shape: f32[4,1], index: 3, kind: input, shape index: {}]
  %s4 = inlined_call_operand.vmem [shape: f32[4,1], index: 4, kind: input, shape index: {}]
  %s5 = inlined_call_operand.vmem [shape: f32[2,4,64], index: 5, kind: output, shape index: {}]
  %s6 = sld [smem:[#allocation0]]
  $region53: #{stage_forward_pallas.14} parent=0
    _
  %s8 = ssub.s32 1, %s6
  %s9 = scalar_select 0, %s8, %s6
  loop: start=0, step=1, limit=4
  $region2: #{stage_forward_pallas.14} parent=0 // loop_pre_header
    _
  $region3: #{stage_forward_pallas.14} parent=0 // loop_header
    %s11 = sphi 0, %s15
    %p12 = scmp.ge.s32.totalorder %s11, 4
    %s21 = sphi 0, %s23
    %s24 = sphi 0, %s21
    %s25 = sphi 0, %s24
    %s41 = sphi 0, %s25
    %s45 = sphi 0, %s45
    %s47 = sphi 0, %s45
    %s48 = sphi 0, %s47
    %s62 = sphi 0, %s48
    %s66 = sphi 0, %s66
    %s68 = sphi 0, %s66
    %s69 = sphi 0, %s68
    %s83 = sphi 0, %s69
    %s87 = sphi 0, %s87
    %s89 = sphi 0, %s87
    %s90 = sphi 0, %s89
    %s104 = sphi 0, %s90
    %s108 = sphi 0, %s108
    %s110 = sphi 0, %s108
    %s111 = sphi 0, %s110
    %s125 = sphi 0, %s111
    %s131 = sphi 0, %s133
    %s134 = sphi 0, %s131
    %s135 = sphi 0, %s134
    %s151 = sphi 0, %s135
  $region4: #{stage_forward_pallas.14} parent=0 // loop_header_branch
    %14 = sbr.rel (%p12) target = $region8
  $region5: #{stage_forward_pallas.14} parent=0 // loop_body
    %s16 = ssub.s32 %s11, 1
    %s17 = ssub.s32 %s11, 2
    %s18 = sadd.s32 %s11, 1
    %s19 = ssub.s32 %s11, %s18
    %p20 = scmp.eq.s32.totalorder %s19, 0
    %s22 = sadd.s32 %s21, 1
    %s23 = scalar_select %p20, %s21, %s22
    %p26 = pneg %p20
    %p27 = scmp.eq.s32.totalorder %s11, 1
    %p28 = por %p26, %p27
    %p29 = scmp.ne.s32.totalorder %s21, %s24
    %p30 = scmp.eq.s32.totalorder %s11, 0
    %p31 = por %p29, %p30
    %p32 = scmp.ne.s32.totalorder %s21, %s24
    %p33 = scmp.eq.s32.totalorder %s16, 1
    %p34 = por %p32, %p33
    %p35 = scmp.ne.s32.totalorder %s24, %s25
    %p36 = scmp.eq.s32.totalorder %s16, 0
    %p37 = por %p35, %p36
    %p38 = scmp.ne.s32.totalorder %s24, %s25
    %p39 = scmp.eq.s32.totalorder %s17, 1
    %p40 = por %p38, %p39
    %p42 = scmp.ne.s32.totalorder %s25, %s41
    %p43 = scmp.eq.s32.totalorder %s17, 0
    %p44 = por %p42, %p43
    %s46 = sadd.s32 %s45, 1
    %p49 = scmp.eq.s32.totalorder %s11, 1
    %p50 = scmp.ne.s32.totalorder %s45, %s47
    %p51 = scmp.eq.s32.totalorder %s11, 0
    %p52 = por %p50, %p51
    %p53 = scmp.ne.s32.totalorder %s45, %s47
    %p54 = scmp.eq.s32.totalorder %s16, 1
    %p55 = por %p53, %p54
    %p56 = scmp.ne.s32.totalorder %s47, %s48
    %p57 = scmp.eq.s32.totalorder %s16, 0
    %p58 = por %p56, %p57
    %p59 = scmp.ne.s32.totalorder %s47, %s48
    %p60 = scmp.eq.s32.totalorder %s17, 1
    %p61 = por %p59, %p60
    %p63 = scmp.ne.s32.totalorder %s48, %s62
    %p64 = scmp.eq.s32.totalorder %s17, 0
    %p65 = por %p63, %p64
    %s67 = sadd.s32 %s66, 1
    %p70 = scmp.eq.s32.totalorder %s11, 1
    %p71 = scmp.ne.s32.totalorder %s66, %s68
    %p72 = scmp.eq.s32.totalorder %s11, 0
    %p73 = por %p71, %p72
    %p74 = scmp.ne.s32.totalorder %s66, %s68
    %p75 = scmp.eq.s32.totalorder %s16, 1
    %p76 = por %p74, %p75
    %p77 = scmp.ne.s32.totalorder %s68, %s69
    %p78 = scmp.eq.s32.totalorder %s16, 0
    %p79 = por %p77, %p78
    %p80 = scmp.ne.s32.totalorder %s68, %s69
    %p81 = scmp.eq.s32.totalorder %s17, 1
    %p82 = por %p80, %p81
    %p84 = scmp.ne.s32.totalorder %s69, %s83
    %p85 = scmp.eq.s32.totalorder %s17, 0
    %p86 = por %p84, %p85
    %s88 = sadd.s32 %s87, 1
    %p91 = scmp.eq.s32.totalorder %s11, 1
    %p92 = scmp.ne.s32.totalorder %s87, %s89
    %p93 = scmp.eq.s32.totalorder %s11, 0
    %p94 = por %p92, %p93
    %p95 = scmp.ne.s32.totalorder %s87, %s89
    %p96 = scmp.eq.s32.totalorder %s16, 1
    %p97 = por %p95, %p96
    %p98 = scmp.ne.s32.totalorder %s89, %s90
    %p99 = scmp.eq.s32.totalorder %s16, 0
    %p100 = por %p98, %p99
    %p101 = scmp.ne.s32.totalorder %s89, %s90
    %p102 = scmp.eq.s32.totalorder %s17, 1
    %p103 = por %p101, %p102
    %p105 = scmp.ne.s32.totalorder %s90, %s104
    %p106 = scmp.eq.s32.totalorder %s17, 0
    %p107 = por %p105, %p106
    %s109 = sadd.s32 %s108, 1
    %p112 = scmp.eq.s32.totalorder %s11, 1
    %p113 = scmp.ne.s32.totalorder %s108, %s110
    %p114 = scmp.eq.s32.totalorder %s11, 0
    %p115 = por %p113, %p114
    %p116 = scmp.ne.s32.totalorder %s108, %s110
    %p117 = scmp.eq.s32.totalorder %s16, 1
    %p118 = por %p116, %p117
    %p119 = scmp.ne.s32.totalorder %s110, %s111
    %p120 = scmp.eq.s32.totalorder %s16, 0
    %p121 = por %p119, %p120
    %p122 = scmp.ne.s32.totalorder %s110, %s111
    %p123 = scmp.eq.s32.totalorder %s17, 1
    %p124 = por %p122, %p123
    %p126 = scmp.ne.s32.totalorder %s111, %s125
    %p127 = scmp.eq.s32.totalorder %s17, 0
    %p128 = por %p126, %p127
    %s129 = ssub.s32 %s11, %s18
    %p130 = scmp.eq.s32.totalorder %s129, 0
    %s132 = sadd.s32 %s131, 1
    %s133 = scalar_select %p130, %s131, %s132
    %p136 = pneg %p130
    %p137 = scmp.eq.s32.totalorder %s11, 1
    %p138 = por %p136, %p137
    %p139 = scmp.ne.s32.totalorder %s131, %s134
    %p140 = scmp.eq.s32.totalorder %s11, 0
    %p141 = por %p139, %p140
    %p142 = scmp.ne.s32.totalorder %s131, %s134
    %p143 = scmp.eq.s32.totalorder %s16, 1
    %p144 = por %p142, %p143
    %p145 = scmp.ne.s32.totalorder %s134, %s135
    %p146 = scmp.eq.s32.totalorder %s16, 0
    %p147 = por %p145, %p146
    %p148 = scmp.ne.s32.totalorder %s134, %s135
    %p149 = scmp.eq.s32.totalorder %s17, 1
    %p150 = por %p148, %p149
    %p152 = scmp.ne.s32.totalorder %s135, %s151
    %p153 = scmp.eq.s32.totalorder %s17, 0
    %p154 = por %p152, %p153
    %p155 = scmp.le.s32.totalorder 1, %s11
    %p156 = scmp.lt.s32.totalorder %s11, 3
    %p157 = pnand %p155, %p156
    %p158 = pneg %p157
    // Predicated region
    $region9: #{stage_forward_pallas.14} parent=5 // pred_check
      _
    $region10: #{stage_forward_pallas.14} parent=5 // pred_check_branch
      %160 = sbr.rel (%p157) target = $region12
    $region11: #{stage_forward_pallas.14} parent=5 // pred_region
      %s161 = ssub.s32 %s11, 1
      // Predicated region
      $region13: #{stage_forward_pallas.14} parent=11 // pred_check
        %p162 = pneg %p58
      $region14: #{stage_forward_pallas.14} parent=11 // pred_check_branch
        %164 = sbr.rel (%p162) target = $region16
      $region15: #{stage_forward_pallas.14} parent=11 // pred_region
        _
      $region16: #{stage_forward_pallas.14} parent=11 // pred_fallthru
        _
      // Predicated region
      $region17: #{stage_forward_pallas.14} parent=11 // pred_check
        %p165 = pneg %p79
      $region18: #{stage_forward_pallas.14} parent=11 // pred_check_branch
        %167 = sbr.rel (%p165) target = $region20
      $region19: #{stage_forward_pallas.14} parent=11 // pred_region
        _
      $region20: #{stage_forward_pallas.14} parent=11 // pred_fallthru
        _
      // Predicated region
      $region21: #{stage_forward_pallas.14} parent=11 // pred_check
        %p168 = pneg %p100
      $region22: #{stage_forward_pallas.14} parent=11 // pred_check_branch
        %170 = sbr.rel (%p168) target = $region24
      $region23: #{stage_forward_pallas.14} parent=11 // pred_region
        _
      $region24: #{stage_forward_pallas.14} parent=11 // pred_fallthru
        _
      // Predicated region
      $region25: #{stage_forward_pallas.14} parent=11 // pred_check
        %p171 = pneg %p121
      $region26: #{stage_forward_pallas.14} parent=11 // pred_check_branch
        %173 = sbr.rel (%p171) target = $region28
      $region27: #{stage_forward_pallas.14} parent=11 // pred_region
        _
      $region28: #{stage_forward_pallas.14} parent=11 // pred_fallthru
        _
    $region12: #{stage_forward_pallas.14} parent=5 // pred_fallthru
      _
    %p174 = scmp.lt.s32.totalorder %s11, 2
    // Predicated region
    $region29: #{stage_forward_pallas.14} parent=5 // pred_check
      %p175 = pneg %p174
    $region30: #{stage_forward_pallas.14} parent=5 // pred_check_branch
      %177 = sbr.rel (%p175) target = $region32
    $region31: #{stage_forward_pallas.14} parent=5 // pred_region
      // Predicated region
      $region33: #{stage_forward_pallas.14} parent=31 // pred_check
        %p178 = pneg %p31
      $region34: #{stage_forward_pallas.14} parent=31 // pred_check_branch
        %180 = sbr.rel (%p178) target = $region36
      $region35: #{stage_forward_pallas.14} parent=31 // pred_region
        %p181 = scmp.lt.s32.totalorder %s11, 1
        %s182 = scalar_select %p181, %s11, 1
        %s183 = smul.addr %s182, 2
        %s184 = smul.addr %s183, 4
        %s185 = scalar_lea.vmem %s0, %s184
      $region36: #{stage_forward_pallas.14} parent=31 // pred_fallthru
        _
    $region32: #{stage_forward_pallas.14} parent=5 // pred_fallthru
      _
    %p186 = scmp.le.s32.totalorder 1, %s11
    %p187 = scmp.lt.s32.totalorder %s11, 3
    %p188 = pnand %p186, %p187
    %p189 = pneg %p188
    // Predicated region
    $region37: #{stage_forward_pallas.14} parent=5 // pred_check
      _
    $region38: #{stage_forward_pallas.14} parent=5 // pred_check_branch
      %191 = sbr.rel (%p188) target = $region40
    $region39: #{stage_forward_pallas.14} parent=5 // pred_region
      %s192 = ssub.s32 %s11, 1
      %p193 = scmp.lt.s32.totalorder %s16, 1
      %s194 = scalar_select %p193, %s16, 1
      %s195 = smul.addr %s194, 2
      %s196 = smul.addr %s195, 4
      %s197 = scalar_lea.vmem %s0, %s196
      %p198 = pneg %p37
      %p199 = pneg %p34
      %p200 = pneg %p58
      %p201 = pneg %p55
      %p202 = pneg %p79
      %p203 = pneg %p76
      %p204 = pneg %p100
      %p205 = pneg %p97
      %p206 = pneg %p121
      %p207 = pneg %p118
      %p208 = pneg %p147
      %p209 = pneg %p144
      %p210 = scmp.lt.s32.totalorder %s16, 1
      %s211 = scalar_select %p210, %s16, 1
      %s212 = smul.addr %s211, 4
      %s213 = scalar_lea.vmem %s5, %s212
      %p214 = scmp.lt.s32.totalorder %s16, 1
      %s215 = scalar_select %p214, %s16, 1
      %s216 = smul.addr %s215, 2
      %s217 = smul.addr %s216, 4
      %s218 = scalar_lea.vmem %s0, %s217
      %p219 = scmp.lt.s32.totalorder %s16, 1
      %s220 = scalar_select %p219, %s16, 1
      %s221 = smul.addr %s220, 4
      %s222 = scalar_lea.vmem %s5, %s221
      %v223 = vld [vmem:[%s218] sm:$0xff]
      %v224 = vld [vmem:[%s2] sm:$0xff]
      %v225 = vld [vmem:[%s2 + $0x8] sm:$0xff]
      %v226 = vld [vmem:[%s2 + $0x10] sm:$0xff]
      %v227 = vld [vmem:[%s2 + $0x18] sm:$0xff]
      %v228 = vld [vmem:[%s2 + $0x20] sm:$0xff]
      %v229 = vld [vmem:[%s2 + $0x28] sm:$0xff]
      %v230 = vld [vmem:[%s2 + $0x30] sm:$0xff]
      %v231 = vld [vmem:[%s2 + $0x38] sm:$0xff]
      %v232 = vld [vmem:[%s2 + $0x40] sm:$0xff]
      %v233 = vld [vmem:[%s2 + $0x48] sm:$0xff]
      %v234 = vld [vmem:[%s2 + $0x50] sm:$0xff]
      %v235 = vld [vmem:[%s2 + $0x58] sm:$0xff]
      %v236 = vld [vmem:[%s2 + $0x60] sm:$0xff]
      %v237 = vld [vmem:[%s2 + $0x68] sm:$0xff]
      %v238 = vld [vmem:[%s2 + $0x70] sm:$0xff]
      %v239 = vld [vmem:[%s2 + $0x78] sm:$0xff]
      %v240 = vld [vmem:[%s2 + $0x80] sm:$0xff]
      %v241 = vld [vmem:[%s2 + $0x88] sm:$0xff]
      %v242 = vld [vmem:[%s2 + $0x90] sm:$0xff]
      %v243 = vld [vmem:[%s2 + $0x98] sm:$0xff]
      %v244 = vld [vmem:[%s2 + $0xa0] sm:$0xff]
      %v245 = vld [vmem:[%s2 + $0xa8] sm:$0xff]
      %v246 = vld [vmem:[%s2 + $0xb0] sm:$0xff]
      %v247 = vld [vmem:[%s2 + $0xb8] sm:$0xff]
      %v248 = vld [vmem:[%s2 + $0xc0] sm:$0xff]
      %v249 = vld [vmem:[%s2 + $0xc8] sm:$0xff]
      %v250 = vld [vmem:[%s2 + $0xd0] sm:$0xff]
      %v251 = vld [vmem:[%s2 + $0xd8] sm:$0xff]
      %v252 = vld [vmem:[%s2 + $0xe0] sm:$0xff]
      %v253 = vld [vmem:[%s2 + $0xe8] sm:$0xff]
      %v254 = vld [vmem:[%s2 + $0xf0] sm:$0xff]
      %v255 = vld [vmem:[%s2 + $0xf8] sm:$0xff]
      %v257 = vcombine.high %v223, %v223
      %259 = vmatprep.subr.mxu0 0.0
      %260 = vmatpush1.msra.mxu0 %v239
      %261 = vmatprep.subr.mxu0 0.0
      %262 = vmatpush1.msra.mxu0 %v238
      %263 = vmatprep.subr.mxu0 0.0
      %264 = vmatpush1.msra.mxu0 %v237
      %265 = vmatprep.subr.mxu0 0.0
      %266 = vmatpush1.msra.mxu0 %v236
      %267 = vmatprep.subr.mxu0 0.0
      %268 = vmatpush1.msra.mxu0 %v235
      %269 = vmatprep.subr.mxu0 0.0
      %270 = vmatpush1.msra.mxu0 %v234
      %271 = vmatprep.subr.mxu0 0.0
      %272 = vmatpush1.msra.mxu0 %v233
      %273 = vmatprep.subr.mxu0 0.0
      %274 = vmatpush1.msra.mxu0 %v232
      %275 = vmatprep.subr.mxu0 0.0
      %276 = vmatpush1.msra.mxu0 %v231
      %277 = vmatprep.subr.mxu0 0.0
      %278 = vmatpush1.msra.mxu0 %v230
      %279 = vmatprep.subr.mxu0 0.0
      %280 = vmatpush1.msra.mxu0 %v229
      %281 = vmatprep.subr.mxu0 0.0
      %282 = vmatpush1.msra.mxu0 %v228
      %283 = vmatprep.subr.mxu0 0.0
      %284 = vmatpush1.msra.mxu0 %v227
      %285 = vmatprep.subr.mxu0 0.0
      %286 = vmatpush1.msra.mxu0 %v226
      %287 = vmatprep.subr.mxu0 0.0
      %288 = vmatpush1.msra.mxu0 %v225
      %289 = vmatprep.subr.mxu0 0.0
      %290 = vmatpush1.msra.mxu0 %v224
      %291 = vmatprep.subr.mxu0 0.0
      %292 = vmatpush2.msra.mxu0 %v255
      %293 = vmatprep.subr.mxu0 0.0
      %294 = vmatpush2.msra.mxu0 %v254
      %295 = vmatprep.subr.mxu0 0.0
      %296 = vmatpush2.msra.mxu0 %v253
      %297 = vmatprep.subr.mxu0 0.0
      %298 = vmatpush2.msra.mxu0 %v252
      %299 = vmatprep.subr.mxu0 0.0
      %300 = vmatpush2.msra.mxu0 %v251
      %301 = vmatprep.subr.mxu0 0.0
      %302 = vmatpush2.msra.mxu0 %v250
      %303 = vmatprep.subr.mxu0 0.0
      %304 = vmatpush2.msra.mxu0 %v249
      %305 = vmatprep.subr.mxu0 0.0
      %306 = vmatpush2.msra.mxu0 %v248
      %307 = vmatprep.subr.mxu0 0.0
      %308 = vmatpush2.msra.mxu0 %v247
      %309 = vmatprep.subr.mxu0 0.0
      %310 = vmatpush2.msra.mxu0 %v246
      %311 = vmatprep.subr.mxu0 0.0
      %312 = vmatpush2.msra.mxu0 %v245
      %313 = vmatprep.subr.mxu0 0.0
      %314 = vmatpush2.msra.mxu0 %v244
      %315 = vmatprep.subr.mxu0 0.0
      %316 = vmatpush2.msra.mxu0 %v243
      %317 = vmatprep.subr.mxu0 0.0
      %318 = vmatpush2.msra.mxu0 %v242
      %319 = vmatprep.subr.mxu0 0.0
      %320 = vmatpush2.msra.mxu0 %v241
      %321 = vmatprep.subr.mxu0 0.0
      %322 = vmatpush2.msra.mxu0 %v240
      %323 = vmatprep.mubr.f32.mxu0 %v257
      %324 = vmatmul.mubr.f32.gmra.mxu0 %v223
      %v325 = vpop.f32.mrf.mxu0
      %v326 = vadd.f32 0.0, %v325
      %v327 = vpop.f32.mrf.mxu0
      %328 = vdwg.mxu0
      %v329 = vld [vmem:[%s1] sm:$0xf]
      %vm330 = vcmask 31744
      %v332 = vsel %vm330, %v329, 0
      %vm334 = vcmask 1043456
      %v336 = vsel %vm334, %v326, 0
      %338 = vmatprep.subr.mxu0 0.0
      %339 = vmatpush1.msra.mxu0 0.0
      %340 = vmatprep.subr.mxu0 0.0
      %341 = vmatpush1.msra.mxu0 0.0
      %342 = vmatprep.subr.mxu0 0.0
      %343 = vmatpush1.msra.mxu0 0.0
      %344 = vmatprep.subr.mxu0 0.0
      %345 = vmatpush1.msra.mxu0 0.0
      %346 = vmatprep.subr.mxu0 0.0
      %347 = vmatpush1.msra.mxu0 0.0
      %348 = vmatprep.subr.mxu0 0.0
      %349 = vmatpush1.msra.mxu0 0.0
      %350 = vmatprep.subr.mxu0 0.0
      %351 = vmatpush1.msra.mxu0 0.0
      %352 = vmatprep.subr.mxu0 0.0
      %353 = vmatpush1.msra.mxu0 0.0
      %354 = vmatprep.subr.mxu0 0.0
      %355 = vmatpush1.msra.mxu0 0.0
      %356 = vmatprep.subr.mxu0 0.0
      %357 = vmatpush1.msra.mxu0 0.0
      %358 = vmatprep.subr.mxu0 0.0
      %359 = vmatpush1.msra.mxu0 0.0
      %360 = vmatprep.subr.mxu0 0.0
      %361 = vmatpush1.msra.mxu0 0.0
      %362 = vmatprep.subr.mxu0 0.0
      %363 = vmatpush1.msra.mxu0 0.0
      %364 = vmatprep.subr.mxu0 0.0
      %365 = vmatpush1.msra.mxu0 0.0
      %366 = vmatprep.subr.mxu0 0.0
      %367 = vmatpush1.msra.mxu0 0.0
      %368 = vmatprep.subr.mxu0 0.0
      %369 = vmatpush1.msra.mxu0 %v336
      %370 = vmatprep.subr.mxu0 0.0
      %371 = vmatpush2.msra.mxu0 0.0
      %372 = vmatprep.subr.mxu0 0.0
      %373 = vmatpush2.msra.mxu0 0.0
      %374 = vmatprep.subr.mxu0 0.0
      %375 = vmatpush2.msra.mxu0 0.0
      %376 = vmatprep.subr.mxu0 0.0
      %377 = vmatpush2.msra.mxu0 0.0
      %378 = vmatprep.subr.mxu0 0.0
      %379 = vmatpush2.msra.mxu0 0.0
      %380 = vmatprep.subr.mxu0 0.0
      %381 = vmatpush2.msra.mxu0 0.0
      %382 = vmatprep.subr.mxu0 0.0
      %383 = vmatpush2.msra.mxu0 0.0
      %384 = vmatprep.subr.mxu0 0.0
      %385 = vmatpush2.msra.mxu0 0.0
      %386 = vmatprep.subr.mxu0 0.0
      %387 = vmatpush2.msra.mxu0 0.0
      %388 = vmatprep.subr.mxu0 0.0
      %389 = vmatpush2.msra.mxu0 0.0
      %390 = vmatprep.subr.mxu0 0.0
      %391 = vmatpush2.msra.mxu0 0.0
      %392 = vmatprep.subr.mxu0 0.0
      %393 = vmatpush2.msra.mxu0 0.0
      %394 = vmatprep.subr.mxu0 0.0
      %395 = vmatpush2.msra.mxu0 0.0
      %396 = vmatprep.subr.mxu0 0.0
      %397 = vmatpush2.msra.mxu0 0.0
      %398 = vmatprep.subr.mxu0 0.0
      %399 = vmatpush2.msra.mxu0 0.0
      %400 = vmatprep.subr.mxu0 0.0
      %401 = vmatpush2.msra.mxu0 0.0
      %402 = vmatprep.mubr.f32.mxu0 0.0
      %403 = vmatmul.mubr.f32.gmra.mxu0 %v332
      %v404 = vpop.f32.mrf.mxu0
      %v405 = vadd.f32 0.0, %v404
      %v406 = vpop.f32.mrf.mxu0
      %407 = vdwg.mxu0
      %v408 = vld [vmem:[%s3] sm:$0xf]
      %410 = vset.pattern.permute.xlu0 0
      %411 = vperm.xlu0 %410, %v408
      %v412 = vpop.permute.xlu0 %411
      %v414 = vmul.f32 %v405, %v412
      %v415 = vld [vmem:[%s4] sm:$0xf]
      %417 = vset.pattern.permute.xlu0 0
      %418 = vperm.xlu0 %417, %v415
      %v419 = vpop.permute.xlu0 %418
      %v421 = vadd.f32 %v414, %v419
      %v422 = vmax.f32 %v421, 0.0
      %vm423 = vcmask 519168
      %424 = vst.msk [vmem:[%s222] sm:$0xf] %vm423, %v422
      %p425 = scmp.lt.s32.totalorder %s16, 1
      %s426 = scalar_select %p425, %s16, 1
      %s427 = smul.addr %s426, 4
      %s428 = scalar_lea.vmem %s5, %s427
      // Predicated region
      $region41: #{stage_forward_pallas.14} parent=39 // pred_check
        %p429 = pneg %p144
      $region42: #{stage_forward_pallas.14} parent=39 // pred_check_branch
        %431 = sbr.rel (%p429) target = $region44
      $region43: #{stage_forward_pallas.14} parent=39 // pred_region
        _
      $region44: #{stage_forward_pallas.14} parent=39 // pred_fallthru
        _
    $region40: #{stage_forward_pallas.14} parent=5 // pred_fallthru
      _
    %p432 = scmp.le.s32.totalorder 2, %s11
    // Predicated region
    $region45: #{stage_forward_pallas.14} parent=5 // pred_check
      %p433 = pneg %p432
    $region46: #{stage_forward_pallas.14} parent=5 // pred_check_branch
      %435 = sbr.rel (%p433) target = $region48
    $region47: #{stage_forward_pallas.14} parent=5 // pred_region
      %s436 = ssub.s32 %s11, 2
      // Predicated region
      $region49: #{stage_forward_pallas.14} parent=47 // pred_check
        %p437 = pneg %p150
      $region50: #{stage_forward_pallas.14} parent=47 // pred_check_branch
        %439 = sbr.rel (%p437) target = $region52
      $region51: #{stage_forward_pallas.14} parent=47 // pred_region
        %p440 = scmp.lt.s32.totalorder %s17, 1
        %s441 = scalar_select %p440, %s17, 1
        %s442 = smul.addr %s441, 4
        %s443 = scalar_lea.vmem %s5, %s442
      $region52: #{stage_forward_pallas.14} parent=47 // pred_fallthru
        _
    $region48: #{stage_forward_pallas.14} parent=5 // pred_fallthru
      _
  $region6: #{stage_forward_pallas.14} parent=0 // loop_footer
    %s15 = sadd.s32 1, %s11
  $region7: #{stage_forward_pallas.14} parent=0 // loop_footer_branch
    %10 = sbr.rel target = $region3
  $region8: #{stage_forward_pallas.14} parent=0 // loop_exit
    _

// kernel: stage_forward_pallas.12
$region0: #{stage_forward_pallas.12}
  #allocation0 [shape = 'u32[]', space=smem, size = 0x4, offset = 0x4, fixed_abs, tag = 'smem constant byte address 0x4 - core index']
  #allocation1 [shape = 'u32[144,128]{1,0:T(1,128)}', space=vmem, size = 0x12000, scoped, tag = 'internal scratch']
  %s0 = inlined_call_operand.vmem [shape: f32[2,4,256], index: 0, kind: input, shape index: {}]
  %s1 = inlined_call_operand.vmem [shape: f32[4,4], index: 1, kind: input, shape index: {}]
  %s2 = inlined_call_operand.vmem [shape: f32[4,1], index: 2, kind: input, shape index: {}]
  %s3 = inlined_call_operand.vmem [shape: f32[4,1], index: 3, kind: input, shape index: {}]
  %s4 = inlined_call_operand.vmem [shape: f32[2,4,256], index: 4, kind: output, shape index: {}]
  %s5 = sld [smem:[#allocation0]]
  $region49: #{stage_forward_pallas.12} parent=0
    _
  %s7 = ssub.s32 1, %s5
  %s8 = scalar_select 0, %s7, %s5
  loop: start=0, step=1, limit=4
  $region2: #{stage_forward_pallas.12} parent=0 // loop_pre_header
    _
  $region3: #{stage_forward_pallas.12} parent=0 // loop_header
    %s10 = sphi 0, %s14
    %p11 = scmp.ge.s32.totalorder %s10, 4
    %s20 = sphi 0, %s22
    %s23 = sphi 0, %s20
    %s24 = sphi 0, %s23
    %s40 = sphi 0, %s24
    %s44 = sphi 0, %s44
    %s46 = sphi 0, %s44
    %s47 = sphi 0, %s46
    %s61 = sphi 0, %s47
    %s65 = sphi 0, %s65
    %s67 = sphi 0, %s65
    %s68 = sphi 0, %s67
    %s82 = sphi 0, %s68
    %s86 = sphi 0, %s86
    %s88 = sphi 0, %s86
    %s89 = sphi 0, %s88
    %s103 = sphi 0, %s89
    %s109 = sphi 0, %s111
    %s112 = sphi 0, %s109
    %s113 = sphi 0, %s112
    %s129 = sphi 0, %s113
  $region4: #{stage_forward_pallas.12} parent=0 // loop_header_branch
    %13 = sbr.rel (%p11) target = $region8
  $region5: #{stage_forward_pallas.12} parent=0 // loop_body
    %s15 = ssub.s32 %s10, 1
    %s16 = ssub.s32 %s10, 2
    %s17 = sadd.s32 %s10, 1
    %s18 = ssub.s32 %s10, %s17
    %p19 = scmp.eq.s32.totalorder %s18, 0
    %s21 = sadd.s32 %s20, 1
    %s22 = scalar_select %p19, %s20, %s21
    %p25 = pneg %p19
    %p26 = scmp.eq.s32.totalorder %s10, 1
    %p27 = por %p25, %p26
    %p28 = scmp.ne.s32.totalorder %s20, %s23
    %p29 = scmp.eq.s32.totalorder %s10, 0
    %p30 = por %p28, %p29
    %p31 = scmp.ne.s32.totalorder %s20, %s23
    %p32 = scmp.eq.s32.totalorder %s15, 1
    %p33 = por %p31, %p32
    %p34 = scmp.ne.s32.totalorder %s23, %s24
    %p35 = scmp.eq.s32.totalorder %s15, 0
    %p36 = por %p34, %p35
    %p37 = scmp.ne.s32.totalorder %s23, %s24
    %p38 = scmp.eq.s32.totalorder %s16, 1
    %p39 = por %p37, %p38
    %p41 = scmp.ne.s32.totalorder %s24, %s40
    %p42 = scmp.eq.s32.totalorder %s16, 0
    %p43 = por %p41, %p42
    %s45 = sadd.s32 %s44, 1
    %p48 = scmp.eq.s32.totalorder %s10, 1
    %p49 = scmp.ne.s32.totalorder %s44, %s46
    %p50 = scmp.eq.s32.totalorder %s10, 0
    %p51 = por %p49, %p50
    %p52 = scmp.ne.s32.totalorder %s44, %s46
    %p53 = scmp.eq.s32.totalorder %s15, 1
    %p54 = por %p52, %p53
    %p55 = scmp.ne.s32.totalorder %s46, %s47
    %p56 = scmp.eq.s32.totalorder %s15, 0
    %p57 = por %p55, %p56
    %p58 = scmp.ne.s32.totalorder %s46, %s47
    %p59 = scmp.eq.s32.totalorder %s16, 1
    %p60 = por %p58, %p59
    %p62 = scmp.ne.s32.totalorder %s47, %s61
    %p63 = scmp.eq.s32.totalorder %s16, 0
    %p64 = por %p62, %p63
    %s66 = sadd.s32 %s65, 1
    %p69 = scmp.eq.s32.totalorder %s10, 1
    %p70 = scmp.ne.s32.totalorder %s65, %s67
    %p71 = scmp.eq.s32.totalorder %s10, 0
    %p72 = por %p70, %p71
    %p73 = scmp.ne.s32.totalorder %s65, %s67
    %p74 = scmp.eq.s32.totalorder %s15, 1
    %p75 = por %p73, %p74
    %p76 = scmp.ne.s32.totalorder %s67, %s68
    %p77 = scmp.eq.s32.totalorder %s15, 0
    %p78 = por %p76, %p77
    %p79 = scmp.ne.s32.totalorder %s67, %s68
    %p80 = scmp.eq.s32.totalorder %s16, 1
    %p81 = por %p79, %p80
    %p83 = scmp.ne.s32.totalorder %s68, %s82
    %p84 = scmp.eq.s32.totalorder %s16, 0
    %p85 = por %p83, %p84
    %s87 = sadd.s32 %s86, 1
    %p90 = scmp.eq.s32.totalorder %s10, 1
    %p91 = scmp.ne.s32.totalorder %s86, %s88
    %p92 = scmp.eq.s32.totalorder %s10, 0
    %p93 = por %p91, %p92
    %p94 = scmp.ne.s32.totalorder %s86, %s88
    %p95 = scmp.eq.s32.totalorder %s15, 1
    %p96 = por %p94, %p95
    %p97 = scmp.ne.s32.totalorder %s88, %s89
    %p98 = scmp.eq.s32.totalorder %s15, 0
    %p99 = por %p97, %p98
    %p100 = scmp.ne.s32.totalorder %s88, %s89
    %p101 = scmp.eq.s32.totalorder %s16, 1
    %p102 = por %p100, %p101
    %p104 = scmp.ne.s32.totalorder %s89, %s103
    %p105 = scmp.eq.s32.totalorder %s16, 0
    %p106 = por %p104, %p105
    %s107 = ssub.s32 %s10, %s17
    %p108 = scmp.eq.s32.totalorder %s107, 0
    %s110 = sadd.s32 %s109, 1
    %s111 = scalar_select %p108, %s109, %s110
    %p114 = pneg %p108
    %p115 = scmp.eq.s32.totalorder %s10, 1
    %p116 = por %p114, %p115
    %p117 = scmp.ne.s32.totalorder %s109, %s112
    %p118 = scmp.eq.s32.totalorder %s10, 0
    %p119 = por %p117, %p118
    %p120 = scmp.ne.s32.totalorder %s109, %s112
    %p121 = scmp.eq.s32.totalorder %s15, 1
    %p122 = por %p120, %p121
    %p123 = scmp.ne.s32.totalorder %s112, %s113
    %p124 = scmp.eq.s32.totalorder %s15, 0
    %p125 = por %p123, %p124
    %p126 = scmp.ne.s32.totalorder %s112, %s113
    %p127 = scmp.eq.s32.totalorder %s16, 1
    %p128 = por %p126, %p127
    %p130 = scmp.ne.s32.totalorder %s113, %s129
    %p131 = scmp.eq.s32.totalorder %s16, 0
    %p132 = por %p130, %p131
    %p133 = scmp.le.s32.totalorder 1, %s10
    %p134 = scmp.lt.s32.totalorder %s10, 3
    %p135 = pnand %p133, %p134
    %p136 = pneg %p135
    // Predicated region
    $region9: #{stage_forward_pallas.12} parent=5 // pred_check
      _
    $region10: #{stage_forward_pallas.12} parent=5 // pred_check_branch
      %138 = sbr.rel (%p135) target = $region12
    $region11: #{stage_forward_pallas.12} parent=5 // pred_region
      %s139 = ssub.s32 %s10, 1
      // Predicated region
      $region13: #{stage_forward_pallas.12} parent=11 // pred_check
        %p140 = pneg %p57
      $region14: #{stage_forward_pallas.12} parent=11 // pred_check_branch
        %142 = sbr.rel (%p140) target = $region16
      $region15: #{stage_forward_pallas.12} parent=11 // pred_region
        _
      $region16: #{stage_forward_pallas.12} parent=11 // pred_fallthru
        _
      // Predicated region
      $region17: #{stage_forward_pallas.12} parent=11 // pred_check
        %p143 = pneg %p78
      $region18: #{stage_forward_pallas.12} parent=11 // pred_check_branch
        %145 = sbr.rel (%p143) target = $region20
      $region19: #{stage_forward_pallas.12} parent=11 // pred_region
        _
      $region20: #{stage_forward_pallas.12} parent=11 // pred_fallthru
        _
      // Predicated region
      $region21: #{stage_forward_pallas.12} parent=11 // pred_check
        %p146 = pneg %p99
      $region22: #{stage_forward_pallas.12} parent=11 // pred_check_branch
        %148 = sbr.rel (%p146) target = $region24
      $region23: #{stage_forward_pallas.12} parent=11 // pred_region
        _
      $region24: #{stage_forward_pallas.12} parent=11 // pred_fallthru
        _
    $region12: #{stage_forward_pallas.12} parent=5 // pred_fallthru
      _
    %p149 = scmp.lt.s32.totalorder %s10, 2
    // Predicated region
    $region25: #{stage_forward_pallas.12} parent=5 // pred_check
      %p150 = pneg %p149
    $region26: #{stage_forward_pallas.12} parent=5 // pred_check_branch
      %152 = sbr.rel (%p150) target = $region28
    $region27: #{stage_forward_pallas.12} parent=5 // pred_region
      // Predicated region
      $region29: #{stage_forward_pallas.12} parent=27 // pred_check
        %p153 = pneg %p30
      $region30: #{stage_forward_pallas.12} parent=27 // pred_check_branch
        %155 = sbr.rel (%p153) target = $region32
      $region31: #{stage_forward_pallas.12} parent=27 // pred_region
        %p156 = scmp.lt.s32.totalorder %s10, 1
        %s157 = scalar_select %p156, %s10, 1
        %s158 = smul.addr %s157, 2
        %s159 = smul.addr %s158, 4
        %s160 = scalar_lea.vmem %s0, %s159
      $region32: #{stage_forward_pallas.12} parent=27 // pred_fallthru
        _
    $region28: #{stage_forward_pallas.12} parent=5 // pred_fallthru
      _
    %p161 = scmp.le.s32.totalorder 1, %s10
    %p162 = scmp.lt.s32.totalorder %s10, 3
    %p163 = pnand %p161, %p162
    %p164 = pneg %p163
    // Predicated region
    $region33: #{stage_forward_pallas.12} parent=5 // pred_check
      _
    $region34: #{stage_forward_pallas.12} parent=5 // pred_check_branch
      %166 = sbr.rel (%p163) target = $region36
    $region35: #{stage_forward_pallas.12} parent=5 // pred_region
      %s167 = ssub.s32 %s10, 1
      %p168 = scmp.lt.s32.totalorder %s15, 1
      %s169 = scalar_select %p168, %s15, 1
      %s170 = smul.addr %s169, 2
      %s171 = smul.addr %s170, 4
      %s172 = scalar_lea.vmem %s0, %s171
      %p173 = pneg %p36
      %p174 = pneg %p33
      %p175 = pneg %p57
      %p176 = pneg %p54
      %p177 = pneg %p78
      %p178 = pneg %p75
      %p179 = pneg %p99
      %p180 = pneg %p96
      %p181 = pneg %p125
      %p182 = pneg %p122
      %p183 = scmp.lt.s32.totalorder %s15, 1
      %s184 = scalar_select %p183, %s15, 1
      %s185 = smul.addr %s184, 2
      %s186 = smul.addr %s185, 4
      %s187 = scalar_lea.vmem %s4, %s186
      %p188 = scmp.lt.s32.totalorder %s15, 1
      %s189 = scalar_select %p188, %s15, 1
      %s190 = smul.addr %s189, 2
      %s191 = smul.addr %s190, 4
      %s192 = scalar_lea.vmem %s0, %s191
      %p193 = scmp.lt.s32.totalorder %s15, 1
      %s194 = scalar_select %p193, %s15, 1
      %s195 = smul.addr %s194, 2
      %s196 = smul.addr %s195, 4
      %s197 = scalar_lea.vmem %s4, %s196
      %v198 = vld [vmem:[%s192] sm:$0xff]
      %v199 = vld [vmem:[%s1] sm:$0xf]
      %v201 = vcombine.high %v198, %v198
      %vm202 = vcmask 31744
      %v204 = vsel %vm202, %v199, 0
      %vm206 = vcmask 1043456
      %v207 = vsel %vm206, %v198, 0
      %v209 = vsel %vm206, %v201, 0
      %211 = vmatprep.subr.mxu0 0.0
      %212 = vmatpush1.msra.mxu0 0.0
      %213 = vmatprep.subr.mxu0 0.0
      %214 = vmatpush1.msra.mxu0 0.0
      %215 = vmatprep.subr.mxu0 0.0
      %216 = vmatpush1.msra.mxu0 0.0
      %217 = vmatprep.subr.mxu0 0.0
      %218 = vmatpush1.msra.mxu0 0.0
      %219 = vmatprep.subr.mxu0 0.0
      %220 = vmatpush1.msra.mxu0 0.0
      %221 = vmatprep.subr.mxu0 0.0
      %222 = vmatpush1.msra.mxu0 0.0
      %223 = vmatprep.subr.mxu0 0.0
      %224 = vmatpush1.msra.mxu0 0.0
      %225 = vmatprep.subr.mxu0 0.0
      %226 = vmatpush1.msra.mxu0 0.0
      %227 = vmatprep.subr.mxu0 0.0
      %228 = vmatpush1.msra.mxu0 0.0
      %229 = vmatprep.subr.mxu0 0.0
      %230 = vmatpush1.msra.mxu0 0.0
      %231 = vmatprep.subr.mxu0 0.0
      %232 = vmatpush1.msra.mxu0 0.0
      %233 = vmatprep.subr.mxu0 0.0
      %234 = vmatpush1.msra.mxu0 0.0
      %235 = vmatprep.subr.mxu0 0.0
      %236 = vmatpush1.msra.mxu0 0.0
      %237 = vmatprep.subr.mxu0 0.0
      %238 = vmatpush1.msra.mxu0 0.0
      %239 = vmatprep.subr.mxu0 0.0
      %240 = vmatpush1.msra.mxu0 0.0
      %241 = vmatprep.subr.mxu0 %v209
      %242 = vmatpush1.msra.mxu0 %v207
      %243 = vmatprep.subr.mxu0 0.0
      %244 = vmatpush2.msra.mxu0 0.0
      %245 = vmatprep.subr.mxu0 0.0
      %246 = vmatpush2.msra.mxu0 0.0
      %247 = vmatprep.subr.mxu0 0.0
      %248 = vmatpush2.msra.mxu0 0.0
      %249 = vmatprep.subr.mxu0 0.0
      %250 = vmatpush2.msra.mxu0 0.0
      %251 = vmatprep.subr.mxu0 0.0
      %252 = vmatpush2.msra.mxu0 0.0
      %253 = vmatprep.subr.mxu0 0.0
      %254 = vmatpush2.msra.mxu0 0.0
      %255 = vmatprep.subr.mxu0 0.0
      %256 = vmatpush2.msra.mxu0 0.0
      %257 = vmatprep.subr.mxu0 0.0
      %258 = vmatpush2.msra.mxu0 0.0
      %259 = vmatprep.subr.mxu0 0.0
      %260 = vmatpush2.msra.mxu0 0.0
      %261 = vmatprep.subr.mxu0 0.0
      %262 = vmatpush2.msra.mxu0 0.0
      %263 = vmatprep.subr.mxu0 0.0
      %264 = vmatpush2.msra.mxu0 0.0
      %265 = vmatprep.subr.mxu0 0.0
      %266 = vmatpush2.msra.mxu0 0.0
      %267 = vmatprep.subr.mxu0 0.0
      %268 = vmatpush2.msra.mxu0 0.0
      %269 = vmatprep.subr.mxu0 0.0
      %270 = vmatpush2.msra.mxu0 0.0
      %271 = vmatprep.subr.mxu0 0.0
      %272 = vmatpush2.msra.mxu0 0.0
      %273 = vmatprep.subr.mxu0 0.0
      %274 = vmatpush2.msra.mxu0 0.0
      %275 = vmatprep.mubr.f32.mxu0 0.0
      %276 = vmatmul.mubr.f32.gmra.mxu0 %v204
      %v277 = vpop.f32.mrf.mxu0
      %v278 = vadd.f32 0.0, %v277
      %v279 = vpop.f32.mrf.mxu0
      %v280 = vadd.f32 0.0, %v279
      %281 = vdwg.mxu0
      %v282 = vld [vmem:[%s2] sm:$0xf]
      %284 = vset.pattern.permute.xlu0 0
      %285 = vperm.xlu0 %284, %v282
      %v286 = vpop.permute.xlu0 %285
      %v288 = vmul.f32 %v278, %v286
      %v289 = vmul.f32 %v280, %v286
      %v290 = vld [vmem:[%s3] sm:$0xf]
      %292 = vset.pattern.permute.xlu0 0
      %293 = vperm.xlu0 %292, %v290
      %v294 = vpop.permute.xlu0 %293
      %v296 = vadd.f32 %v288, %v294
      %v297 = vadd.f32 %v289, %v294
      %v298 = vmax.f32 %v296, 0.0
      %v299 = vmax.f32 %v297, 0.0
      %v302 = vcombine.low %v298, %v299
      %304 = vst [vmem:[%s197] sm:$0xff] %v302
      %p305 = scmp.lt.s32.totalorder %s15, 1
      %s306 = scalar_select %p305, %s15, 1
      %s307 = smul.addr %s306, 2
      %s308 = smul.addr %s307, 4
      %s309 = scalar_lea.vmem %s4, %s308
      // Predicated region
      $region37: #{stage_forward_pallas.12} parent=35 // pred_check
        %p310 = pneg %p122
      $region38: #{stage_forward_pallas.12} parent=35 // pred_check_branch
        %312 = sbr.rel (%p310) target = $region40
      $region39: #{stage_forward_pallas.12} parent=35 // pred_region
        _
      $region40: #{stage_forward_pallas.12} parent=35 // pred_fallthru
        _
    $region36: #{stage_forward_pallas.12} parent=5 // pred_fallthru
      _
    %p313 = scmp.le.s32.totalorder 2, %s10
    // Predicated region
    $region41: #{stage_forward_pallas.12} parent=5 // pred_check
      %p314 = pneg %p313
    $region42: #{stage_forward_pallas.12} parent=5 // pred_check_branch
      %316 = sbr.rel (%p314) target = $region44
    $region43: #{stage_forward_pallas.12} parent=5 // pred_region
      %s317 = ssub.s32 %s10, 2
      // Predicated region
      $region45: #{stage_forward_pallas.12} parent=43 // pred_check
        %p318 = pneg %p128
      $region46: #{stage_forward_pallas.12} parent=43 // pred_check_branch
        %320 = sbr.rel (%p318) target = $region48
      $region47: #{stage_forward_pallas.12} parent=43 // pred_region
        %p321 = scmp.lt.s32.totalorder %s16, 1
        %s322 = scalar_select %p321, %s16, 1
        %s323 = smul.addr %s322, 2
        %s324 = smul.addr %s323, 4
        %s325 = scalar_lea.vmem %s4, %s324
      $region48: #{stage_forward_pallas.12} parent=43 // pred_fallthru
        _
    $region44: #{stage_forward_pallas.12} parent=5 // pred_fallthru
      _
  $region6: #{stage_forward_pallas.12} parent=0 // loop_footer
    %s14 = sadd.s32 1, %s10
  $region7: #{stage_forward_pallas.12} parent=0 // loop_footer_branch
    %9 = sbr.rel target = $region3
  $region8: #{stage_forward_pallas.12} parent=0 // loop_exit
    _

// kernel: stage_forward_pallas.13
$region0: #{stage_forward_pallas.13}
  #allocation0 [shape = 'u32[]', space=smem, size = 0x4, offset = 0x4, fixed_abs, tag = 'smem constant byte address 0x4 - core index']
  #allocation1 [shape = 'u32[144,128]{1,0:T(1,128)}', space=vmem, size = 0x12000, scoped, tag = 'internal scratch']
  %s0 = inlined_call_operand.vmem [shape: f32[2,4,16,16], index: 0, kind: input, shape index: {}]
  %s1 = inlined_call_operand.vmem [shape: f32[4,1,9], index: 1, kind: input, shape index: {}]
  %s2 = inlined_call_operand.vmem [shape: f32[4,1,1], index: 2, kind: input, shape index: {}]
  %s3 = inlined_call_operand.vmem [shape: f32[4,1,1], index: 3, kind: input, shape index: {}]
  %s4 = inlined_call_operand.vmem [shape: f32[2,4,16,16], index: 4, kind: output, shape index: {}]
  %s5 = sld [smem:[#allocation0]]
  $region49: #{stage_forward_pallas.13} parent=0
    _
  %s7 = ssub.s32 1, %s5
  %s8 = scalar_select 0, %s7, %s5
  loop: start=0, step=1, limit=4
  $region2: #{stage_forward_pallas.13} parent=0 // loop_pre_header
    _
  $region3: #{stage_forward_pallas.13} parent=0 // loop_header
    %s10 = sphi 0, %s14
    %p11 = scmp.ge.s32.totalorder %s10, 4
    %s20 = sphi 0, %s22
    %s23 = sphi 0, %s20
    %s24 = sphi 0, %s23
    %s40 = sphi 0, %s24
    %s44 = sphi 0, %s44
    %s46 = sphi 0, %s44
    %s47 = sphi 0, %s46
    %s61 = sphi 0, %s47
    %s65 = sphi 0, %s65
    %s67 = sphi 0, %s65
    %s68 = sphi 0, %s67
    %s82 = sphi 0, %s68
    %s86 = sphi 0, %s86
    %s88 = sphi 0, %s86
    %s89 = sphi 0, %s88
    %s103 = sphi 0, %s89
    %s109 = sphi 0, %s111
    %s112 = sphi 0, %s109
    %s113 = sphi 0, %s112
    %s129 = sphi 0, %s113
  $region4: #{stage_forward_pallas.13} parent=0 // loop_header_branch
    %13 = sbr.rel (%p11) target = $region8
  $region5: #{stage_forward_pallas.13} parent=0 // loop_body
    %s15 = ssub.s32 %s10, 1
    %s16 = ssub.s32 %s10, 2
    %s17 = sadd.s32 %s10, 1
    %s18 = ssub.s32 %s10, %s17
    %p19 = scmp.eq.s32.totalorder %s18, 0
    %s21 = sadd.s32 %s20, 1
    %s22 = scalar_select %p19, %s20, %s21
    %p25 = pneg %p19
    %p26 = scmp.eq.s32.totalorder %s10, 1
    %p27 = por %p25, %p26
    %p28 = scmp.ne.s32.totalorder %s20, %s23
    %p29 = scmp.eq.s32.totalorder %s10, 0
    %p30 = por %p28, %p29
    %p31 = scmp.ne.s32.totalorder %s20, %s23
    %p32 = scmp.eq.s32.totalorder %s15, 1
    %p33 = por %p31, %p32
    %p34 = scmp.ne.s32.totalorder %s23, %s24
    %p35 = scmp.eq.s32.totalorder %s15, 0
    %p36 = por %p34, %p35
    %p37 = scmp.ne.s32.totalorder %s23, %s24
    %p38 = scmp.eq.s32.totalorder %s16, 1
    %p39 = por %p37, %p38
    %p41 = scmp.ne.s32.totalorder %s24, %s40
    %p42 = scmp.eq.s32.totalorder %s16, 0
    %p43 = por %p41, %p42
    %s45 = sadd.s32 %s44, 1
    %p48 = scmp.eq.s32.totalorder %s10, 1
    %p49 = scmp.ne.s32.totalorder %s44, %s46
    %p50 = scmp.eq.s32.totalorder %s10, 0
    %p51 = por %p49, %p50
    %p52 = scmp.ne.s32.totalorder %s44, %s46
    %p53 = scmp.eq.s32.totalorder %s15, 1
    %p54 = por %p52, %p53
    %p55 = scmp.ne.s32.totalorder %s46, %s47
    %p56 = scmp.eq.s32.totalorder %s15, 0
    %p57 = por %p55, %p56
    %p58 = scmp.ne.s32.totalorder %s46, %s47
    %p59 = scmp.eq.s32.totalorder %s16, 1
    %p60 = por %p58, %p59
    %p62 = scmp.ne.s32.totalorder %s47, %s61
    %p63 = scmp.eq.s32.totalorder %s16, 0
    %p64 = por %p62, %p63
    %s66 = sadd.s32 %s65, 1
    %p69 = scmp.eq.s32.totalorder %s10, 1
    %p70 = scmp.ne.s32.totalorder %s65, %s67
    %p71 = scmp.eq.s32.totalorder %s10, 0
    %p72 = por %p70, %p71
    %p73 = scmp.ne.s32.totalorder %s65, %s67
    %p74 = scmp.eq.s32.totalorder %s15, 1
    %p75 = por %p73, %p74
    %p76 = scmp.ne.s32.totalorder %s67, %s68
    %p77 = scmp.eq.s32.totalorder %s15, 0
    %p78 = por %p76, %p77
    %p79 = scmp.ne.s32.totalorder %s67, %s68
    %p80 = scmp.eq.s32.totalorder %s16, 1
    %p81 = por %p79, %p80
    %p83 = scmp.ne.s32.totalorder %s68, %s82
    %p84 = scmp.eq.s32.totalorder %s16, 0
    %p85 = por %p83, %p84
    %s87 = sadd.s32 %s86, 1
    %p90 = scmp.eq.s32.totalorder %s10, 1
    %p91 = scmp.ne.s32.totalorder %s86, %s88
    %p92 = scmp.eq.s32.totalorder %s10, 0
    %p93 = por %p91, %p92
    %p94 = scmp.ne.s32.totalorder %s86, %s88
    %p95 = scmp.eq.s32.totalorder %s15, 1
    %p96 = por %p94, %p95
    %p97 = scmp.ne.s32.totalorder %s88, %s89
    %p98 = scmp.eq.s32.totalorder %s15, 0
    %p99 = por %p97, %p98
    %p100 = scmp.ne.s32.totalorder %s88, %s89
    %p101 = scmp.eq.s32.totalorder %s16, 1
    %p102 = por %p100, %p101
    %p104 = scmp.ne.s32.totalorder %s89, %s103
    %p105 = scmp.eq.s32.totalorder %s16, 0
    %p106 = por %p104, %p105
    %s107 = ssub.s32 %s10, %s17
    %p108 = scmp.eq.s32.totalorder %s107, 0
    %s110 = sadd.s32 %s109, 1
    %s111 = scalar_select %p108, %s109, %s110
    %p114 = pneg %p108
    %p115 = scmp.eq.s32.totalorder %s10, 1
    %p116 = por %p114, %p115
    %p117 = scmp.ne.s32.totalorder %s109, %s112
    %p118 = scmp.eq.s32.totalorder %s10, 0
    %p119 = por %p117, %p118
    %p120 = scmp.ne.s32.totalorder %s109, %s112
    %p121 = scmp.eq.s32.totalorder %s15, 1
    %p122 = por %p120, %p121
    %p123 = scmp.ne.s32.totalorder %s112, %s113
    %p124 = scmp.eq.s32.totalorder %s15, 0
    %p125 = por %p123, %p124
    %p126 = scmp.ne.s32.totalorder %s112, %s113
    %p127 = scmp.eq.s32.totalorder %s16, 1
    %p128 = por %p126, %p127
    %p130 = scmp.ne.s32.totalorder %s113, %s129
    %p131 = scmp.eq.s32.totalorder %s16, 0
    %p132 = por %p130, %p131
    %p133 = scmp.le.s32.totalorder 1, %s10
    %p134 = scmp.lt.s32.totalorder %s10, 3
    %p135 = pnand %p133, %p134
    %p136 = pneg %p135
    // Predicated region
    $region9: #{stage_forward_pallas.13} parent=5 // pred_check
      _
    $region10: #{stage_forward_pallas.13} parent=5 // pred_check_branch
      %138 = sbr.rel (%p135) target = $region12
    $region11: #{stage_forward_pallas.13} parent=5 // pred_region
      %s139 = ssub.s32 %s10, 1
      // Predicated region
      $region13: #{stage_forward_pallas.13} parent=11 // pred_check
        %p140 = pneg %p57
      $region14: #{stage_forward_pallas.13} parent=11 // pred_check_branch
        %142 = sbr.rel (%p140) target = $region16
      $region15: #{stage_forward_pallas.13} parent=11 // pred_region
        _
      $region16: #{stage_forward_pallas.13} parent=11 // pred_fallthru
        _
      // Predicated region
      $region17: #{stage_forward_pallas.13} parent=11 // pred_check
        %p143 = pneg %p78
      $region18: #{stage_forward_pallas.13} parent=11 // pred_check_branch
        %145 = sbr.rel (%p143) target = $region20
      $region19: #{stage_forward_pallas.13} parent=11 // pred_region
        _
      $region20: #{stage_forward_pallas.13} parent=11 // pred_fallthru
        _
      // Predicated region
      $region21: #{stage_forward_pallas.13} parent=11 // pred_check
        %p146 = pneg %p99
      $region22: #{stage_forward_pallas.13} parent=11 // pred_check_branch
        %148 = sbr.rel (%p146) target = $region24
      $region23: #{stage_forward_pallas.13} parent=11 // pred_region
        _
      $region24: #{stage_forward_pallas.13} parent=11 // pred_fallthru
        _
    $region12: #{stage_forward_pallas.13} parent=5 // pred_fallthru
      _
    %p149 = scmp.lt.s32.totalorder %s10, 2
    // Predicated region
    $region25: #{stage_forward_pallas.13} parent=5 // pred_check
      %p150 = pneg %p149
    $region26: #{stage_forward_pallas.13} parent=5 // pred_check_branch
      %152 = sbr.rel (%p150) target = $region28
    $region27: #{stage_forward_pallas.13} parent=5 // pred_region
      // Predicated region
      $region29: #{stage_forward_pallas.13} parent=27 // pred_check
        %p153 = pneg %p30
      $region30: #{stage_forward_pallas.13} parent=27 // pred_check_branch
        %155 = sbr.rel (%p153) target = $region32
      $region31: #{stage_forward_pallas.13} parent=27 // pred_region
        %p156 = scmp.lt.s32.totalorder %s10, 1
        %s157 = scalar_select %p156, %s10, 1
        %s158 = smul.addr %s157, 8
        %s159 = smul.addr %s158, 8
        %s160 = scalar_lea.vmem %s0, %s159
      $region32: #{stage_forward_pallas.13} parent=27 // pred_fallthru
        _
    $region28: #{stage_forward_pallas.13} parent=5 // pred_fallthru
      _
    %p161 = scmp.le.s32.totalorder 1, %s10
    %p162 = scmp.lt.s32.totalorder %s10, 3
    %p163 = pnand %p161, %p162
    %p164 = pneg %p163
    // Predicated region
    $region33: #{stage_forward_pallas.13} parent=5 // pred_check
      _
    $region34: #{stage_forward_pallas.13} parent=5 // pred_check_branch
      %166 = sbr.rel (%p163) target = $region36
    $region35: #{stage_forward_pallas.13} parent=5 // pred_region
      %s167 = ssub.s32 %s10, 1
      %p168 = scmp.lt.s32.totalorder %s15, 1
      %s169 = scalar_select %p168, %s15, 1
      %s170 = smul.addr %s169, 8
      %s171 = smul.addr %s170, 8
      %s172 = scalar_lea.vmem %s0, %s171
      %p173 = pneg %p36
      %p174 = pneg %p33
      %p175 = pneg %p57
      %p176 = pneg %p54
      %p177 = pneg %p78
      %p178 = pneg %p75
      %p179 = pneg %p99
      %p180 = pneg %p96
      %p181 = pneg %p125
      %p182 = pneg %p122
      %p183 = scmp.lt.s32.totalorder %s15, 1
      %s184 = scalar_select %p183, %s15, 1
      %s185 = smul.addr %s184, 8
      %s186 = smul.addr %s185, 8
      %s187 = scalar_lea.vmem %s4, %s186
      %p188 = scmp.lt.s32.totalorder %s15, 1
      %s189 = scalar_select %p188, %s15, 1
      %s190 = smul.addr %s189, 8
      %s191 = smul.addr %s190, 8
      %s192 = scalar_lea.vmem %s0, %s191
      %p193 = scmp.lt.s32.totalorder %s15, 1
      %s194 = scalar_select %p193, %s15, 1
      %s195 = smul.addr %s194, 8
      %s196 = smul.addr %s195, 8
      %s197 = scalar_lea.vmem %s4, %s196
      %v198 = vld [vmem:[%s192] sm:$0xff]
      %v199 = vld [vmem:[%s192 + $0x8] sm:$0xff]
      %v200 = vld [vmem:[%s192 + $0x10] sm:$0xff]
      %v201 = vld [vmem:[%s192 + $0x18] sm:$0xff]
      %v202 = vld [vmem:[%s192 + $0x20] sm:$0xff]
      %v203 = vld [vmem:[%s192 + $0x28] sm:$0xff]
      %v204 = vld [vmem:[%s192 + $0x30] sm:$0xff]
      %v205 = vld [vmem:[%s192 + $0x38] sm:$0xff]
      %vm214 = vcmask 1040384
      %v215 = vrot.slane %v198, 7
      %v216 = vrot.slane %v199, 7
      %v217 = vsel %vm214, %v215, %v216
      %v218 = vrot.slane %v200, 7
      %v219 = vrot.slane %v201, 7
      %v220 = vsel %vm214, %v218, %v219
      %v221 = vrot.slane %v202, 7
      %v222 = vrot.slane %v203, 7
      %v223 = vsel %vm214, %v221, %v222
      %v224 = vrot.slane %v204, 7
      %v225 = vrot.slane %v205, 7
      %v226 = vsel %vm214, %v224, %v225
      %v235 = vsel %vm214, 0.0, %v215
      %v236 = vsel %vm214, 0.0, %v218
      %v237 = vsel %vm214, 0.0, %v221
      %v238 = vsel %vm214, 0.0, %v224
      %v239 = vsel %vm214, %v216, 0.0
      %v240 = vsel %vm214, %v219, 0.0
      %v241 = vsel %vm214, %v222, 0.0
      %v242 = vsel %vm214, %v225, 0.0
      %251 = vrot.lane.b32.xlu0 %v235, 1
      %v252 = vpop.permute.xlu0 %251
      %253 = vrot.lane.b32.xlu0 %v217, 1
      %v254 = vpop.permute.xlu0 %253
      %255 = vrot.lane.b32.xlu0 %v239, 1
      %v256 = vpop.permute.xlu0 %255
      %257 = vrot.lane.b32.xlu0 %v236, 1
      %v258 = vpop.permute.xlu0 %257
      %259 = vrot.lane.b32.xlu0 %v220, 1
      %v260 = vpop.permute.xlu0 %259
      %261 = vrot.lane.b32.xlu0 %v240, 1
      %v262 = vpop.permute.xlu0 %261
      %263 = vrot.lane.b32.xlu0 %v237, 1
      %v264 = vpop.permute.xlu0 %263
      %265 = vrot.lane.b32.xlu0 %v223, 1
      %v266 = vpop.permute.xlu0 %265
      %267 = vrot.lane.b32.xlu0 %v241, 1
      %v268 = vpop.permute.xlu0 %267
      %269 = vrot.lane.b32.xlu0 %v238, 1
      %v270 = vpop.permute.xlu0 %269
      %271 = vrot.lane.b32.xlu0 %v226, 1
      %v272 = vpop.permute.xlu0 %271
      %273 = vrot.lane.b32.xlu0 %v242, 1
      %v274 = vpop.permute.xlu0 %273
      %vm287 = vcmask 7168
      %v288 = vsel %vm287, 0.0, %v252
      %v289 = vsel %vm287, 0.0, %v254
      %v290 = vsel %vm287, 0.0, %v256
      %v291 = vsel %vm287, 0.0, %v258
      %v292 = vsel %vm287, 0.0, %v260
      %v293 = vsel %vm287, 0.0, %v262
      %v294 = vsel %vm287, 0.0, %v264
      %v295 = vsel %vm287, 0.0, %v266
      %v296 = vsel %vm287, 0.0, %v268
      %v297 = vsel %vm287, 0.0, %v270
      %v298 = vsel %vm287, 0.0, %v272
      %v299 = vsel %vm287, 0.0, %v274
      %vm300 = vcmask 138240
      %v301 = vsel %vm300, %v288, 0.0
      %v302 = vsel %vm300, %v289, 0.0
      %v303 = vsel %vm300, %v290, 0.0
      %v304 = vsel %vm300, %v291, 0.0
      %v305 = vsel %vm300, %v292, 0.0
      %v306 = vsel %vm300, %v293, 0.0
      %v307 = vsel %vm300, %v294, 0.0
      %v308 = vsel %vm300, %v295, 0.0
      %v309 = vsel %vm300, %v296, 0.0
      %v310 = vsel %vm300, %v297, 0.0
      %v311 = vsel %vm300, %v298, 0.0
      %v312 = vsel %vm300, %v299, 0.0
      %v313 = vld [vmem:[%s1] sm:$0x1]
      %v314 = vld [vmem:[%s1 + $0x1] sm:$0x1]
      %v315 = vld [vmem:[%s1 + $0x2] sm:$0x1]
      %v316 = vld [vmem:[%s1 + $0x3] sm:$0x1]
      %v321 = vlaneseq
      %v322 = vshrl.u32 %v321, 7
      %v323 = vsub.s32 0, %v322
      %v324 = vrot.slane %v313, %v323
      %v325 = vlaneseq
      %v326 = vshrl.u32 %v325, 7
      %v327 = vsub.s32 0, %v326
      %v328 = vrot.slane %v314, %v327
      %v329 = vlaneseq
      %v330 = vshrl.u32 %v329, 7
      %v331 = vsub.s32 0, %v330
      %v332 = vrot.slane %v315, %v331
      %v333 = vlaneseq
      %v334 = vshrl.u32 %v333, 7
      %v335 = vsub.s32 0, %v334
      %v336 = vrot.slane %v316, %v335
      %337 = vset.pattern.permute.xlu0 0
      %338 = vperm.xlu0 %337, %v324
      %v339 = vpop.permute.xlu0 %338
      %341 = vset.pattern.permute.xlu0 0
      %342 = vperm.xlu0 %341, %v328
      %v343 = vpop.permute.xlu0 %342
      %345 = vset.pattern.permute.xlu0 0
      %346 = vperm.xlu0 %345, %v332
      %v347 = vpop.permute.xlu0 %346
      %349 = vset.pattern.permute.xlu0 0
      %350 = vperm.xlu0 %349, %v336
      %v351 = vpop.permute.xlu0 %350
      %v353 = vmul.f32 %v339, %v301
      %v354 = vmul.f32 %v339, %v302
      %v355 = vmul.f32 %v343, %v304
      %v356 = vmul.f32 %v343, %v305
      %v357 = vmul.f32 %v347, %v307
      %v358 = vmul.f32 %v347, %v308
      %v359 = vmul.f32 %v351, %v310
      %v360 = vmul.f32 %v351, %v311
      %v361 = vadd.f32 %v353, 0.0
      %v362 = vadd.f32 %v354, 0.0
      %v363 = vadd.f32 %v355, 0.0
      %v364 = vadd.f32 %v356, 0.0
      %v365 = vadd.f32 %v357, 0.0
      %v366 = vadd.f32 %v358, 0.0
      %v367 = vadd.f32 %v359, 0.0
      %v368 = vadd.f32 %v360, 0.0
      %369 = vset.pattern.permute.xlu0 1
      %370 = vperm.xlu0 %369, %v324
      %v371 = vpop.permute.xlu0 %370
      %373 = vset.pattern.permute.xlu0 1
      %374 = vperm.xlu0 %373, %v328
      %v375 = vpop.permute.xlu0 %374
      %377 = vset.pattern.permute.xlu0 1
      %378 = vperm.xlu0 %377, %v332
      %v379 = vpop.permute.xlu0 %378
      %381 = vset.pattern.permute.xlu0 1
      %382 = vperm.xlu0 %381, %v336
      %v383 = vpop.permute.xlu0 %382
      %v385 = vmul.f32 %v371, %v301
      %v386 = vmul.f32 %v371, %v302
      %v387 = vmul.f32 %v375, %v304
      %v388 = vmul.f32 %v375, %v305
      %v389 = vmul.f32 %v379, %v307
      %v390 = vmul.f32 %v379, %v308
      %v391 = vmul.f32 %v383, %v310
      %v392 = vmul.f32 %v383, %v311
      %401 = vrot.lane.b32.xlu0 %v385, 127
      %v402 = vpop.permute.xlu0 %401
      %403 = vrot.lane.b32.xlu0 %v386, 127
      %v404 = vpop.permute.xlu0 %403
      %405 = vrot.lane.b32.xlu0 %v387, 127
      %v406 = vpop.permute.xlu0 %405
      %407 = vrot.lane.b32.xlu0 %v388, 127
      %v408 = vpop.permute.xlu0 %407
      %409 = vrot.lane.b32.xlu0 %v389, 127
      %v410 = vpop.permute.xlu0 %409
      %411 = vrot.lane.b32.xlu0 %v390, 127
      %v412 = vpop.permute.xlu0 %411
      %413 = vrot.lane.b32.xlu0 %v391, 127
      %v414 = vpop.permute.xlu0 %413
      %415 = vrot.lane.b32.xlu0 %v392, 127
      %v416 = vpop.permute.xlu0 %415
      %v425 = vadd.f32 %v361, %v402
      %v426 = vadd.f32 %v362, %v404
      %v427 = vadd.f32 %v363, %v406
      %v428 = vadd.f32 %v364, %v408
      %v429 = vadd.f32 %v365, %v410
      %v430 = vadd.f32 %v366, %v412
      %v431 = vadd.f32 %v367, %v414
      %v432 = vadd.f32 %v368, %v416
      %433 = vset.pattern.permute.xlu0 2
      %434 = vperm.xlu0 %433, %v324
      %v435 = vpop.permute.xlu0 %434
      %437 = vset.pattern.permute.xlu0 2
      %438 = vperm.xlu0 %437, %v328
      %v439 = vpop.permute.xlu0 %438
      %441 = vset.pattern.permute.xlu0 2
      %442 = vperm.xlu0 %441, %v332
      %v443 = vpop.permute.xlu0 %442
      %445 = vset.pattern.permute.xlu0 2
      %446 = vperm.xlu0 %445, %v336
      %v447 = vpop.permute.xlu0 %446
      %v449 = vmul.f32 %v435, %v301
      %v450 = vmul.f32 %v435, %v302
      %v451 = vmul.f32 %v439, %v304
      %v452 = vmul.f32 %v439, %v305
      %v453 = vmul.f32 %v443, %v307
      %v454 = vmul.f32 %v443, %v308
      %v455 = vmul.f32 %v447, %v310
      %v456 = vmul.f32 %v447, %v311
      %465 = vrot.lane.b32.xlu0 %v449, 126
      %v466 = vpop.permute.xlu0 %465
      %467 = vrot.lane.b32.xlu0 %v450, 126
      %v468 = vpop.permute.xlu0 %467
      %469 = vrot.lane.b32.xlu0 %v451, 126
      %v470 = vpop.permute.xlu0 %469
      %471 = vrot.lane.b32.xlu0 %v452, 126
      %v472 = vpop.permute.xlu0 %471
      %473 = vrot.lane.b32.xlu0 %v453, 126
      %v474 = vpop.permute.xlu0 %473
      %475 = vrot.lane.b32.xlu0 %v454, 126
      %v476 = vpop.permute.xlu0 %475
      %477 = vrot.lane.b32.xlu0 %v455, 126
      %v478 = vpop.permute.xlu0 %477
      %479 = vrot.lane.b32.xlu0 %v456, 126
      %v480 = vpop.permute.xlu0 %479
      %v489 = vadd.f32 %v425, %v466
      %v490 = vadd.f32 %v426, %v468
      %v491 = vadd.f32 %v427, %v470
      %v492 = vadd.f32 %v428, %v472
      %v493 = vadd.f32 %v429, %v474
      %v494 = vadd.f32 %v430, %v476
      %v495 = vadd.f32 %v431, %v478
      %v496 = vadd.f32 %v432, %v480
      %497 = vset.pattern.permute.xlu0 3
      %498 = vperm.xlu0 %497, %v324
      %v499 = vpop.permute.xlu0 %498
      %501 = vset.pattern.permute.xlu0 3
      %502 = vperm.xlu0 %501, %v328
      %v503 = vpop.permute.xlu0 %502
      %505 = vset.pattern.permute.xlu0 3
      %506 = vperm.xlu0 %505, %v332
      %v507 = vpop.permute.xlu0 %506
      %509 = vset.pattern.permute.xlu0 3
      %510 = vperm.xlu0 %509, %v336
      %v511 = vpop.permute.xlu0 %510
      %v513 = vmul.f32 %v499, %v301
      %v514 = vmul.f32 %v499, %v302
      %v515 = vmul.f32 %v499, %v303
      %v516 = vmul.f32 %v503, %v304
      %v517 = vmul.f32 %v503, %v305
      %v518 = vmul.f32 %v503, %v306
      %v519 = vmul.f32 %v507, %v307
      %v520 = vmul.f32 %v507, %v308
      %v521 = vmul.f32 %v507, %v309
      %v522 = vmul.f32 %v511, %v310
      %v523 = vmul.f32 %v511, %v311
      %v524 = vmul.f32 %v511, %v312
      %vm537 = vcmask 1046528
      %v538 = vrot.slane %v513, 1
      %v539 = vrot.slane %v514, 1
      %v540 = vsel %vm537, %v538, %v539
      %v541 = vrot.slane %v515, 1
      %v542 = vsel %vm537, %v539, %v541
      %v543 = vrot.slane %v516, 1
      %v544 = vrot.slane %v517, 1
      %v545 = vsel %vm537, %v543, %v544
      %v546 = vrot.slane %v518, 1
      %v547 = vsel %vm537, %v544, %v546
      %v548 = vrot.slane %v519, 1
      %v549 = vrot.slane %v520, 1
      %v550 = vsel %vm537, %v548, %v549
      %v551 = vrot.slane %v521, 1
      %v552 = vsel %vm537, %v549, %v551
      %v553 = vrot.slane %v522, 1
      %v554 = vrot.slane %v523, 1
      %v555 = vsel %vm537, %v553, %v554
      %v556 = vrot.slane %v524, 1
      %v557 = vsel %vm537, %v554, %v556
      %v566 = vadd.f32 %v489, %v540
      %v567 = vadd.f32 %v490, %v542
      %v568 = vadd.f32 %v491, %v545
      %v569 = vadd.f32 %v492, %v547
      %v570 = vadd.f32 %v493, %v550
      %v571 = vadd.f32 %v494, %v552
      %v572 = vadd.f32 %v495, %v555
      %v573 = vadd.f32 %v496, %v557
      %574 = vset.pattern.permute.xlu0 4
      %575 = vperm.xlu0 %574, %v324
      %v576 = vpop.permute.xlu0 %575
      %578 = vset.pattern.permute.xlu0 4
      %579 = vperm.xlu0 %578, %v328
      %v580 = vpop.permute.xlu0 %579
      %582 = vset.pattern.permute.xlu0 4
      %583 = vperm.xlu0 %582, %v332
      %v584 = vpop.permute.xlu0 %583
      %586 = vset.pattern.permute.xlu0 4
      %587 = vperm.xlu0 %586, %v336
      %v588 = vpop.permute.xlu0 %587
      %v590 = vmul.f32 %v576, %v301
      %v591 = vmul.f32 %v576, %v302
      %v592 = vmul.f32 %v576, %v303
      %v593 = vmul.f32 %v580, %v304
      %v594 = vmul.f32 %v580, %v305
      %v595 = vmul.f32 %v580, %v306
      %v596 = vmul.f32 %v584, %v307
      %v597 = vmul.f32 %v584, %v308
      %v598 = vmul.f32 %v584, %v309
      %v599 = vmul.f32 %v588, %v310
      %v600 = vmul.f32 %v588, %v311
      %v601 = vmul.f32 %v588, %v312
      %v614 = vrot.slane %v590, 1
      %v615 = vrot.slane %v591, 1
      %v616 = vsel %vm537, %v614, %v615
      %v617 = vrot.slane %v592, 1
      %v618 = vsel %vm537, %v615, %v617
      %v619 = vrot.slane %v593, 1
      %v620 = vrot.slane %v594, 1
      %v621 = vsel %vm537, %v619, %v620
      %v622 = vrot.slane %v595, 1
      %v623 = vsel %vm537, %v620, %v622
      %v624 = vrot.slane %v596, 1
      %v625 = vrot.slane %v597, 1
      %v626 = vsel %vm537, %v624, %v625
      %v627 = vrot.slane %v598, 1
      %v628 = vsel %vm537, %v625, %v627
      %v629 = vrot.slane %v599, 1
      %v630 = vrot.slane %v600, 1
      %v631 = vsel %vm537, %v629, %v630
      %v632 = vrot.slane %v601, 1
      %v633 = vsel %vm537, %v630, %v632
      %634 = vrot.lane.b32.xlu0 %v616, 127
      %v635 = vpop.permute.xlu0 %634
      %636 = vrot.lane.b32.xlu0 %v618, 127
      %v637 = vpop.permute.xlu0 %636
      %638 = vrot.lane.b32.xlu0 %v621, 127
      %v639 = vpop.permute.xlu0 %638
      %640 = vrot.lane.b32.xlu0 %v623, 127
      %v641 = vpop.permute.xlu0 %640
      %642 = vrot.lane.b32.xlu0 %v626, 127
      %v643 = vpop.permute.xlu0 %642
      %644 = vrot.lane.b32.xlu0 %v628, 127
      %v645 = vpop.permute.xlu0 %644
      %646 = vrot.lane.b32.xlu0 %v631, 127
      %v647 = vpop.permute.xlu0 %646
      %648 = vrot.lane.b32.xlu0 %v633, 127
      %v649 = vpop.permute.xlu0 %648
      %v658 = vadd.f32 %v566, %v635
      %v659 = vadd.f32 %v567, %v637
      %v660 = vadd.f32 %v568, %v639
      %v661 = vadd.f32 %v569, %v641
      %v662 = vadd.f32 %v570, %v643
      %v663 = vadd.f32 %v571, %v645
      %v664 = vadd.f32 %v572, %v647
      %v665 = vadd.f32 %v573, %v649
      %666 = vset.pattern.permute.xlu0 5
      %667 = vperm.xlu0 %666, %v324
      %v668 = vpop.permute.xlu0 %667
      %670 = vset.pattern.permute.xlu0 5
      %671 = vperm.xlu0 %670, %v328
      %v672 = vpop.permute.xlu0 %671
      %674 = vset.pattern.permute.xlu0 5
      %675 = vperm.xlu0 %674, %v332
      %v676 = vpop.permute.xlu0 %675
      %678 = vset.pattern.permute.xlu0 5
      %679 = vperm.xlu0 %678, %v336
      %v680 = vpop.permute.xlu0 %679
      %v682 = vmul.f32 %v668, %v301
      %v683 = vmul.f32 %v668, %v302
      %v684 = vmul.f32 %v668, %v303
      %v685 = vmul.f32 %v672, %v304
      %v686 = vmul.f32 %v672, %v305
      %v687 = vmul.f32 %v672, %v306
      %v688 = vmul.f32 %v676, %v307
      %v689 = vmul.f32 %v676, %v308
      %v690 = vmul.f32 %v676, %v309
      %v691 = vmul.f32 %v680, %v310
      %v692 = vmul.f32 %v680, %v311
      %v693 = vmul.f32 %v680, %v312
      %v706 = vrot.slane %v682, 1
      %v707 = vrot.slane %v683, 1
      %v708 = vsel %vm537, %v706, %v707
      %v709 = vrot.slane %v684, 1
      %v710 = vsel %vm537, %v707, %v709
      %v711 = vrot.slane %v685, 1
      %v712 = vrot.slane %v686, 1
      %v713 = vsel %vm537, %v711, %v712
      %v714 = vrot.slane %v687, 1
      %v715 = vsel %vm537, %v712, %v714
      %v716 = vrot.slane %v688, 1
      %v717 = vrot.slane %v689, 1
      %v718 = vsel %vm537, %v716, %v717
      %v719 = vrot.slane %v690, 1
      %v720 = vsel %vm537, %v717, %v719
      %v721 = vrot.slane %v691, 1
      %v722 = vrot.slane %v692, 1
      %v723 = vsel %vm537, %v721, %v722
      %v724 = vrot.slane %v693, 1
      %v725 = vsel %vm537, %v722, %v724
      %726 = vrot.lane.b32.xlu0 %v708, 126
      %v727 = vpop.permute.xlu0 %726
      %728 = vrot.lane.b32.xlu0 %v710, 126
      %v729 = vpop.permute.xlu0 %728
      %730 = vrot.lane.b32.xlu0 %v713, 126
      %v731 = vpop.permute.xlu0 %730
      %732 = vrot.lane.b32.xlu0 %v715, 126
      %v733 = vpop.permute.xlu0 %732
      %734 = vrot.lane.b32.xlu0 %v718, 126
      %v735 = vpop.permute.xlu0 %734
      %736 = vrot.lane.b32.xlu0 %v720, 126
      %v737 = vpop.permute.xlu0 %736
      %738 = vrot.lane.b32.xlu0 %v723, 126
      %v739 = vpop.permute.xlu0 %738
      %740 = vrot.lane.b32.xlu0 %v725, 126
      %v741 = vpop.permute.xlu0 %740
      %v750 = vadd.f32 %v658, %v727
      %v751 = vadd.f32 %v659, %v729
      %v752 = vadd.f32 %v660, %v731
      %v753 = vadd.f32 %v661, %v733
      %v754 = vadd.f32 %v662, %v735
      %v755 = vadd.f32 %v663, %v737
      %v756 = vadd.f32 %v664, %v739
      %v757 = vadd.f32 %v665, %v741
      %758 = vset.pattern.permute.xlu0 6
      %759 = vperm.xlu0 %758, %v324
      %v760 = vpop.permute.xlu0 %759
      %762 = vset.pattern.permute.xlu0 6
      %763 = vperm.xlu0 %762, %v328
      %v764 = vpop.permute.xlu0 %763
      %766 = vset.pattern.permute.xlu0 6
      %767 = vperm.xlu0 %766, %v332
      %v768 = vpop.permute.xlu0 %767
      %770 = vset.pattern.permute.xlu0 6
      %771 = vperm.xlu0 %770, %v336
      %v772 = vpop.permute.xlu0 %771
      %v774 = vmul.f32 %v760, %v301
      %v775 = vmul.f32 %v760, %v302
      %v776 = vmul.f32 %v760, %v303
      %v777 = vmul.f32 %v764, %v304
      %v778 = vmul.f32 %v764, %v305
      %v779 = vmul.f32 %v764, %v306
      %v780 = vmul.f32 %v768, %v307
      %v781 = vmul.f32 %v768, %v308
      %v782 = vmul.f32 %v768, %v309
      %v783 = vmul.f32 %v772, %v310
      %v784 = vmul.f32 %v772, %v311
      %v785 = vmul.f32 %v772, %v312
      %vm798 = vcmask 1045504
      %v799 = vrot.slane %v774, 2
      %v800 = vrot.slane %v775, 2
      %v801 = vsel %vm798, %v799, %v800
      %v802 = vrot.slane %v776, 2
      %v803 = vsel %vm798, %v800, %v802
      %v804 = vrot.slane %v777, 2
      %v805 = vrot.slane %v778, 2
      %v806 = vsel %vm798, %v804, %v805
      %v807 = vrot.slane %v779, 2
      %v808 = vsel %vm798, %v805, %v807
      %v809 = vrot.slane %v780, 2
      %v810 = vrot.slane %v781, 2
      %v811 = vsel %vm798, %v809, %v810
      %v812 = vrot.slane %v782, 2
      %v813 = vsel %vm798, %v810, %v812
      %v814 = vrot.slane %v783, 2
      %v815 = vrot.slane %v784, 2
      %v816 = vsel %vm798, %v814, %v815
      %v817 = vrot.slane %v785, 2
      %v818 = vsel %vm798, %v815, %v817
      %v827 = vadd.f32 %v750, %v801
      %v828 = vadd.f32 %v751, %v803
      %v829 = vadd.f32 %v752, %v806
      %v830 = vadd.f32 %v753, %v808
      %v831 = vadd.f32 %v754, %v811
      %v832 = vadd.f32 %v755, %v813
      %v833 = vadd.f32 %v756, %v816
      %v834 = vadd.f32 %v757, %v818
      %835 = vset.pattern.permute.xlu0 7
      %836 = vperm.xlu0 %835, %v324
      %v837 = vpop.permute.xlu0 %836
      %839 = vset.pattern.permute.xlu0 7
      %840 = vperm.xlu0 %839, %v328
      %v841 = vpop.permute.xlu0 %840
      %843 = vset.pattern.permute.xlu0 7
      %844 = vperm.xlu0 %843, %v332
      %v845 = vpop.permute.xlu0 %844
      %847 = vset.pattern.permute.xlu0 7
      %848 = vperm.xlu0 %847, %v336
      %v849 = vpop.permute.xlu0 %848
      %v851 = vmul.f32 %v837, %v301
      %v852 = vmul.f32 %v837, %v302
      %v853 = vmul.f32 %v837, %v303
      %v854 = vmul.f32 %v841, %v304
      %v855 = vmul.f32 %v841, %v305
      %v856 = vmul.f32 %v841, %v306
      %v857 = vmul.f32 %v845, %v307
      %v858 = vmul.f32 %v845, %v308
      %v859 = vmul.f32 %v845, %v309
      %v860 = vmul.f32 %v849, %v310
      %v861 = vmul.f32 %v849, %v311
      %v862 = vmul.f32 %v849, %v312
      %v875 = vrot.slane %v851, 2
      %v876 = vrot.slane %v852, 2
      %v877 = vsel %vm798, %v875, %v876
      %v878 = vrot.slane %v853, 2
      %v879 = vsel %vm798, %v876, %v878
      %v880 = vrot.slane %v854, 2
      %v881 = vrot.slane %v855, 2
      %v882 = vsel %vm798, %v880, %v881
      %v883 = vrot.slane %v856, 2
      %v884 = vsel %vm798, %v881, %v883
      %v885 = vrot.slane %v857, 2
      %v886 = vrot.slane %v858, 2
      %v887 = vsel %vm798, %v885, %v886
      %v888 = vrot.slane %v859, 2
      %v889 = vsel %vm798, %v886, %v888
      %v890 = vrot.slane %v860, 2
      %v891 = vrot.slane %v861, 2
      %v892 = vsel %vm798, %v890, %v891
      %v893 = vrot.slane %v862, 2
      %v894 = vsel %vm798, %v891, %v893
      %895 = vrot.lane.b32.xlu0 %v877, 127
      %v896 = vpop.permute.xlu0 %895
      %897 = vrot.lane.b32.xlu0 %v879, 127
      %v898 = vpop.permute.xlu0 %897
      %899 = vrot.lane.b32.xlu0 %v882, 127
      %v900 = vpop.permute.xlu0 %899
      %901 = vrot.lane.b32.xlu0 %v884, 127
      %v902 = vpop.permute.xlu0 %901
      %903 = vrot.lane.b32.xlu0 %v887, 127
      %v904 = vpop.permute.xlu0 %903
      %905 = vrot.lane.b32.xlu0 %v889, 127
      %v906 = vpop.permute.xlu0 %905
      %907 = vrot.lane.b32.xlu0 %v892, 127
      %v908 = vpop.permute.xlu0 %907
      %909 = vrot.lane.b32.xlu0 %v894, 127
      %v910 = vpop.permute.xlu0 %909
      %v919 = vadd.f32 %v827, %v896
      %v920 = vadd.f32 %v828, %v898
      %v921 = vadd.f32 %v829, %v900
      %v922 = vadd.f32 %v830, %v902
      %v923 = vadd.f32 %v831, %v904
      %v924 = vadd.f32 %v832, %v906
      %v925 = vadd.f32 %v833, %v908
      %v926 = vadd.f32 %v834, %v910
      %927 = vset.pattern.permute.xlu0 8
      %928 = vperm.xlu0 %927, %v324
      %v929 = vpop.permute.xlu0 %928
      %931 = vset.pattern.permute.xlu0 8
      %932 = vperm.xlu0 %931, %v328
      %v933 = vpop.permute.xlu0 %932
      %935 = vset.pattern.permute.xlu0 8
      %936 = vperm.xlu0 %935, %v332
      %v937 = vpop.permute.xlu0 %936
      %939 = vset.pattern.permute.xlu0 8
      %940 = vperm.xlu0 %939, %v336
      %v941 = vpop.permute.xlu0 %940
      %v943 = vmul.f32 %v929, %v301
      %v944 = vmul.f32 %v929, %v302
      %v945 = vmul.f32 %v929, %v303
      %v946 = vmul.f32 %v933, %v304
      %v947 = vmul.f32 %v933, %v305
      %v948 = vmul.f32 %v933, %v306
      %v949 = vmul.f32 %v937, %v307
      %v950 = vmul.f32 %v937, %v308
      %v951 = vmul.f32 %v937, %v309
      %v952 = vmul.f32 %v941, %v310
      %v953 = vmul.f32 %v941, %v311
      %v954 = vmul.f32 %v941, %v312
      %v967 = vrot.slane %v943, 2
      %v968 = vrot.slane %v944, 2
      %v969 = vsel %vm798, %v967, %v968
      %v970 = vrot.slane %v945, 2
      %v971 = vsel %vm798, %v968, %v970
      %v972 = vrot.slane %v946, 2
      %v973 = vrot.slane %v947, 2
      %v974 = vsel %vm798, %v972, %v973
      %v975 = vrot.slane %v948, 2
      %v976 = vsel %vm798, %v973, %v975
      %v977 = vrot.slane %v949, 2
      %v978 = vrot.slane %v950, 2
      %v979 = vsel %vm798, %v977, %v978
      %v980 = vrot.slane %v951, 2
      %v981 = vsel %vm798, %v978, %v980
      %v982 = vrot.slane %v952, 2
      %v983 = vrot.slane %v953, 2
      %v984 = vsel %vm798, %v982, %v983
      %v985 = vrot.slane %v954, 2
      %v986 = vsel %vm798, %v983, %v985
      %987 = vrot.lane.b32.xlu0 %v969, 126
      %v988 = vpop.permute.xlu0 %987
      %989 = vrot.lane.b32.xlu0 %v971, 126
      %v990 = vpop.permute.xlu0 %989
      %991 = vrot.lane.b32.xlu0 %v974, 126
      %v992 = vpop.permute.xlu0 %991
      %993 = vrot.lane.b32.xlu0 %v976, 126
      %v994 = vpop.permute.xlu0 %993
      %995 = vrot.lane.b32.xlu0 %v979, 126
      %v996 = vpop.permute.xlu0 %995
      %997 = vrot.lane.b32.xlu0 %v981, 126
      %v998 = vpop.permute.xlu0 %997
      %999 = vrot.lane.b32.xlu0 %v984, 126
      %v1000 = vpop.permute.xlu0 %999
      %1001 = vrot.lane.b32.xlu0 %v986, 126
      %v1002 = vpop.permute.xlu0 %1001
      %v1011 = vadd.f32 %v919, %v988
      %v1012 = vadd.f32 %v920, %v990
      %v1013 = vadd.f32 %v921, %v992
      %v1014 = vadd.f32 %v922, %v994
      %v1015 = vadd.f32 %v923, %v996
      %v1016 = vadd.f32 %v924, %v998
      %v1017 = vadd.f32 %v925, %v1000
      %v1018 = vadd.f32 %v926, %v1002
      %v1019 = vld [vmem:[%s2] sm:$0x1]
      %v1020 = vld [vmem:[%s2 + $0x1] sm:$0x1]
      %v1021 = vld [vmem:[%s2 + $0x2] sm:$0x1]
      %v1022 = vld [vmem:[%s2 + $0x3] sm:$0x1]
      %v1027 = vlaneseq
      %v1028 = vshrl.u32 %v1027, 7
      %v1029 = vsub.s32 0, %v1028
      %v1030 = vrot.slane %v1019, %v1029
      %v1031 = vlaneseq
      %v1032 = vshrl.u32 %v1031, 7
      %v1033 = vsub.s32 0, %v1032
      %v1034 = vrot.slane %v1020, %v1033
      %v1035 = vlaneseq
      %v1036 = vshrl.u32 %v1035, 7
      %v1037 = vsub.s32 0, %v1036
      %v1038 = vrot.slane %v1021, %v1037
      %v1039 = vlaneseq
      %v1040 = vshrl.u32 %v1039, 7
      %v1041 = vsub.s32 0, %v1040
      %v1042 = vrot.slane %v1022, %v1041
      %1043 = vset.pattern.permute.xlu0 0
      %1044 = vperm.xlu0 %1043, %v1030
      %v1045 = vpop.permute.xlu0 %1044
      %1047 = vset.pattern.permute.xlu0 0
      %1048 = vperm.xlu0 %1047, %v1034
      %v1049 = vpop.permute.xlu0 %1048
      %1051 = vset.pattern.permute.xlu0 0
      %1052 = vperm.xlu0 %1051, %v1038
      %v1053 = vpop.permute.xlu0 %1052
      %1055 = vset.pattern.permute.xlu0 0
      %1056 = vperm.xlu0 %1055, %v1042
      %v1057 = vpop.permute.xlu0 %1056
      %v1059 = vmul.f32 %v1011, %v1045
      %v1060 = vmul.f32 %v1012, %v1045
      %v1061 = vmul.f32 %v1013, %v1049
      %v1062 = vmul.f32 %v1014, %v1049
      %v1063 = vmul.f32 %v1015, %v1053
      %v1064 = vmul.f32 %v1016, %v1053
      %v1065 = vmul.f32 %v1017, %v1057
      %v1066 = vmul.f32 %v1018, %v1057
      %v1067 = vld [vmem:[%s3] sm:$0x1]
      %v1068 = vld [vmem:[%s3 + $0x1] sm:$0x1]
      %v1069 = vld [vmem:[%s3 + $0x2] sm:$0x1]
      %v1070 = vld [vmem:[%s3 + $0x3] sm:$0x1]
      %v1075 = vlaneseq
      %v1076 = vshrl.u32 %v1075, 7
      %v1077 = vsub.s32 0, %v1076
      %v1078 = vrot.slane %v1067, %v1077
      %v1079 = vlaneseq
      %v1080 = vshrl.u32 %v1079, 7
      %v1081 = vsub.s32 0, %v1080
      %v1082 = vrot.slane %v1068, %v1081
      %v1083 = vlaneseq
      %v1084 = vshrl.u32 %v1083, 7
      %v1085 = vsub.s32 0, %v1084
      %v1086 = vrot.slane %v1069, %v1085
      %v1087 = vlaneseq
      %v1088 = vshrl.u32 %v1087, 7
      %v1089 = vsub.s32 0, %v1088
      %v1090 = vrot.slane %v1070, %v1089
      %1091 = vset.pattern.permute.xlu0 0
      %1092 = vperm.xlu0 %1091, %v1078
      %v1093 = vpop.permute.xlu0 %1092
      %1095 = vset.pattern.permute.xlu0 0
      %1096 = vperm.xlu0 %1095, %v1082
      %v1097 = vpop.permute.xlu0 %1096
      %1099 = vset.pattern.permute.xlu0 0
      %1100 = vperm.xlu0 %1099, %v1086
      %v1101 = vpop.permute.xlu0 %1100
      %1103 = vset.pattern.permute.xlu0 0
      %1104 = vperm.xlu0 %1103, %v1090
      %v1105 = vpop.permute.xlu0 %1104
      %v1107 = vadd.f32 %v1059, %v1093
      %v1108 = vadd.f32 %v1060, %v1093
      %v1109 = vadd.f32 %v1061, %v1097
      %v1110 = vadd.f32 %v1062, %v1097
      %v1111 = vadd.f32 %v1063, %v1101
      %v1112 = vadd.f32 %v1064, %v1101
      %v1113 = vadd.f32 %v1065, %v1105
      %v1114 = vadd.f32 %v1066, %v1105
      %vm1115 = vcmask 130048
      %1116 = vst.msk [vmem:[%s197] sm:$0xff] %vm1115, %v1107
      %1117 = vst.msk [vmem:[%s197 + $0x8] sm:$0xff] %vm1115, %v1108
      %1118 = vst.msk [vmem:[%s197 + $0x10] sm:$0xff] %vm1115, %v1109
      %1119 = vst.msk [vmem:[%s197 + $0x18] sm:$0xff] %vm1115, %v1110
      %1120 = vst.msk [vmem:[%s197 + $0x20] sm:$0xff] %vm1115, %v1111
      %1121 = vst.msk [vmem:[%s197 + $0x28] sm:$0xff] %vm1115, %v1112
      %1122 = vst.msk [vmem:[%s197 + $0x30] sm:$0xff] %vm1115, %v1113
      %1123 = vst.msk [vmem:[%s197 + $0x38] sm:$0xff] %vm1115, %v1114
      %p1124 = scmp.lt.s32.totalorder %s15, 1
      %s1125 = scalar_select %p1124, %s15, 1
      %s1126 = smul.addr %s1125, 8
      %s1127 = smul.addr %s1126, 8
      %s1128 = scalar_lea.vmem %s4, %s1127
      // Predicated region
      $region37: #{stage_forward_pallas.13} parent=35 // pred_check
        %p1129 = pneg %p122
      $region38: #{stage_forward_pallas.13} parent=35 // pred_check_branch
        %1131 = sbr.rel (%p1129) target = $region40
      $region39: #{stage_forward_pallas.13} parent=35 // pred_region
        _
      $region40: #{stage_forward_pallas.13} parent=35 // pred_fallthru
        _
    $region36: #{stage_forward_pallas.13} parent=5 // pred_fallthru
      _
    %p1132 = scmp.le.s32.totalorder 2, %s10
    // Predicated region
    $region41: #{stage_forward_pallas.13} parent=5 // pred_check
      %p1133 = pneg %p1132
    $region42: #{stage_forward_pallas.13} parent=5 // pred_check_branch
      %1135 = sbr.rel (%p1133) target = $region44
    $region43: #{stage_forward_pallas.13} parent=5 // pred_region
      %s1136 = ssub.s32 %s10, 2
      // Predicated region
      $region45: #{stage_forward_pallas.13} parent=43 // pred_check
        %p1137 = pneg %p128
      $region46: #{stage_forward_pallas.13} parent=43 // pred_check_branch
        %1139 = sbr.rel (%p1137) target = $region48
      $region47: #{stage_forward_pallas.13} parent=43 // pred_region
        %p1140 = scmp.lt.s32.totalorder %s16, 1
        %s1141 = scalar_select %p1140, %s16, 1
        %s1142 = smul.addr %s1141, 8
        %s1143 = smul.addr %s1142, 8
        %s1144 = scalar_lea.vmem %s4, %s1143
      $region48: #{stage_forward_pallas.13} parent=43 // pred_fallthru
        _
    $region44: #{stage_forward_pallas.13} parent=5 // pred_fallthru
      _
  $region6: #{stage_forward_pallas.13} parent=0 // loop_footer
    %s14 = sadd.s32 1, %s10
  $region7: #{stage_forward_pallas.13} parent=0 // loop_footer_branch
    %9 = sbr.rel target = $region3
  $region8: #{stage_forward_pallas.13} parent=0 // loop_exit
    _

// kernel: stage_forward_pallas.15
$region0: #{stage_forward_pallas.15}
  #allocation0 [shape = 'u32[]', space=smem, size = 0x4, offset = 0x4, fixed_abs, tag = 'smem constant byte address 0x4 - core index']
  #allocation1 [shape = 'u32[144,128]{1,0:T(1,128)}', space=vmem, size = 0x12000, scoped, tag = 'internal scratch']
  %s0 = inlined_call_operand.vmem [shape: f32[2,4,64], index: 0, kind: input, shape index: {}]
  %s1 = inlined_call_operand.vmem [shape: f32[2,4,64], index: 1, kind: input, shape index: {}]
  %s2 = inlined_call_operand.vmem [shape: f32[2,8,64], index: 2, kind: output, shape index: {}]
  %s3 = sld [smem:[#allocation0]]
  $region41: #{stage_forward_pallas.15} parent=0
    _
  %s5 = ssub.s32 1, %s3
  %s6 = scalar_select 0, %s5, %s3
  loop: start=0, step=1, limit=4
  $region2: #{stage_forward_pallas.15} parent=0 // loop_pre_header
    _
  $region3: #{stage_forward_pallas.15} parent=0 // loop_header
    %s8 = sphi 0, %s12
    %p9 = scmp.ge.s32.totalorder %s8, 4
    %s18 = sphi 0, %s20
    %s21 = sphi 0, %s18
    %s22 = sphi 0, %s21
    %s38 = sphi 0, %s22
    %s44 = sphi 0, %s46
    %s47 = sphi 0, %s44
    %s48 = sphi 0, %s47
    %s64 = sphi 0, %s48
    %s70 = sphi 0, %s72
    %s73 = sphi 0, %s70
    %s74 = sphi 0, %s73
    %s90 = sphi 0, %s74
  $region4: #{stage_forward_pallas.15} parent=0 // loop_header_branch
    %11 = sbr.rel (%p9) target = $region8
  $region5: #{stage_forward_pallas.15} parent=0 // loop_body
    %s13 = ssub.s32 %s8, 1
    %s14 = ssub.s32 %s8, 2
    %s15 = sadd.s32 %s8, 1
    %s16 = ssub.s32 %s8, %s15
    %p17 = scmp.eq.s32.totalorder %s16, 0
    %s19 = sadd.s32 %s18, 1
    %s20 = scalar_select %p17, %s18, %s19
    %p23 = pneg %p17
    %p24 = scmp.eq.s32.totalorder %s8, 1
    %p25 = por %p23, %p24
    %p26 = scmp.ne.s32.totalorder %s18, %s21
    %p27 = scmp.eq.s32.totalorder %s8, 0
    %p28 = por %p26, %p27
    %p29 = scmp.ne.s32.totalorder %s18, %s21
    %p30 = scmp.eq.s32.totalorder %s13, 1
    %p31 = por %p29, %p30
    %p32 = scmp.ne.s32.totalorder %s21, %s22
    %p33 = scmp.eq.s32.totalorder %s13, 0
    %p34 = por %p32, %p33
    %p35 = scmp.ne.s32.totalorder %s21, %s22
    %p36 = scmp.eq.s32.totalorder %s14, 1
    %p37 = por %p35, %p36
    %p39 = scmp.ne.s32.totalorder %s22, %s38
    %p40 = scmp.eq.s32.totalorder %s14, 0
    %p41 = por %p39, %p40
    %s42 = ssub.s32 %s8, %s15
    %p43 = scmp.eq.s32.totalorder %s42, 0
    %s45 = sadd.s32 %s44, 1
    %s46 = scalar_select %p43, %s44, %s45
    %p49 = pneg %p43
    %p50 = scmp.eq.s32.totalorder %s8, 1
    %p51 = por %p49, %p50
    %p52 = scmp.ne.s32.totalorder %s44, %s47
    %p53 = scmp.eq.s32.totalorder %s8, 0
    %p54 = por %p52, %p53
    %p55 = scmp.ne.s32.totalorder %s44, %s47
    %p56 = scmp.eq.s32.totalorder %s13, 1
    %p57 = por %p55, %p56
    %p58 = scmp.ne.s32.totalorder %s47, %s48
    %p59 = scmp.eq.s32.totalorder %s13, 0
    %p60 = por %p58, %p59
    %p61 = scmp.ne.s32.totalorder %s47, %s48
    %p62 = scmp.eq.s32.totalorder %s14, 1
    %p63 = por %p61, %p62
    %p65 = scmp.ne.s32.totalorder %s48, %s64
    %p66 = scmp.eq.s32.totalorder %s14, 0
    %p67 = por %p65, %p66
    %s68 = ssub.s32 %s8, %s15
    %p69 = scmp.eq.s32.totalorder %s68, 0
    %s71 = sadd.s32 %s70, 1
    %s72 = scalar_select %p69, %s70, %s71
    %p75 = pneg %p69
    %p76 = scmp.eq.s32.totalorder %s8, 1
    %p77 = por %p75, %p76
    %p78 = scmp.ne.s32.totalorder %s70, %s73
    %p79 = scmp.eq.s32.totalorder %s8, 0
    %p80 = por %p78, %p79
    %p81 = scmp.ne.s32.totalorder %s70, %s73
    %p82 = scmp.eq.s32.totalorder %s13, 1
    %p83 = por %p81, %p82
    %p84 = scmp.ne.s32.totalorder %s73, %s74
    %p85 = scmp.eq.s32.totalorder %s13, 0
    %p86 = por %p84, %p85
    %p87 = scmp.ne.s32.totalorder %s73, %s74
    %p88 = scmp.eq.s32.totalorder %s14, 1
    %p89 = por %p87, %p88
    %p91 = scmp.ne.s32.totalorder %s74, %s90
    %p92 = scmp.eq.s32.totalorder %s14, 0
    %p93 = por %p91, %p92
    %p94 = scmp.le.s32.totalorder 1, %s8
    %p95 = scmp.lt.s32.totalorder %s8, 3
    %p96 = pnand %p94, %p95
    %p97 = pneg %p96
    // Predicated region
    $region9: #{stage_forward_pallas.15} parent=5 // pred_check
      _
    $region10: #{stage_forward_pallas.15} parent=5 // pred_check_branch
      %99 = sbr.rel (%p96) target = $region12
    $region11: #{stage_forward_pallas.15} parent=5 // pred_region
      %s100 = ssub.s32 %s8, 1
    $region12: #{stage_forward_pallas.15} parent=5 // pred_fallthru
      _
    %p101 = scmp.lt.s32.totalorder %s8, 2
    // Predicated region
    $region13: #{stage_forward_pallas.15} parent=5 // pred_check
      %p102 = pneg %p101
    $region14: #{stage_forward_pallas.15} parent=5 // pred_check_branch
      %104 = sbr.rel (%p102) target = $region16
    $region15: #{stage_forward_pallas.15} parent=5 // pred_region
      // Predicated region
      $region17: #{stage_forward_pallas.15} parent=15 // pred_check
        %p105 = pneg %p28
      $region18: #{stage_forward_pallas.15} parent=15 // pred_check_branch
        %107 = sbr.rel (%p105) target = $region20
      $region19: #{stage_forward_pallas.15} parent=15 // pred_region
        %p108 = scmp.lt.s32.totalorder %s8, 1
        %s109 = scalar_select %p108, %s8, 1
        %s110 = smul.addr %s109, 4
        %s111 = scalar_lea.vmem %s0, %s110
      $region20: #{stage_forward_pallas.15} parent=15 // pred_fallthru
        _
      // Predicated region
      $region21: #{stage_forward_pallas.15} parent=15 // pred_check
        %p112 = pneg %p54
      $region22: #{stage_forward_pallas.15} parent=15 // pred_check_branch
        %114 = sbr.rel (%p112) target = $region24
      $region23: #{stage_forward_pallas.15} parent=15 // pred_region
        %p115 = scmp.lt.s32.totalorder %s8, 1
        %s116 = scalar_select %p115, %s8, 1
        %s117 = smul.addr %s116, 4
        %s118 = scalar_lea.vmem %s1, %s117
      $region24: #{stage_forward_pallas.15} parent=15 // pred_fallthru
        _
    $region16: #{stage_forward_pallas.15} parent=5 // pred_fallthru
      _
    %p119 = scmp.le.s32.totalorder 1, %s8
    %p120 = scmp.lt.s32.totalorder %s8, 3
    %p121 = pnand %p119, %p120
    %p122 = pneg %p121
    // Predicated region
    $region25: #{stage_forward_pallas.15} parent=5 // pred_check
      _
    $region26: #{stage_forward_pallas.15} parent=5 // pred_check_branch
      %124 = sbr.rel (%p121) target = $region28
    $region27: #{stage_forward_pallas.15} parent=5 // pred_region
      %s125 = ssub.s32 %s8, 1
      %p126 = scmp.lt.s32.totalorder %s13, 1
      %s127 = scalar_select %p126, %s13, 1
      %s128 = smul.addr %s127, 4
      %s129 = scalar_lea.vmem %s0, %s128
      %p130 = pneg %p34
      %p131 = pneg %p31
      %p132 = scmp.lt.s32.totalorder %s13, 1
      %s133 = scalar_select %p132, %s13, 1
      %s134 = smul.addr %s133, 4
      %s135 = scalar_lea.vmem %s1, %s134
      %p136 = pneg %p60
      %p137 = pneg %p57
      %p138 = pneg %p86
      %p139 = pneg %p83
      %p140 = scmp.lt.s32.totalorder %s13, 1
      %s141 = scalar_select %p140, %s13, 1
      %s142 = smul.addr %s141, 8
      %s143 = scalar_lea.vmem %s2, %s142
      %p144 = scmp.lt.s32.totalorder %s13, 1
      %s145 = scalar_select %p144, %s13, 1
      %s146 = smul.addr %s145, 4
      %s147 = scalar_lea.vmem %s0, %s146
      %p148 = scmp.lt.s32.totalorder %s13, 1
      %s149 = scalar_select %p148, %s13, 1
      %s150 = smul.addr %s149, 4
      %s151 = scalar_lea.vmem %s1, %s150
      %p152 = scmp.lt.s32.totalorder %s13, 1
      %s153 = scalar_select %p152, %s13, 1
      %s154 = smul.addr %s153, 8
      %s155 = scalar_lea.vmem %s2, %s154
      %v156 = vld [vmem:[%s147] sm:$0xf]
      %v157 = vld [vmem:[%s151] sm:$0xf]
      %v159 = vrot.slane %v157, 7
      %v162 = vrot.slane %v156, 7
      %v164 = vrot.slane %v157, 6
      %v166 = vrot.slane %v156, 6
      %v168 = vrot.slane %v157, 5
      %v170 = vrot.slane %v156, 5
      %v172 = vrot.slane %v157, 4
      %vm174 = vcmask 1040384
      %v175 = vsel %vm174, %v156, %v159
      %vm176 = vcmask 1041408
      %v177 = vsel %vm176, %v175, %v162
      %vm178 = vcmask 1042432
      %v179 = vsel %vm178, %v177, %v164
      %vm180 = vcmask 1043456
      %v181 = vsel %vm180, %v179, %v166
      %vm182 = vcmask 1044480
      %v183 = vsel %vm182, %v181, %v168
      %vm184 = vcmask 1045504
      %v185 = vsel %vm184, %v183, %v170
      %vm186 = vcmask 1046528
      %v187 = vsel %vm186, %v185, %v172
      %vm188 = vcmask 523264
      %189 = vst.msk [vmem:[%s155] sm:$0xff] %vm188, %v187
      %p190 = scmp.lt.s32.totalorder %s13, 1
      %s191 = scalar_select %p190, %s13, 1
      %s192 = smul.addr %s191, 8
      %s193 = scalar_lea.vmem %s2, %s192
      // Predicated region
      $region29: #{stage_forward_pallas.15} parent=27 // pred_check
        %p194 = pneg %p83
      $region30: #{stage_forward_pallas.15} parent=27 // pred_check_branch
        %196 = sbr.rel (%p194) target = $region32
      $region31: #{stage_forward_pallas.15} parent=27 // pred_region
        _
      $region32: #{stage_forward_pallas.15} parent=27 // pred_fallthru
        _
    $region28: #{stage_forward_pallas.15} parent=5 // pred_fallthru
      _
    %p197 = scmp.le.s32.totalorder 2, %s8
    // Predicated region
    $region33: #{stage_forward_pallas.15} parent=5 // pred_check
      %p198 = pneg %p197
    $region34: #{stage_forward_pallas.15} parent=5 // pred_check_branch
      %200 = sbr.rel (%p198) target = $region36
    $region35: #{stage_forward_pallas.15} parent=5 // pred_region
      %s201 = ssub.s32 %s8, 2
      // Predicated region
      $region37: #{stage_forward_pallas.15} parent=35 // pred_check
        %p202 = pneg %p89
      $region38: #{stage_forward_pallas.15} parent=35 // pred_check_branch
        %204 = sbr.rel (%p202) target = $region40
      $region39: #{stage_forward_pallas.15} parent=35 // pred_region
        %p205 = scmp.lt.s32.totalorder %s14, 1
        %s206 = scalar_select %p205, %s14, 1
        %s207 = smul.addr %s206, 8
        %s208 = scalar_lea.vmem %s2, %s207
      $region40: #{stage_forward_pallas.15} parent=35 // pred_fallthru
        _
    $region36: #{stage_forward_pallas.15} parent=5 // pred_fallthru
      _
  $region6: #{stage_forward_pallas.15} parent=0 // loop_footer
    %s12 = sadd.s32 1, %s8
  $region7: #{stage_forward_pallas.15} parent=0 // loop_footer_branch
    %7 = sbr.rel target = $region3
  $region8: #{stage_forward_pallas.15} parent=0 // loop_exit
    _

// kernel: stage_forward_pallas.16
$region0: #{stage_forward_pallas.16}
  #allocation0 [shape = 'u32[]', space=smem, size = 0x4, offset = 0x4, fixed_abs, tag = 'smem constant byte address 0x4 - core index']
  #allocation1 [shape = 'u32[144,128]{1,0:T(1,128)}', space=vmem, size = 0x12000, scoped, tag = 'internal scratch']
  %s0 = inlined_call_operand.vmem [shape: f32[2,8,64], index: 0, kind: input, shape index: {}]
  %s1 = inlined_call_operand.vmem [shape: f32[4,4], index: 1, kind: input, shape index: {}]
  %s2 = inlined_call_operand.vmem [shape: f32[4,1], index: 2, kind: input, shape index: {}]
  %s3 = inlined_call_operand.vmem [shape: f32[4,1], index: 3, kind: input, shape index: {}]
  %s4 = inlined_call_operand.vmem [shape: f32[2,4,64], index: 4, kind: output, shape index: {}]
  %s5 = sld [smem:[#allocation0]]
  $region49: #{stage_forward_pallas.16} parent=0
    _
  %s7 = ssub.s32 1, %s5
  %s8 = scalar_select 0, %s7, %s5
  loop: start=0, step=1, limit=4
  $region2: #{stage_forward_pallas.16} parent=0 // loop_pre_header
    _
  $region3: #{stage_forward_pallas.16} parent=0 // loop_header
    %s10 = sphi 0, %s14
    %p11 = scmp.ge.s32.totalorder %s10, 4
    %s20 = sphi 0, %s22
    %s23 = sphi 0, %s20
    %s24 = sphi 0, %s23
    %s40 = sphi 0, %s24
    %s44 = sphi 0, %s44
    %s46 = sphi 0, %s44
    %s47 = sphi 0, %s46
    %s61 = sphi 0, %s47
    %s65 = sphi 0, %s65
    %s67 = sphi 0, %s65
    %s68 = sphi 0, %s67
    %s82 = sphi 0, %s68
    %s86 = sphi 0, %s86
    %s88 = sphi 0, %s86
    %s89 = sphi 0, %s88
    %s103 = sphi 0, %s89
    %s109 = sphi 0, %s111
    %s112 = sphi 0, %s109
    %s113 = sphi 0, %s112
    %s129 = sphi 0, %s113
  $region4: #{stage_forward_pallas.16} parent=0 // loop_header_branch
    %13 = sbr.rel (%p11) target = $region8
  $region5: #{stage_forward_pallas.16} parent=0 // loop_body
    %s15 = ssub.s32 %s10, 1
    %s16 = ssub.s32 %s10, 2
    %s17 = sadd.s32 %s10, 1
    %s18 = ssub.s32 %s10, %s17
    %p19 = scmp.eq.s32.totalorder %s18, 0
    %s21 = sadd.s32 %s20, 1
    %s22 = scalar_select %p19, %s20, %s21
    %p25 = pneg %p19
    %p26 = scmp.eq.s32.totalorder %s10, 1
    %p27 = por %p25, %p26
    %p28 = scmp.ne.s32.totalorder %s20, %s23
    %p29 = scmp.eq.s32.totalorder %s10, 0
    %p30 = por %p28, %p29
    %p31 = scmp.ne.s32.totalorder %s20, %s23
    %p32 = scmp.eq.s32.totalorder %s15, 1
    %p33 = por %p31, %p32
    %p34 = scmp.ne.s32.totalorder %s23, %s24
    %p35 = scmp.eq.s32.totalorder %s15, 0
    %p36 = por %p34, %p35
    %p37 = scmp.ne.s32.totalorder %s23, %s24
    %p38 = scmp.eq.s32.totalorder %s16, 1
    %p39 = por %p37, %p38
    %p41 = scmp.ne.s32.totalorder %s24, %s40
    %p42 = scmp.eq.s32.totalorder %s16, 0
    %p43 = por %p41, %p42
    %s45 = sadd.s32 %s44, 1
    %p48 = scmp.eq.s32.totalorder %s10, 1
    %p49 = scmp.ne.s32.totalorder %s44, %s46
    %p50 = scmp.eq.s32.totalorder %s10, 0
    %p51 = por %p49, %p50
    %p52 = scmp.ne.s32.totalorder %s44, %s46
    %p53 = scmp.eq.s32.totalorder %s15, 1
    %p54 = por %p52, %p53
    %p55 = scmp.ne.s32.totalorder %s46, %s47
    %p56 = scmp.eq.s32.totalorder %s15, 0
    %p57 = por %p55, %p56
    %p58 = scmp.ne.s32.totalorder %s46, %s47
    %p59 = scmp.eq.s32.totalorder %s16, 1
    %p60 = por %p58, %p59
    %p62 = scmp.ne.s32.totalorder %s47, %s61
    %p63 = scmp.eq.s32.totalorder %s16, 0
    %p64 = por %p62, %p63
    %s66 = sadd.s32 %s65, 1
    %p69 = scmp.eq.s32.totalorder %s10, 1
    %p70 = scmp.ne.s32.totalorder %s65, %s67
    %p71 = scmp.eq.s32.totalorder %s10, 0
    %p72 = por %p70, %p71
    %p73 = scmp.ne.s32.totalorder %s65, %s67
    %p74 = scmp.eq.s32.totalorder %s15, 1
    %p75 = por %p73, %p74
    %p76 = scmp.ne.s32.totalorder %s67, %s68
    %p77 = scmp.eq.s32.totalorder %s15, 0
    %p78 = por %p76, %p77
    %p79 = scmp.ne.s32.totalorder %s67, %s68
    %p80 = scmp.eq.s32.totalorder %s16, 1
    %p81 = por %p79, %p80
    %p83 = scmp.ne.s32.totalorder %s68, %s82
    %p84 = scmp.eq.s32.totalorder %s16, 0
    %p85 = por %p83, %p84
    %s87 = sadd.s32 %s86, 1
    %p90 = scmp.eq.s32.totalorder %s10, 1
    %p91 = scmp.ne.s32.totalorder %s86, %s88
    %p92 = scmp.eq.s32.totalorder %s10, 0
    %p93 = por %p91, %p92
    %p94 = scmp.ne.s32.totalorder %s86, %s88
    %p95 = scmp.eq.s32.totalorder %s15, 1
    %p96 = por %p94, %p95
    %p97 = scmp.ne.s32.totalorder %s88, %s89
    %p98 = scmp.eq.s32.totalorder %s15, 0
    %p99 = por %p97, %p98
    %p100 = scmp.ne.s32.totalorder %s88, %s89
    %p101 = scmp.eq.s32.totalorder %s16, 1
    %p102 = por %p100, %p101
    %p104 = scmp.ne.s32.totalorder %s89, %s103
    %p105 = scmp.eq.s32.totalorder %s16, 0
    %p106 = por %p104, %p105
    %s107 = ssub.s32 %s10, %s17
    %p108 = scmp.eq.s32.totalorder %s107, 0
    %s110 = sadd.s32 %s109, 1
    %s111 = scalar_select %p108, %s109, %s110
    %p114 = pneg %p108
    %p115 = scmp.eq.s32.totalorder %s10, 1
    %p116 = por %p114, %p115
    %p117 = scmp.ne.s32.totalorder %s109, %s112
    %p118 = scmp.eq.s32.totalorder %s10, 0
    %p119 = por %p117, %p118
    %p120 = scmp.ne.s32.totalorder %s109, %s112
    %p121 = scmp.eq.s32.totalorder %s15, 1
    %p122 = por %p120, %p121
    %p123 = scmp.ne.s32.totalorder %s112, %s113
    %p124 = scmp.eq.s32.totalorder %s15, 0
    %p125 = por %p123, %p124
    %p126 = scmp.ne.s32.totalorder %s112, %s113
    %p127 = scmp.eq.s32.totalorder %s16, 1
    %p128 = por %p126, %p127
    %p130 = scmp.ne.s32.totalorder %s113, %s129
    %p131 = scmp.eq.s32.totalorder %s16, 0
    %p132 = por %p130, %p131
    %p133 = scmp.le.s32.totalorder 1, %s10
    %p134 = scmp.lt.s32.totalorder %s10, 3
    %p135 = pnand %p133, %p134
    %p136 = pneg %p135
    // Predicated region
    $region9: #{stage_forward_pallas.16} parent=5 // pred_check
      _
    $region10: #{stage_forward_pallas.16} parent=5 // pred_check_branch
      %138 = sbr.rel (%p135) target = $region12
    $region11: #{stage_forward_pallas.16} parent=5 // pred_region
      %s139 = ssub.s32 %s10, 1
      // Predicated region
      $region13: #{stage_forward_pallas.16} parent=11 // pred_check
        %p140 = pneg %p57
      $region14: #{stage_forward_pallas.16} parent=11 // pred_check_branch
        %142 = sbr.rel (%p140) target = $region16
      $region15: #{stage_forward_pallas.16} parent=11 // pred_region
        _
      $region16: #{stage_forward_pallas.16} parent=11 // pred_fallthru
        _
      // Predicated region
      $region17: #{stage_forward_pallas.16} parent=11 // pred_check
        %p143 = pneg %p78
      $region18: #{stage_forward_pallas.16} parent=11 // pred_check_branch
        %145 = sbr.rel (%p143) target = $region20
      $region19: #{stage_forward_pallas.16} parent=11 // pred_region
        _
      $region20: #{stage_forward_pallas.16} parent=11 // pred_fallthru
        _
      // Predicated region
      $region21: #{stage_forward_pallas.16} parent=11 // pred_check
        %p146 = pneg %p99
      $region22: #{stage_forward_pallas.16} parent=11 // pred_check_branch
        %148 = sbr.rel (%p146) target = $region24
      $region23: #{stage_forward_pallas.16} parent=11 // pred_region
        _
      $region24: #{stage_forward_pallas.16} parent=11 // pred_fallthru
        _
    $region12: #{stage_forward_pallas.16} parent=5 // pred_fallthru
      _
    %p149 = scmp.lt.s32.totalorder %s10, 2
    // Predicated region
    $region25: #{stage_forward_pallas.16} parent=5 // pred_check
      %p150 = pneg %p149
    $region26: #{stage_forward_pallas.16} parent=5 // pred_check_branch
      %152 = sbr.rel (%p150) target = $region28
    $region27: #{stage_forward_pallas.16} parent=5 // pred_region
      // Predicated region
      $region29: #{stage_forward_pallas.16} parent=27 // pred_check
        %p153 = pneg %p30
      $region30: #{stage_forward_pallas.16} parent=27 // pred_check_branch
        %155 = sbr.rel (%p153) target = $region32
      $region31: #{stage_forward_pallas.16} parent=27 // pred_region
        %p156 = scmp.lt.s32.totalorder %s10, 1
        %s157 = scalar_select %p156, %s10, 1
        %s158 = smul.addr %s157, 8
        %s159 = scalar_lea.vmem %s0, %s158
      $region32: #{stage_forward_pallas.16} parent=27 // pred_fallthru
        _
    $region28: #{stage_forward_pallas.16} parent=5 // pred_fallthru
      _
    %p160 = scmp.le.s32.totalorder 1, %s10
    %p161 = scmp.lt.s32.totalorder %s10, 3
    %p162 = pnand %p160, %p161
    %p163 = pneg %p162
    // Predicated region
    $region33: #{stage_forward_pallas.16} parent=5 // pred_check
      _
    $region34: #{stage_forward_pallas.16} parent=5 // pred_check_branch
      %165 = sbr.rel (%p162) target = $region36
    $region35: #{stage_forward_pallas.16} parent=5 // pred_region
      %s166 = ssub.s32 %s10, 1
      %p167 = scmp.lt.s32.totalorder %s15, 1
      %s168 = scalar_select %p167, %s15, 1
      %s169 = smul.addr %s168, 8
      %s170 = scalar_lea.vmem %s0, %s169
      %p171 = pneg %p36
      %p172 = pneg %p33
      %p173 = pneg %p57
      %p174 = pneg %p54
      %p175 = pneg %p78
      %p176 = pneg %p75
      %p177 = pneg %p99
      %p178 = pneg %p96
      %p179 = pneg %p125
      %p180 = pneg %p122
      %p181 = scmp.lt.s32.totalorder %s15, 1
      %s182 = scalar_select %p181, %s15, 1
      %s183 = smul.addr %s182, 4
      %s184 = scalar_lea.vmem %s4, %s183
      %p185 = scmp.lt.s32.totalorder %s15, 1
      %s186 = scalar_select %p185, %s15, 1
      %s187 = smul.addr %s186, 8
      %s188 = scalar_lea.vmem %s0, %s187
      %p189 = scmp.lt.s32.totalorder %s15, 1
      %s190 = scalar_select %p189, %s15, 1
      %s191 = smul.addr %s190, 4
      %s192 = scalar_lea.vmem %s4, %s191
      %v193 = vld [vmem:[%s188] sm:$0xff]
      %v194 = vld [vmem:[%s1] sm:$0xf]
      %v196 = vrot.slane %v193, 4
      %vm197 = vcmask 31744
      %v199 = vsel %vm197, %v194, 0
      %vm201 = vcmask 1043456
      %v202 = vsel %vm201, %v196, 0
      %204 = vmatprep.subr.mxu0 0.0
      %205 = vmatpush1.msra.mxu0 0.0
      %206 = vmatprep.subr.mxu0 0.0
      %207 = vmatpush1.msra.mxu0 0.0
      %208 = vmatprep.subr.mxu0 0.0
      %209 = vmatpush1.msra.mxu0 0.0
      %210 = vmatprep.subr.mxu0 0.0
      %211 = vmatpush1.msra.mxu0 0.0
      %212 = vmatprep.subr.mxu0 0.0
      %213 = vmatpush1.msra.mxu0 0.0
      %214 = vmatprep.subr.mxu0 0.0
      %215 = vmatpush1.msra.mxu0 0.0
      %216 = vmatprep.subr.mxu0 0.0
      %217 = vmatpush1.msra.mxu0 0.0
      %218 = vmatprep.subr.mxu0 0.0
      %219 = vmatpush1.msra.mxu0 0.0
      %220 = vmatprep.subr.mxu0 0.0
      %221 = vmatpush1.msra.mxu0 0.0
      %222 = vmatprep.subr.mxu0 0.0
      %223 = vmatpush1.msra.mxu0 0.0
      %224 = vmatprep.subr.mxu0 0.0
      %225 = vmatpush1.msra.mxu0 0.0
      %226 = vmatprep.subr.mxu0 0.0
      %227 = vmatpush1.msra.mxu0 0.0
      %228 = vmatprep.subr.mxu0 0.0
      %229 = vmatpush1.msra.mxu0 0.0
      %230 = vmatprep.subr.mxu0 0.0
      %231 = vmatpush1.msra.mxu0 0.0
      %232 = vmatprep.subr.mxu0 0.0
      %233 = vmatpush1.msra.mxu0 0.0
      %234 = vmatprep.subr.mxu0 0.0
      %235 = vmatpush1.msra.mxu0 %v202
      %236 = vmatprep.subr.mxu0 0.0
      %237 = vmatpush2.msra.mxu0 0.0
      %238 = vmatprep.subr.mxu0 0.0
      %239 = vmatpush2.msra.mxu0 0.0
      %240 = vmatprep.subr.mxu0 0.0
      %241 = vmatpush2.msra.mxu0 0.0
      %242 = vmatprep.subr.mxu0 0.0
      %243 = vmatpush2.msra.mxu0 0.0
      %244 = vmatprep.subr.mxu0 0.0
      %245 = vmatpush2.msra.mxu0 0.0
      %246 = vmatprep.subr.mxu0 0.0
      %247 = vmatpush2.msra.mxu0 0.0
      %248 = vmatprep.subr.mxu0 0.0
      %249 = vmatpush2.msra.mxu0 0.0
      %250 = vmatprep.subr.mxu0 0.0
      %251 = vmatpush2.msra.mxu0 0.0
      %252 = vmatprep.subr.mxu0 0.0
      %253 = vmatpush2.msra.mxu0 0.0
      %254 = vmatprep.subr.mxu0 0.0
      %255 = vmatpush2.msra.mxu0 0.0
      %256 = vmatprep.subr.mxu0 0.0
      %257 = vmatpush2.msra.mxu0 0.0
      %258 = vmatprep.subr.mxu0 0.0
      %259 = vmatpush2.msra.mxu0 0.0
      %260 = vmatprep.subr.mxu0 0.0
      %261 = vmatpush2.msra.mxu0 0.0
      %262 = vmatprep.subr.mxu0 0.0
      %263 = vmatpush2.msra.mxu0 0.0
      %264 = vmatprep.subr.mxu0 0.0
      %265 = vmatpush2.msra.mxu0 0.0
      %266 = vmatprep.subr.mxu0 0.0
      %267 = vmatpush2.msra.mxu0 0.0
      %268 = vmatprep.mubr.f32.mxu0 0.0
      %269 = vmatmul.mubr.f32.gmra.mxu0 %v199
      %v270 = vpop.f32.mrf.mxu0
      %v271 = vadd.f32 0.0, %v270
      %v272 = vpop.f32.mrf.mxu0
      %273 = vdwg.mxu0
      %v274 = vld [vmem:[%s2] sm:$0xf]
      %276 = vset.pattern.permute.xlu0 0
      %277 = vperm.xlu0 %276, %v274
      %v278 = vpop.permute.xlu0 %277
      %v280 = vmul.f32 %v271, %v278
      %v281 = vld [vmem:[%s3] sm:$0xf]
      %283 = vset.pattern.permute.xlu0 0
      %284 = vperm.xlu0 %283, %v281
      %v285 = vpop.permute.xlu0 %284
      %v287 = vadd.f32 %v280, %v285
      %v288 = vmax.f32 %v287, 0.0
      %vm289 = vcmask 519168
      %290 = vst.msk [vmem:[%s192] sm:$0xf] %vm289, %v288
      %p291 = scmp.lt.s32.totalorder %s15, 1
      %s292 = scalar_select %p291, %s15, 1
      %s293 = smul.addr %s292, 4
      %s294 = scalar_lea.vmem %s4, %s293
      // Predicated region
      $region37: #{stage_forward_pallas.16} parent=35 // pred_check
        %p295 = pneg %p122
      $region38: #{stage_forward_pallas.16} parent=35 // pred_check_branch
        %297 = sbr.rel (%p295) target = $region40
      $region39: #{stage_forward_pallas.16} parent=35 // pred_region
        _
      $region40: #{stage_forward_pallas.16} parent=35 // pred_fallthru
        _
    $region36: #{stage_forward_pallas.16} parent=5 // pred_fallthru
      _
    %p298 = scmp.le.s32.totalorder 2, %s10
    // Predicated region
    $region41: #{stage_forward_pallas.16} parent=5 // pred_check
      %p299 = pneg %p298
    $region42: #{stage_forward_pallas.16} parent=5 // pred_check_branch
      %301 = sbr.rel (%p299) target = $region44
    $region43: #{stage_forward_pallas.16} parent=5 // pred_region
      %s302 = ssub.s32 %s10, 2
      // Predicated region
      $region45: #{stage_forward_pallas.16} parent=43 // pred_check
        %p303 = pneg %p128
      $region46: #{stage_forward_pallas.16} parent=43 // pred_check_branch
        %305 = sbr.rel (%p303) target = $region48
      $region47: #{stage_forward_pallas.16} parent=43 // pred_region
        %p306 = scmp.lt.s32.totalorder %s16, 1
        %s307 = scalar_select %p306, %s16, 1
        %s308 = smul.addr %s307, 4
        %s309 = scalar_lea.vmem %s4, %s308
      $region48: #{stage_forward_pallas.16} parent=43 // pred_fallthru
        _
    $region44: #{stage_forward_pallas.16} parent=5 // pred_fallthru
      _
  $region6: #{stage_forward_pallas.16} parent=0 // loop_footer
    %s14 = sadd.s32 1, %s10
  $region7: #{stage_forward_pallas.16} parent=0 // loop_footer_branch
    %9 = sbr.rel target = $region3
  $region8: #{stage_forward_pallas.16} parent=0 // loop_exit
    _

// kernel: stage_forward_pallas.17
$region0: #{stage_forward_pallas.17}
  #allocation0 [shape = 'u32[]', space=smem, size = 0x4, offset = 0x4, fixed_abs, tag = 'smem constant byte address 0x4 - core index']
  #allocation1 [shape = 'u32[144,128]{1,0:T(1,128)}', space=vmem, size = 0x12000, scoped, tag = 'internal scratch']
  %s0 = inlined_call_operand.vmem [shape: f32[2,4,8,8], index: 0, kind: input, shape index: {}]
  %s1 = inlined_call_operand.vmem [shape: f32[4,1,9], index: 1, kind: input, shape index: {}]
  %s2 = inlined_call_operand.vmem [shape: f32[4,1,1], index: 2, kind: input, shape index: {}]
  %s3 = inlined_call_operand.vmem [shape: f32[4,1,1], index: 3, kind: input, shape index: {}]
  %s4 = inlined_call_operand.vmem [shape: f32[2,4,8,8], index: 4, kind: output, shape index: {}]
  %s5 = sld [smem:[#allocation0]]
  $region49: #{stage_forward_pallas.17} parent=0
    _
  %s7 = ssub.s32 1, %s5
  %s8 = scalar_select 0, %s7, %s5
  loop: start=0, step=1, limit=4
  $region2: #{stage_forward_pallas.17} parent=0 // loop_pre_header
    _
  $region3: #{stage_forward_pallas.17} parent=0 // loop_header
    %s10 = sphi 0, %s14
    %p11 = scmp.ge.s32.totalorder %s10, 4
    %s20 = sphi 0, %s22
    %s23 = sphi 0, %s20
    %s24 = sphi 0, %s23
    %s40 = sphi 0, %s24
    %s44 = sphi 0, %s44
    %s46 = sphi 0, %s44
    %s47 = sphi 0, %s46
    %s61 = sphi 0, %s47
    %s65 = sphi 0, %s65
    %s67 = sphi 0, %s65
    %s68 = sphi 0, %s67
    %s82 = sphi 0, %s68
    %s86 = sphi 0, %s86
    %s88 = sphi 0, %s86
    %s89 = sphi 0, %s88
    %s103 = sphi 0, %s89
    %s109 = sphi 0, %s111
    %s112 = sphi 0, %s109
    %s113 = sphi 0, %s112
    %s129 = sphi 0, %s113
  $region4: #{stage_forward_pallas.17} parent=0 // loop_header_branch
    %13 = sbr.rel (%p11) target = $region8
  $region5: #{stage_forward_pallas.17} parent=0 // loop_body
    %s15 = ssub.s32 %s10, 1
    %s16 = ssub.s32 %s10, 2
    %s17 = sadd.s32 %s10, 1
    %s18 = ssub.s32 %s10, %s17
    %p19 = scmp.eq.s32.totalorder %s18, 0
    %s21 = sadd.s32 %s20, 1
    %s22 = scalar_select %p19, %s20, %s21
    %p25 = pneg %p19
    %p26 = scmp.eq.s32.totalorder %s10, 1
    %p27 = por %p25, %p26
    %p28 = scmp.ne.s32.totalorder %s20, %s23
    %p29 = scmp.eq.s32.totalorder %s10, 0
    %p30 = por %p28, %p29
    %p31 = scmp.ne.s32.totalorder %s20, %s23
    %p32 = scmp.eq.s32.totalorder %s15, 1
    %p33 = por %p31, %p32
    %p34 = scmp.ne.s32.totalorder %s23, %s24
    %p35 = scmp.eq.s32.totalorder %s15, 0
    %p36 = por %p34, %p35
    %p37 = scmp.ne.s32.totalorder %s23, %s24
    %p38 = scmp.eq.s32.totalorder %s16, 1
    %p39 = por %p37, %p38
    %p41 = scmp.ne.s32.totalorder %s24, %s40
    %p42 = scmp.eq.s32.totalorder %s16, 0
    %p43 = por %p41, %p42
    %s45 = sadd.s32 %s44, 1
    %p48 = scmp.eq.s32.totalorder %s10, 1
    %p49 = scmp.ne.s32.totalorder %s44, %s46
    %p50 = scmp.eq.s32.totalorder %s10, 0
    %p51 = por %p49, %p50
    %p52 = scmp.ne.s32.totalorder %s44, %s46
    %p53 = scmp.eq.s32.totalorder %s15, 1
    %p54 = por %p52, %p53
    %p55 = scmp.ne.s32.totalorder %s46, %s47
    %p56 = scmp.eq.s32.totalorder %s15, 0
    %p57 = por %p55, %p56
    %p58 = scmp.ne.s32.totalorder %s46, %s47
    %p59 = scmp.eq.s32.totalorder %s16, 1
    %p60 = por %p58, %p59
    %p62 = scmp.ne.s32.totalorder %s47, %s61
    %p63 = scmp.eq.s32.totalorder %s16, 0
    %p64 = por %p62, %p63
    %s66 = sadd.s32 %s65, 1
    %p69 = scmp.eq.s32.totalorder %s10, 1
    %p70 = scmp.ne.s32.totalorder %s65, %s67
    %p71 = scmp.eq.s32.totalorder %s10, 0
    %p72 = por %p70, %p71
    %p73 = scmp.ne.s32.totalorder %s65, %s67
    %p74 = scmp.eq.s32.totalorder %s15, 1
    %p75 = por %p73, %p74
    %p76 = scmp.ne.s32.totalorder %s67, %s68
    %p77 = scmp.eq.s32.totalorder %s15, 0
    %p78 = por %p76, %p77
    %p79 = scmp.ne.s32.totalorder %s67, %s68
    %p80 = scmp.eq.s32.totalorder %s16, 1
    %p81 = por %p79, %p80
    %p83 = scmp.ne.s32.totalorder %s68, %s82
    %p84 = scmp.eq.s32.totalorder %s16, 0
    %p85 = por %p83, %p84
    %s87 = sadd.s32 %s86, 1
    %p90 = scmp.eq.s32.totalorder %s10, 1
    %p91 = scmp.ne.s32.totalorder %s86, %s88
    %p92 = scmp.eq.s32.totalorder %s10, 0
    %p93 = por %p91, %p92
    %p94 = scmp.ne.s32.totalorder %s86, %s88
    %p95 = scmp.eq.s32.totalorder %s15, 1
    %p96 = por %p94, %p95
    %p97 = scmp.ne.s32.totalorder %s88, %s89
    %p98 = scmp.eq.s32.totalorder %s15, 0
    %p99 = por %p97, %p98
    %p100 = scmp.ne.s32.totalorder %s88, %s89
    %p101 = scmp.eq.s32.totalorder %s16, 1
    %p102 = por %p100, %p101
    %p104 = scmp.ne.s32.totalorder %s89, %s103
    %p105 = scmp.eq.s32.totalorder %s16, 0
    %p106 = por %p104, %p105
    %s107 = ssub.s32 %s10, %s17
    %p108 = scmp.eq.s32.totalorder %s107, 0
    %s110 = sadd.s32 %s109, 1
    %s111 = scalar_select %p108, %s109, %s110
    %p114 = pneg %p108
    %p115 = scmp.eq.s32.totalorder %s10, 1
    %p116 = por %p114, %p115
    %p117 = scmp.ne.s32.totalorder %s109, %s112
    %p118 = scmp.eq.s32.totalorder %s10, 0
    %p119 = por %p117, %p118
    %p120 = scmp.ne.s32.totalorder %s109, %s112
    %p121 = scmp.eq.s32.totalorder %s15, 1
    %p122 = por %p120, %p121
    %p123 = scmp.ne.s32.totalorder %s112, %s113
    %p124 = scmp.eq.s32.totalorder %s15, 0
    %p125 = por %p123, %p124
    %p126 = scmp.ne.s32.totalorder %s112, %s113
    %p127 = scmp.eq.s32.totalorder %s16, 1
    %p128 = por %p126, %p127
    %p130 = scmp.ne.s32.totalorder %s113, %s129
    %p131 = scmp.eq.s32.totalorder %s16, 0
    %p132 = por %p130, %p131
    %p133 = scmp.le.s32.totalorder 1, %s10
    %p134 = scmp.lt.s32.totalorder %s10, 3
    %p135 = pnand %p133, %p134
    %p136 = pneg %p135
    // Predicated region
    $region9: #{stage_forward_pallas.17} parent=5 // pred_check
      _
    $region10: #{stage_forward_pallas.17} parent=5 // pred_check_branch
      %138 = sbr.rel (%p135) target = $region12
    $region11: #{stage_forward_pallas.17} parent=5 // pred_region
      %s139 = ssub.s32 %s10, 1
      // Predicated region
      $region13: #{stage_forward_pallas.17} parent=11 // pred_check
        %p140 = pneg %p57
      $region14: #{stage_forward_pallas.17} parent=11 // pred_check_branch
        %142 = sbr.rel (%p140) target = $region16
      $region15: #{stage_forward_pallas.17} parent=11 // pred_region
        _
      $region16: #{stage_forward_pallas.17} parent=11 // pred_fallthru
        _
      // Predicated region
      $region17: #{stage_forward_pallas.17} parent=11 // pred_check
        %p143 = pneg %p78
      $region18: #{stage_forward_pallas.17} parent=11 // pred_check_branch
        %145 = sbr.rel (%p143) target = $region20
      $region19: #{stage_forward_pallas.17} parent=11 // pred_region
        _
      $region20: #{stage_forward_pallas.17} parent=11 // pred_fallthru
        _
      // Predicated region
      $region21: #{stage_forward_pallas.17} parent=11 // pred_check
        %p146 = pneg %p99
      $region22: #{stage_forward_pallas.17} parent=11 // pred_check_branch
        %148 = sbr.rel (%p146) target = $region24
      $region23: #{stage_forward_pallas.17} parent=11 // pred_region
        _
      $region24: #{stage_forward_pallas.17} parent=11 // pred_fallthru
        _
    $region12: #{stage_forward_pallas.17} parent=5 // pred_fallthru
      _
    %p149 = scmp.lt.s32.totalorder %s10, 2
    // Predicated region
    $region25: #{stage_forward_pallas.17} parent=5 // pred_check
      %p150 = pneg %p149
    $region26: #{stage_forward_pallas.17} parent=5 // pred_check_branch
      %152 = sbr.rel (%p150) target = $region28
    $region27: #{stage_forward_pallas.17} parent=5 // pred_region
      // Predicated region
      $region29: #{stage_forward_pallas.17} parent=27 // pred_check
        %p153 = pneg %p30
      $region30: #{stage_forward_pallas.17} parent=27 // pred_check_branch
        %155 = sbr.rel (%p153) target = $region32
      $region31: #{stage_forward_pallas.17} parent=27 // pred_region
        %p156 = scmp.lt.s32.totalorder %s10, 1
        %s157 = scalar_select %p156, %s10, 1
        %s158 = smul.addr %s157, 4
        %s159 = smul.addr %s158, 8
        %s160 = scalar_lea.vmem %s0, %s159
      $region32: #{stage_forward_pallas.17} parent=27 // pred_fallthru
        _
    $region28: #{stage_forward_pallas.17} parent=5 // pred_fallthru
      _
    %p161 = scmp.le.s32.totalorder 1, %s10
    %p162 = scmp.lt.s32.totalorder %s10, 3
    %p163 = pnand %p161, %p162
    %p164 = pneg %p163
    // Predicated region
    $region33: #{stage_forward_pallas.17} parent=5 // pred_check
      _
    $region34: #{stage_forward_pallas.17} parent=5 // pred_check_branch
      %166 = sbr.rel (%p163) target = $region36
    $region35: #{stage_forward_pallas.17} parent=5 // pred_region
      %s167 = ssub.s32 %s10, 1
      %p168 = scmp.lt.s32.totalorder %s15, 1
      %s169 = scalar_select %p168, %s15, 1
      %s170 = smul.addr %s169, 4
      %s171 = smul.addr %s170, 8
      %s172 = scalar_lea.vmem %s0, %s171
      %p173 = pneg %p36
      %p174 = pneg %p33
      %p175 = pneg %p57
      %p176 = pneg %p54
      %p177 = pneg %p78
      %p178 = pneg %p75
      %p179 = pneg %p99
      %p180 = pneg %p96
      %p181 = pneg %p125
      %p182 = pneg %p122
      %p183 = scmp.lt.s32.totalorder %s15, 1
      %s184 = scalar_select %p183, %s15, 1
      %s185 = smul.addr %s184, 4
      %s186 = smul.addr %s185, 8
      %s187 = scalar_lea.vmem %s4, %s186
      %p188 = scmp.lt.s32.totalorder %s15, 1
      %s189 = scalar_select %p188, %s15, 1
      %s190 = smul.addr %s189, 4
      %s191 = smul.addr %s190, 8
      %s192 = scalar_lea.vmem %s0, %s191
      %p193 = scmp.lt.s32.totalorder %s15, 1
      %s194 = scalar_select %p193, %s15, 1
      %s195 = smul.addr %s194, 4
      %s196 = smul.addr %s195, 8
      %s197 = scalar_lea.vmem %s4, %s196
      %v198 = vld [vmem:[%s192] sm:$0xff]
      %v199 = vld [vmem:[%s192 + $0x8] sm:$0xff]
      %v200 = vld [vmem:[%s192 + $0x10] sm:$0xff]
      %v201 = vld [vmem:[%s192 + $0x18] sm:$0xff]
      %v206 = vrot.slane %v198, 7
      %v207 = vrot.slane %v199, 7
      %v208 = vrot.slane %v200, 7
      %v209 = vrot.slane %v201, 7
      %vm214 = vcmask 1040384
      %v215 = vsel %vm214, 0.0, %v206
      %v216 = vsel %vm214, 0.0, %v207
      %v217 = vsel %vm214, 0.0, %v208
      %v218 = vsel %vm214, 0.0, %v209
      %v219 = vsel %vm214, %v206, 0.0
      %v220 = vsel %vm214, %v207, 0.0
      %v221 = vsel %vm214, %v208, 0.0
      %v222 = vsel %vm214, %v209, 0.0
      %231 = vrot.lane.b32.xlu0 %v215, 1
      %v232 = vpop.permute.xlu0 %231
      %233 = vrot.lane.b32.xlu0 %v219, 1
      %v234 = vpop.permute.xlu0 %233
      %235 = vrot.lane.b32.xlu0 %v216, 1
      %v236 = vpop.permute.xlu0 %235
      %237 = vrot.lane.b32.xlu0 %v220, 1
      %v238 = vpop.permute.xlu0 %237
      %239 = vrot.lane.b32.xlu0 %v217, 1
      %v240 = vpop.permute.xlu0 %239
      %241 = vrot.lane.b32.xlu0 %v221, 1
      %v242 = vpop.permute.xlu0 %241
      %243 = vrot.lane.b32.xlu0 %v218, 1
      %v244 = vpop.permute.xlu0 %243
      %245 = vrot.lane.b32.xlu0 %v222, 1
      %v246 = vpop.permute.xlu0 %245
      %vm255 = vcmask 7168
      %v256 = vsel %vm255, 0.0, %v232
      %v257 = vsel %vm255, 0.0, %v234
      %v258 = vsel %vm255, 0.0, %v236
      %v259 = vsel %vm255, 0.0, %v238
      %v260 = vsel %vm255, 0.0, %v240
      %v261 = vsel %vm255, 0.0, %v242
      %v262 = vsel %vm255, 0.0, %v244
      %v263 = vsel %vm255, 0.0, %v246
      %vm264 = vcmask 72704
      %v265 = vsel %vm264, %v256, 0.0
      %v266 = vsel %vm264, %v257, 0.0
      %v267 = vsel %vm264, %v258, 0.0
      %v268 = vsel %vm264, %v259, 0.0
      %v269 = vsel %vm264, %v260, 0.0
      %v270 = vsel %vm264, %v261, 0.0
      %v271 = vsel %vm264, %v262, 0.0
      %v272 = vsel %vm264, %v263, 0.0
      %v273 = vld [vmem:[%s1] sm:$0x1]
      %v274 = vld [vmem:[%s1 + $0x1] sm:$0x1]
      %v275 = vld [vmem:[%s1 + $0x2] sm:$0x1]
      %v276 = vld [vmem:[%s1 + $0x3] sm:$0x1]
      %v281 = vlaneseq
      %v282 = vshrl.u32 %v281, 7
      %v283 = vsub.s32 0, %v282
      %v284 = vrot.slane %v273, %v283
      %v285 = vlaneseq
      %v286 = vshrl.u32 %v285, 7
      %v287 = vsub.s32 0, %v286
      %v288 = vrot.slane %v274, %v287
      %v289 = vlaneseq
      %v290 = vshrl.u32 %v289, 7
      %v291 = vsub.s32 0, %v290
      %v292 = vrot.slane %v275, %v291
      %v293 = vlaneseq
      %v294 = vshrl.u32 %v293, 7
      %v295 = vsub.s32 0, %v294
      %v296 = vrot.slane %v276, %v295
      %297 = vset.pattern.permute.xlu0 0
      %298 = vperm.xlu0 %297, %v284
      %v299 = vpop.permute.xlu0 %298
      %301 = vset.pattern.permute.xlu0 0
      %302 = vperm.xlu0 %301, %v288
      %v303 = vpop.permute.xlu0 %302
      %305 = vset.pattern.permute.xlu0 0
      %306 = vperm.xlu0 %305, %v292
      %v307 = vpop.permute.xlu0 %306
      %309 = vset.pattern.permute.xlu0 0
      %310 = vperm.xlu0 %309, %v296
      %v311 = vpop.permute.xlu0 %310
      %v313 = vmul.f32 %v299, %v265
      %v314 = vmul.f32 %v303, %v267
      %v315 = vmul.f32 %v307, %v269
      %v316 = vmul.f32 %v311, %v271
      %v317 = vadd.f32 %v313, 0.0
      %v318 = vadd.f32 %v314, 0.0
      %v319 = vadd.f32 %v315, 0.0
      %v320 = vadd.f32 %v316, 0.0
      %321 = vset.pattern.permute.xlu0 1
      %322 = vperm.xlu0 %321, %v284
      %v323 = vpop.permute.xlu0 %322
      %325 = vset.pattern.permute.xlu0 1
      %326 = vperm.xlu0 %325, %v288
      %v327 = vpop.permute.xlu0 %326
      %329 = vset.pattern.permute.xlu0 1
      %330 = vperm.xlu0 %329, %v292
      %v331 = vpop.permute.xlu0 %330
      %333 = vset.pattern.permute.xlu0 1
      %334 = vperm.xlu0 %333, %v296
      %v335 = vpop.permute.xlu0 %334
      %v337 = vmul.f32 %v323, %v265
      %v338 = vmul.f32 %v327, %v267
      %v339 = vmul.f32 %v331, %v269
      %v340 = vmul.f32 %v335, %v271
      %345 = vrot.lane.b32.xlu0 %v337, 127
      %v346 = vpop.permute.xlu0 %345
      %347 = vrot.lane.b32.xlu0 %v338, 127
      %v348 = vpop.permute.xlu0 %347
      %349 = vrot.lane.b32.xlu0 %v339, 127
      %v350 = vpop.permute.xlu0 %349
      %351 = vrot.lane.b32.xlu0 %v340, 127
      %v352 = vpop.permute.xlu0 %351
      %v357 = vadd.f32 %v317, %v346
      %v358 = vadd.f32 %v318, %v348
      %v359 = vadd.f32 %v319, %v350
      %v360 = vadd.f32 %v320, %v352
      %361 = vset.pattern.permute.xlu0 2
      %362 = vperm.xlu0 %361, %v284
      %v363 = vpop.permute.xlu0 %362
      %365 = vset.pattern.permute.xlu0 2
      %366 = vperm.xlu0 %365, %v288
      %v367 = vpop.permute.xlu0 %366
      %369 = vset.pattern.permute.xlu0 2
      %370 = vperm.xlu0 %369, %v292
      %v371 = vpop.permute.xlu0 %370
      %373 = vset.pattern.permute.xlu0 2
      %374 = vperm.xlu0 %373, %v296
      %v375 = vpop.permute.xlu0 %374
      %v377 = vmul.f32 %v363, %v265
      %v378 = vmul.f32 %v367, %v267
      %v379 = vmul.f32 %v371, %v269
      %v380 = vmul.f32 %v375, %v271
      %385 = vrot.lane.b32.xlu0 %v377, 126
      %v386 = vpop.permute.xlu0 %385
      %387 = vrot.lane.b32.xlu0 %v378, 126
      %v388 = vpop.permute.xlu0 %387
      %389 = vrot.lane.b32.xlu0 %v379, 126
      %v390 = vpop.permute.xlu0 %389
      %391 = vrot.lane.b32.xlu0 %v380, 126
      %v392 = vpop.permute.xlu0 %391
      %v397 = vadd.f32 %v357, %v386
      %v398 = vadd.f32 %v358, %v388
      %v399 = vadd.f32 %v359, %v390
      %v400 = vadd.f32 %v360, %v392
      %401 = vset.pattern.permute.xlu0 3
      %402 = vperm.xlu0 %401, %v284
      %v403 = vpop.permute.xlu0 %402
      %405 = vset.pattern.permute.xlu0 3
      %406 = vperm.xlu0 %405, %v288
      %v407 = vpop.permute.xlu0 %406
      %409 = vset.pattern.permute.xlu0 3
      %410 = vperm.xlu0 %409, %v292
      %v411 = vpop.permute.xlu0 %410
      %413 = vset.pattern.permute.xlu0 3
      %414 = vperm.xlu0 %413, %v296
      %v415 = vpop.permute.xlu0 %414
      %v417 = vmul.f32 %v403, %v265
      %v418 = vmul.f32 %v403, %v266
      %v419 = vmul.f32 %v407, %v267
      %v420 = vmul.f32 %v407, %v268
      %v421 = vmul.f32 %v411, %v269
      %v422 = vmul.f32 %v411, %v270
      %v423 = vmul.f32 %v415, %v271
      %v424 = vmul.f32 %v415, %v272
      %vm433 = vcmask 1046528
      %v434 = vrot.slane %v417, 1
      %v435 = vrot.slane %v418, 1
      %v436 = vsel %vm433, %v434, %v435
      %v437 = vrot.slane %v419, 1
      %v438 = vrot.slane %v420, 1
      %v439 = vsel %vm433, %v437, %v438
      %v440 = vrot.slane %v421, 1
      %v441 = vrot.slane %v422, 1
      %v442 = vsel %vm433, %v440, %v441
      %v443 = vrot.slane %v423, 1
      %v444 = vrot.slane %v424, 1
      %v445 = vsel %vm433, %v443, %v444
      %v450 = vadd.f32 %v397, %v436
      %v451 = vadd.f32 %v398, %v439
      %v452 = vadd.f32 %v399, %v442
      %v453 = vadd.f32 %v400, %v445
      %454 = vset.pattern.permute.xlu0 4
      %455 = vperm.xlu0 %454, %v284
      %v456 = vpop.permute.xlu0 %455
      %458 = vset.pattern.permute.xlu0 4
      %459 = vperm.xlu0 %458, %v288
      %v460 = vpop.permute.xlu0 %459
      %462 = vset.pattern.permute.xlu0 4
      %463 = vperm.xlu0 %462, %v292
      %v464 = vpop.permute.xlu0 %463
      %466 = vset.pattern.permute.xlu0 4
      %467 = vperm.xlu0 %466, %v296
      %v468 = vpop.permute.xlu0 %467
      %v470 = vmul.f32 %v456, %v265
      %v471 = vmul.f32 %v456, %v266
      %v472 = vmul.f32 %v460, %v267
      %v473 = vmul.f32 %v460, %v268
      %v474 = vmul.f32 %v464, %v269
      %v475 = vmul.f32 %v464, %v270
      %v476 = vmul.f32 %v468, %v271
      %v477 = vmul.f32 %v468, %v272
      %v486 = vrot.slane %v470, 1
      %v487 = vrot.slane %v471, 1
      %v488 = vsel %vm433, %v486, %v487
      %v489 = vrot.slane %v472, 1
      %v490 = vrot.slane %v473, 1
      %v491 = vsel %vm433, %v489, %v490
      %v492 = vrot.slane %v474, 1
      %v493 = vrot.slane %v475, 1
      %v494 = vsel %vm433, %v492, %v493
      %v495 = vrot.slane %v476, 1
      %v496 = vrot.slane %v477, 1
      %v497 = vsel %vm433, %v495, %v496
      %498 = vrot.lane.b32.xlu0 %v488, 127
      %v499 = vpop.permute.xlu0 %498
      %500 = vrot.lane.b32.xlu0 %v491, 127
      %v501 = vpop.permute.xlu0 %500
      %502 = vrot.lane.b32.xlu0 %v494, 127
      %v503 = vpop.permute.xlu0 %502
      %504 = vrot.lane.b32.xlu0 %v497, 127
      %v505 = vpop.permute.xlu0 %504
      %v510 = vadd.f32 %v450, %v499
      %v511 = vadd.f32 %v451, %v501
      %v512 = vadd.f32 %v452, %v503
      %v513 = vadd.f32 %v453, %v505
      %514 = vset.pattern.permute.xlu0 5
      %515 = vperm.xlu0 %514, %v284
      %v516 = vpop.permute.xlu0 %515
      %518 = vset.pattern.permute.xlu0 5
      %519 = vperm.xlu0 %518, %v288
      %v520 = vpop.permute.xlu0 %519
      %522 = vset.pattern.permute.xlu0 5
      %523 = vperm.xlu0 %522, %v292
      %v524 = vpop.permute.xlu0 %523
      %526 = vset.pattern.permute.xlu0 5
      %527 = vperm.xlu0 %526, %v296
      %v528 = vpop.permute.xlu0 %527
      %v530 = vmul.f32 %v516, %v265
      %v531 = vmul.f32 %v516, %v266
      %v532 = vmul.f32 %v520, %v267
      %v533 = vmul.f32 %v520, %v268
      %v534 = vmul.f32 %v524, %v269
      %v535 = vmul.f32 %v524, %v270
      %v536 = vmul.f32 %v528, %v271
      %v537 = vmul.f32 %v528, %v272
      %v546 = vrot.slane %v530, 1
      %v547 = vrot.slane %v531, 1
      %v548 = vsel %vm433, %v546, %v547
      %v549 = vrot.slane %v532, 1
      %v550 = vrot.slane %v533, 1
      %v551 = vsel %vm433, %v549, %v550
      %v552 = vrot.slane %v534, 1
      %v553 = vrot.slane %v535, 1
      %v554 = vsel %vm433, %v552, %v553
      %v555 = vrot.slane %v536, 1
      %v556 = vrot.slane %v537, 1
      %v557 = vsel %vm433, %v555, %v556
      %558 = vrot.lane.b32.xlu0 %v548, 126
      %v559 = vpop.permute.xlu0 %558
      %560 = vrot.lane.b32.xlu0 %v551, 126
      %v561 = vpop.permute.xlu0 %560
      %562 = vrot.lane.b32.xlu0 %v554, 126
      %v563 = vpop.permute.xlu0 %562
      %564 = vrot.lane.b32.xlu0 %v557, 126
      %v565 = vpop.permute.xlu0 %564
      %v570 = vadd.f32 %v510, %v559
      %v571 = vadd.f32 %v511, %v561
      %v572 = vadd.f32 %v512, %v563
      %v573 = vadd.f32 %v513, %v565
      %574 = vset.pattern.permute.xlu0 6
      %575 = vperm.xlu0 %574, %v284
      %v576 = vpop.permute.xlu0 %575
      %578 = vset.pattern.permute.xlu0 6
      %579 = vperm.xlu0 %578, %v288
      %v580 = vpop.permute.xlu0 %579
      %582 = vset.pattern.permute.xlu0 6
      %583 = vperm.xlu0 %582, %v292
      %v584 = vpop.permute.xlu0 %583
      %586 = vset.pattern.permute.xlu0 6
      %587 = vperm.xlu0 %586, %v296
      %v588 = vpop.permute.xlu0 %587
      %v590 = vmul.f32 %v576, %v265
      %v591 = vmul.f32 %v576, %v266
      %v592 = vmul.f32 %v580, %v267
      %v593 = vmul.f32 %v580, %v268
      %v594 = vmul.f32 %v584, %v269
      %v595 = vmul.f32 %v584, %v270
      %v596 = vmul.f32 %v588, %v271
      %v597 = vmul.f32 %v588, %v272
      %vm606 = vcmask 1045504
      %v607 = vrot.slane %v590, 2
      %v608 = vrot.slane %v591, 2
      %v609 = vsel %vm606, %v607, %v608
      %v610 = vrot.slane %v592, 2
      %v611 = vrot.slane %v593, 2
      %v612 = vsel %vm606, %v610, %v611
      %v613 = vrot.slane %v594, 2
      %v614 = vrot.slane %v595, 2
      %v615 = vsel %vm606, %v613, %v614
      %v616 = vrot.slane %v596, 2
      %v617 = vrot.slane %v597, 2
      %v618 = vsel %vm606, %v616, %v617
      %v623 = vadd.f32 %v570, %v609
      %v624 = vadd.f32 %v571, %v612
      %v625 = vadd.f32 %v572, %v615
      %v626 = vadd.f32 %v573, %v618
      %627 = vset.pattern.permute.xlu0 7
      %628 = vperm.xlu0 %627, %v284
      %v629 = vpop.permute.xlu0 %628
      %631 = vset.pattern.permute.xlu0 7
      %632 = vperm.xlu0 %631, %v288
      %v633 = vpop.permute.xlu0 %632
      %635 = vset.pattern.permute.xlu0 7
      %636 = vperm.xlu0 %635, %v292
      %v637 = vpop.permute.xlu0 %636
      %639 = vset.pattern.permute.xlu0 7
      %640 = vperm.xlu0 %639, %v296
      %v641 = vpop.permute.xlu0 %640
      %v643 = vmul.f32 %v629, %v265
      %v644 = vmul.f32 %v629, %v266
      %v645 = vmul.f32 %v633, %v267
      %v646 = vmul.f32 %v633, %v268
      %v647 = vmul.f32 %v637, %v269
      %v648 = vmul.f32 %v637, %v270
      %v649 = vmul.f32 %v641, %v271
      %v650 = vmul.f32 %v641, %v272
      %v659 = vrot.slane %v643, 2
      %v660 = vrot.slane %v644, 2
      %v661 = vsel %vm606, %v659, %v660
      %v662 = vrot.slane %v645, 2
      %v663 = vrot.slane %v646, 2
      %v664 = vsel %vm606, %v662, %v663
      %v665 = vrot.slane %v647, 2
      %v666 = vrot.slane %v648, 2
      %v667 = vsel %vm606, %v665, %v666
      %v668 = vrot.slane %v649, 2
      %v669 = vrot.slane %v650, 2
      %v670 = vsel %vm606, %v668, %v669
      %671 = vrot.lane.b32.xlu0 %v661, 127
      %v672 = vpop.permute.xlu0 %671
      %673 = vrot.lane.b32.xlu0 %v664, 127
      %v674 = vpop.permute.xlu0 %673
      %675 = vrot.lane.b32.xlu0 %v667, 127
      %v676 = vpop.permute.xlu0 %675
      %677 = vrot.lane.b32.xlu0 %v670, 127
      %v678 = vpop.permute.xlu0 %677
      %v683 = vadd.f32 %v623, %v672
      %v684 = vadd.f32 %v624, %v674
      %v685 = vadd.f32 %v625, %v676
      %v686 = vadd.f32 %v626, %v678
      %687 = vset.pattern.permute.xlu0 8
      %688 = vperm.xlu0 %687, %v284
      %v689 = vpop.permute.xlu0 %688
      %691 = vset.pattern.permute.xlu0 8
      %692 = vperm.xlu0 %691, %v288
      %v693 = vpop.permute.xlu0 %692
      %695 = vset.pattern.permute.xlu0 8
      %696 = vperm.xlu0 %695, %v292
      %v697 = vpop.permute.xlu0 %696
      %699 = vset.pattern.permute.xlu0 8
      %700 = vperm.xlu0 %699, %v296
      %v701 = vpop.permute.xlu0 %700
      %v703 = vmul.f32 %v689, %v265
      %v704 = vmul.f32 %v689, %v266
      %v705 = vmul.f32 %v693, %v267
      %v706 = vmul.f32 %v693, %v268
      %v707 = vmul.f32 %v697, %v269
      %v708 = vmul.f32 %v697, %v270
      %v709 = vmul.f32 %v701, %v271
      %v710 = vmul.f32 %v701, %v272
      %v719 = vrot.slane %v703, 2
      %v720 = vrot.slane %v704, 2
      %v721 = vsel %vm606, %v719, %v720
      %v722 = vrot.slane %v705, 2
      %v723 = vrot.slane %v706, 2
      %v724 = vsel %vm606, %v722, %v723
      %v725 = vrot.slane %v707, 2
      %v726 = vrot.slane %v708, 2
      %v727 = vsel %vm606, %v725, %v726
      %v728 = vrot.slane %v709, 2
      %v729 = vrot.slane %v710, 2
      %v730 = vsel %vm606, %v728, %v729
      %731 = vrot.lane.b32.xlu0 %v721, 126
      %v732 = vpop.permute.xlu0 %731
      %733 = vrot.lane.b32.xlu0 %v724, 126
      %v734 = vpop.permute.xlu0 %733
      %735 = vrot.lane.b32.xlu0 %v727, 126
      %v736 = vpop.permute.xlu0 %735
      %737 = vrot.lane.b32.xlu0 %v730, 126
      %v738 = vpop.permute.xlu0 %737
      %v743 = vadd.f32 %v683, %v732
      %v744 = vadd.f32 %v684, %v734
      %v745 = vadd.f32 %v685, %v736
      %v746 = vadd.f32 %v686, %v738
      %v747 = vld [vmem:[%s2] sm:$0x1]
      %v748 = vld [vmem:[%s2 + $0x1] sm:$0x1]
      %v749 = vld [vmem:[%s2 + $0x2] sm:$0x1]
      %v750 = vld [vmem:[%s2 + $0x3] sm:$0x1]
      %v755 = vlaneseq
      %v756 = vshrl.u32 %v755, 7
      %v757 = vsub.s32 0, %v756
      %v758 = vrot.slane %v747, %v757
      %v759 = vlaneseq
      %v760 = vshrl.u32 %v759, 7
      %v761 = vsub.s32 0, %v760
      %v762 = vrot.slane %v748, %v761
      %v763 = vlaneseq
      %v764 = vshrl.u32 %v763, 7
      %v765 = vsub.s32 0, %v764
      %v766 = vrot.slane %v749, %v765
      %v767 = vlaneseq
      %v768 = vshrl.u32 %v767, 7
      %v769 = vsub.s32 0, %v768
      %v770 = vrot.slane %v750, %v769
      %771 = vset.pattern.permute.xlu0 0
      %772 = vperm.xlu0 %771, %v758
      %v773 = vpop.permute.xlu0 %772
      %775 = vset.pattern.permute.xlu0 0
      %776 = vperm.xlu0 %775, %v762
      %v777 = vpop.permute.xlu0 %776
      %779 = vset.pattern.permute.xlu0 0
      %780 = vperm.xlu0 %779, %v766
      %v781 = vpop.permute.xlu0 %780
      %783 = vset.pattern.permute.xlu0 0
      %784 = vperm.xlu0 %783, %v770
      %v785 = vpop.permute.xlu0 %784
      %v787 = vmul.f32 %v743, %v773
      %v788 = vmul.f32 %v744, %v777
      %v789 = vmul.f32 %v745, %v781
      %v790 = vmul.f32 %v746, %v785
      %v791 = vld [vmem:[%s3] sm:$0x1]
      %v792 = vld [vmem:[%s3 + $0x1] sm:$0x1]
      %v793 = vld [vmem:[%s3 + $0x2] sm:$0x1]
      %v794 = vld [vmem:[%s3 + $0x3] sm:$0x1]
      %v799 = vlaneseq
      %v800 = vshrl.u32 %v799, 7
      %v801 = vsub.s32 0, %v800
      %v802 = vrot.slane %v791, %v801
      %v803 = vlaneseq
      %v804 = vshrl.u32 %v803, 7
      %v805 = vsub.s32 0, %v804
      %v806 = vrot.slane %v792, %v805
      %v807 = vlaneseq
      %v808 = vshrl.u32 %v807, 7
      %v809 = vsub.s32 0, %v808
      %v810 = vrot.slane %v793, %v809
      %v811 = vlaneseq
      %v812 = vshrl.u32 %v811, 7
      %v813 = vsub.s32 0, %v812
      %v814 = vrot.slane %v794, %v813
      %815 = vset.pattern.permute.xlu0 0
      %816 = vperm.xlu0 %815, %v802
      %v817 = vpop.permute.xlu0 %816
      %819 = vset.pattern.permute.xlu0 0
      %820 = vperm.xlu0 %819, %v806
      %v821 = vpop.permute.xlu0 %820
      %823 = vset.pattern.permute.xlu0 0
      %824 = vperm.xlu0 %823, %v810
      %v825 = vpop.permute.xlu0 %824
      %827 = vset.pattern.permute.xlu0 0
      %828 = vperm.xlu0 %827, %v814
      %v829 = vpop.permute.xlu0 %828
      %v831 = vadd.f32 %v787, %v817
      %v832 = vadd.f32 %v788, %v821
      %v833 = vadd.f32 %v789, %v825
      %v834 = vadd.f32 %v790, %v829
      %vm835 = vcmask 64512
      %836 = vst.msk [vmem:[%s197] sm:$0xff] %vm835, %v831
      %837 = vst.msk [vmem:[%s197 + $0x8] sm:$0xff] %vm835, %v832
      %838 = vst.msk [vmem:[%s197 + $0x10] sm:$0xff] %vm835, %v833
      %839 = vst.msk [vmem:[%s197 + $0x18] sm:$0xff] %vm835, %v834
      %p840 = scmp.lt.s32.totalorder %s15, 1
      %s841 = scalar_select %p840, %s15, 1
      %s842 = smul.addr %s841, 4
      %s843 = smul.addr %s842, 8
      %s844 = scalar_lea.vmem %s4, %s843
      // Predicated region
      $region37: #{stage_forward_pallas.17} parent=35 // pred_check
        %p845 = pneg %p122
      $region38: #{stage_forward_pallas.17} parent=35 // pred_check_branch
        %847 = sbr.rel (%p845) target = $region40
      $region39: #{stage_forward_pallas.17} parent=35 // pred_region
        _
      $region40: #{stage_forward_pallas.17} parent=35 // pred_fallthru
        _
    $region36: #{stage_forward_pallas.17} parent=5 // pred_fallthru
      _
    %p848 = scmp.le.s32.totalorder 2, %s10
    // Predicated region
    $region41: #{stage_forward_pallas.17} parent=5 // pred_check
      %p849 = pneg %p848
    $region42: #{stage_forward_pallas.17} parent=5 // pred_check_branch
      %851 = sbr.rel (%p849) target = $region44
    $region43: #{stage_forward_pallas.17} parent=5 // pred_region
      %s852 = ssub.s32 %s10, 2
      // Predicated region
      $region45: #{stage_forward_pallas.17} parent=43 // pred_check
        %p853 = pneg %p128
      $region46: #{stage_forward_pallas.17} parent=43 // pred_check_branch
        %855 = sbr.rel (%p853) target = $region48
      $region47: #{stage_forward_pallas.17} parent=43 // pred_region
        %p856 = scmp.lt.s32.totalorder %s16, 1
        %s857 = scalar_select %p856, %s16, 1
        %s858 = smul.addr %s857, 4
        %s859 = smul.addr %s858, 8
        %s860 = scalar_lea.vmem %s4, %s859
      $region48: #{stage_forward_pallas.17} parent=43 // pred_fallthru
        _
    $region44: #{stage_forward_pallas.17} parent=5 // pred_fallthru
      _
  $region6: #{stage_forward_pallas.17} parent=0 // loop_footer
    %s14 = sadd.s32 1, %s10
  $region7: #{stage_forward_pallas.17} parent=0 // loop_footer_branch
    %9 = sbr.rel target = $region3
  $region8: #{stage_forward_pallas.17} parent=0 // loop_exit
    _

// kernel: stage_forward_pallas.19
$region0: #{stage_forward_pallas.19}
  #allocation0 [shape = 'u32[]', space=smem, size = 0x4, offset = 0x4, fixed_abs, tag = 'smem constant byte address 0x4 - core index']
  #allocation1 [shape = 'u32[144,128]{1,0:T(1,128)}', space=vmem, size = 0x12000, scoped, tag = 'internal scratch']
  %s0 = inlined_call_operand.vmem [shape: f32[2,8,64], index: 0, kind: input, shape index: {}]
  %s1 = inlined_call_operand.vmem [shape: f32[2,4,64], index: 1, kind: input, shape index: {}]
  %s2 = inlined_call_operand.vmem [shape: f32[2,8,64], index: 2, kind: output, shape index: {}]
  %s3 = sld [smem:[#allocation0]]
  $region41: #{stage_forward_pallas.19} parent=0
    _
  %s5 = ssub.s32 1, %s3
  %s6 = scalar_select 0, %s5, %s3
  loop: start=0, step=1, limit=4
  $region2: #{stage_forward_pallas.19} parent=0 // loop_pre_header
    _
  $region3: #{stage_forward_pallas.19} parent=0 // loop_header
    %s8 = sphi 0, %s12
    %p9 = scmp.ge.s32.totalorder %s8, 4
    %s18 = sphi 0, %s20
    %s21 = sphi 0, %s18
    %s22 = sphi 0, %s21
    %s38 = sphi 0, %s22
    %s44 = sphi 0, %s46
    %s47 = sphi 0, %s44
    %s48 = sphi 0, %s47
    %s64 = sphi 0, %s48
    %s70 = sphi 0, %s72
    %s73 = sphi 0, %s70
    %s74 = sphi 0, %s73
    %s90 = sphi 0, %s74
  $region4: #{stage_forward_pallas.19} parent=0 // loop_header_branch
    %11 = sbr.rel (%p9) target = $region8
  $region5: #{stage_forward_pallas.19} parent=0 // loop_body
    %s13 = ssub.s32 %s8, 1
    %s14 = ssub.s32 %s8, 2
    %s15 = sadd.s32 %s8, 1
    %s16 = ssub.s32 %s8, %s15
    %p17 = scmp.eq.s32.totalorder %s16, 0
    %s19 = sadd.s32 %s18, 1
    %s20 = scalar_select %p17, %s18, %s19
    %p23 = pneg %p17
    %p24 = scmp.eq.s32.totalorder %s8, 1
    %p25 = por %p23, %p24
    %p26 = scmp.ne.s32.totalorder %s18, %s21
    %p27 = scmp.eq.s32.totalorder %s8, 0
    %p28 = por %p26, %p27
    %p29 = scmp.ne.s32.totalorder %s18, %s21
    %p30 = scmp.eq.s32.totalorder %s13, 1
    %p31 = por %p29, %p30
    %p32 = scmp.ne.s32.totalorder %s21, %s22
    %p33 = scmp.eq.s32.totalorder %s13, 0
    %p34 = por %p32, %p33
    %p35 = scmp.ne.s32.totalorder %s21, %s22
    %p36 = scmp.eq.s32.totalorder %s14, 1
    %p37 = por %p35, %p36
    %p39 = scmp.ne.s32.totalorder %s22, %s38
    %p40 = scmp.eq.s32.totalorder %s14, 0
    %p41 = por %p39, %p40
    %s42 = ssub.s32 %s8, %s15
    %p43 = scmp.eq.s32.totalorder %s42, 0
    %s45 = sadd.s32 %s44, 1
    %s46 = scalar_select %p43, %s44, %s45
    %p49 = pneg %p43
    %p50 = scmp.eq.s32.totalorder %s8, 1
    %p51 = por %p49, %p50
    %p52 = scmp.ne.s32.totalorder %s44, %s47
    %p53 = scmp.eq.s32.totalorder %s8, 0
    %p54 = por %p52, %p53
    %p55 = scmp.ne.s32.totalorder %s44, %s47
    %p56 = scmp.eq.s32.totalorder %s13, 1
    %p57 = por %p55, %p56
    %p58 = scmp.ne.s32.totalorder %s47, %s48
    %p59 = scmp.eq.s32.totalorder %s13, 0
    %p60 = por %p58, %p59
    %p61 = scmp.ne.s32.totalorder %s47, %s48
    %p62 = scmp.eq.s32.totalorder %s14, 1
    %p63 = por %p61, %p62
    %p65 = scmp.ne.s32.totalorder %s48, %s64
    %p66 = scmp.eq.s32.totalorder %s14, 0
    %p67 = por %p65, %p66
    %s68 = ssub.s32 %s8, %s15
    %p69 = scmp.eq.s32.totalorder %s68, 0
    %s71 = sadd.s32 %s70, 1
    %s72 = scalar_select %p69, %s70, %s71
    %p75 = pneg %p69
    %p76 = scmp.eq.s32.totalorder %s8, 1
    %p77 = por %p75, %p76
    %p78 = scmp.ne.s32.totalorder %s70, %s73
    %p79 = scmp.eq.s32.totalorder %s8, 0
    %p80 = por %p78, %p79
    %p81 = scmp.ne.s32.totalorder %s70, %s73
    %p82 = scmp.eq.s32.totalorder %s13, 1
    %p83 = por %p81, %p82
    %p84 = scmp.ne.s32.totalorder %s73, %s74
    %p85 = scmp.eq.s32.totalorder %s13, 0
    %p86 = por %p84, %p85
    %p87 = scmp.ne.s32.totalorder %s73, %s74
    %p88 = scmp.eq.s32.totalorder %s14, 1
    %p89 = por %p87, %p88
    %p91 = scmp.ne.s32.totalorder %s74, %s90
    %p92 = scmp.eq.s32.totalorder %s14, 0
    %p93 = por %p91, %p92
    %p94 = scmp.le.s32.totalorder 1, %s8
    %p95 = scmp.lt.s32.totalorder %s8, 3
    %p96 = pnand %p94, %p95
    %p97 = pneg %p96
    // Predicated region
    $region9: #{stage_forward_pallas.19} parent=5 // pred_check
      _
    $region10: #{stage_forward_pallas.19} parent=5 // pred_check_branch
      %99 = sbr.rel (%p96) target = $region12
    $region11: #{stage_forward_pallas.19} parent=5 // pred_region
      %s100 = ssub.s32 %s8, 1
    $region12: #{stage_forward_pallas.19} parent=5 // pred_fallthru
      _
    %p101 = scmp.lt.s32.totalorder %s8, 2
    // Predicated region
    $region13: #{stage_forward_pallas.19} parent=5 // pred_check
      %p102 = pneg %p101
    $region14: #{stage_forward_pallas.19} parent=5 // pred_check_branch
      %104 = sbr.rel (%p102) target = $region16
    $region15: #{stage_forward_pallas.19} parent=5 // pred_region
      // Predicated region
      $region17: #{stage_forward_pallas.19} parent=15 // pred_check
        %p105 = pneg %p28
      $region18: #{stage_forward_pallas.19} parent=15 // pred_check_branch
        %107 = sbr.rel (%p105) target = $region20
      $region19: #{stage_forward_pallas.19} parent=15 // pred_region
        %p108 = scmp.lt.s32.totalorder %s8, 1
        %s109 = scalar_select %p108, %s8, 1
        %s110 = smul.addr %s109, 8
        %s111 = scalar_lea.vmem %s0, %s110
      $region20: #{stage_forward_pallas.19} parent=15 // pred_fallthru
        _
      // Predicated region
      $region21: #{stage_forward_pallas.19} parent=15 // pred_check
        %p112 = pneg %p54
      $region22: #{stage_forward_pallas.19} parent=15 // pred_check_branch
        %114 = sbr.rel (%p112) target = $region24
      $region23: #{stage_forward_pallas.19} parent=15 // pred_region
        %p115 = scmp.lt.s32.totalorder %s8, 1
        %s116 = scalar_select %p115, %s8, 1
        %s117 = smul.addr %s116, 4
        %s118 = scalar_lea.vmem %s1, %s117
      $region24: #{stage_forward_pallas.19} parent=15 // pred_fallthru
        _
    $region16: #{stage_forward_pallas.19} parent=5 // pred_fallthru
      _
    %p119 = scmp.le.s32.totalorder 1, %s8
    %p120 = scmp.lt.s32.totalorder %s8, 3
    %p121 = pnand %p119, %p120
    %p122 = pneg %p121
    // Predicated region
    $region25: #{stage_forward_pallas.19} parent=5 // pred_check
      _
    $region26: #{stage_forward_pallas.19} parent=5 // pred_check_branch
      %124 = sbr.rel (%p121) target = $region28
    $region27: #{stage_forward_pallas.19} parent=5 // pred_region
      %s125 = ssub.s32 %s8, 1
      %p126 = scmp.lt.s32.totalorder %s13, 1
      %s127 = scalar_select %p126, %s13, 1
      %s128 = smul.addr %s127, 8
      %s129 = scalar_lea.vmem %s0, %s128
      %p130 = pneg %p34
      %p131 = pneg %p31
      %p132 = scmp.lt.s32.totalorder %s13, 1
      %s133 = scalar_select %p132, %s13, 1
      %s134 = smul.addr %s133, 4
      %s135 = scalar_lea.vmem %s1, %s134
      %p136 = pneg %p60
      %p137 = pneg %p57
      %p138 = pneg %p86
      %p139 = pneg %p83
      %p140 = scmp.lt.s32.totalorder %s13, 1
      %s141 = scalar_select %p140, %s13, 1
      %s142 = smul.addr %s141, 8
      %s143 = scalar_lea.vmem %s2, %s142
      %p144 = scmp.lt.s32.totalorder %s13, 1
      %s145 = scalar_select %p144, %s13, 1
      %s146 = smul.addr %s145, 8
      %s147 = scalar_lea.vmem %s0, %s146
      %p148 = scmp.lt.s32.totalorder %s13, 1
      %s149 = scalar_select %p148, %s13, 1
      %s150 = smul.addr %s149, 4
      %s151 = scalar_lea.vmem %s1, %s150
      %p152 = scmp.lt.s32.totalorder %s13, 1
      %s153 = scalar_select %p152, %s13, 1
      %s154 = smul.addr %s153, 8
      %s155 = scalar_lea.vmem %s2, %s154
      %v156 = vld [vmem:[%s147] sm:$0xff]
      %v157 = vld [vmem:[%s151] sm:$0xf]
      %v159 = vrot.slane %v157, 7
      %v162 = vrot.slane %v156, 7
      %v164 = vrot.slane %v157, 6
      %v166 = vrot.slane %v156, 6
      %v168 = vrot.slane %v157, 5
      %v170 = vrot.slane %v156, 5
      %v172 = vrot.slane %v157, 4
      %vm174 = vcmask 1040384
      %v175 = vsel %vm174, %v156, %v159
      %vm176 = vcmask 1041408
      %v177 = vsel %vm176, %v175, %v162
      %vm178 = vcmask 1042432
      %v179 = vsel %vm178, %v177, %v164
      %vm180 = vcmask 1043456
      %v181 = vsel %vm180, %v179, %v166
      %vm182 = vcmask 1044480
      %v183 = vsel %vm182, %v181, %v168
      %vm184 = vcmask 1045504
      %v185 = vsel %vm184, %v183, %v170
      %vm186 = vcmask 1046528
      %v187 = vsel %vm186, %v185, %v172
      %vm188 = vcmask 523264
      %189 = vst.msk [vmem:[%s155] sm:$0xff] %vm188, %v187
      %p190 = scmp.lt.s32.totalorder %s13, 1
      %s191 = scalar_select %p190, %s13, 1
      %s192 = smul.addr %s191, 8
      %s193 = scalar_lea.vmem %s2, %s192
      // Predicated region
      $region29: #{stage_forward_pallas.19} parent=27 // pred_check
        %p194 = pneg %p83
      $region30: #{stage_forward_pallas.19} parent=27 // pred_check_branch
        %196 = sbr.rel (%p194) target = $region32
      $region31: #{stage_forward_pallas.19} parent=27 // pred_region
        _
      $region32: #{stage_forward_pallas.19} parent=27 // pred_fallthru
        _
    $region28: #{stage_forward_pallas.19} parent=5 // pred_fallthru
      _
    %p197 = scmp.le.s32.totalorder 2, %s8
    // Predicated region
    $region33: #{stage_forward_pallas.19} parent=5 // pred_check
      %p198 = pneg %p197
    $region34: #{stage_forward_pallas.19} parent=5 // pred_check_branch
      %200 = sbr.rel (%p198) target = $region36
    $region35: #{stage_forward_pallas.19} parent=5 // pred_region
      %s201 = ssub.s32 %s8, 2
      // Predicated region
      $region37: #{stage_forward_pallas.19} parent=35 // pred_check
        %p202 = pneg %p89
      $region38: #{stage_forward_pallas.19} parent=35 // pred_check_branch
        %204 = sbr.rel (%p202) target = $region40
      $region39: #{stage_forward_pallas.19} parent=35 // pred_region
        %p205 = scmp.lt.s32.totalorder %s14, 1
        %s206 = scalar_select %p205, %s14, 1
        %s207 = smul.addr %s206, 8
        %s208 = scalar_lea.vmem %s2, %s207
      $region40: #{stage_forward_pallas.19} parent=35 // pred_fallthru
        _
    $region36: #{stage_forward_pallas.19} parent=5 // pred_fallthru
      _
  $region6: #{stage_forward_pallas.19} parent=0 // loop_footer
    %s12 = sadd.s32 1, %s8
  $region7: #{stage_forward_pallas.19} parent=0 // loop_footer_branch
    %7 = sbr.rel target = $region3
  $region8: #{stage_forward_pallas.19} parent=0 // loop_exit
    _

// kernel: stage_forward_pallas.18
$region0: #{stage_forward_pallas.18}
  #allocation0 [shape = 'u32[]', space=smem, size = 0x4, offset = 0x4, fixed_abs, tag = 'smem constant byte address 0x4 - core index']
  #allocation1 [shape = 'u32[144,128]{1,0:T(1,128)}', space=vmem, size = 0x12000, scoped, tag = 'internal scratch']
  %s0 = inlined_call_operand.vmem [shape: f32[2,4,64], index: 0, kind: input, shape index: {}]
  %s1 = inlined_call_operand.vmem [shape: f32[4,4], index: 1, kind: input, shape index: {}]
  %s2 = inlined_call_operand.vmem [shape: f32[4,1], index: 2, kind: input, shape index: {}]
  %s3 = inlined_call_operand.vmem [shape: f32[4,1], index: 3, kind: input, shape index: {}]
  %s4 = inlined_call_operand.vmem [shape: f32[2,4,64], index: 4, kind: output, shape index: {}]
  %s5 = sld [smem:[#allocation0]]
  $region49: #{stage_forward_pallas.18} parent=0
    _
  %s7 = ssub.s32 1, %s5
  %s8 = scalar_select 0, %s7, %s5
  loop: start=0, step=1, limit=4
  $region2: #{stage_forward_pallas.18} parent=0 // loop_pre_header
    _
  $region3: #{stage_forward_pallas.18} parent=0 // loop_header
    %s10 = sphi 0, %s14
    %p11 = scmp.ge.s32.totalorder %s10, 4
    %s20 = sphi 0, %s22
    %s23 = sphi 0, %s20
    %s24 = sphi 0, %s23
    %s40 = sphi 0, %s24
    %s44 = sphi 0, %s44
    %s46 = sphi 0, %s44
    %s47 = sphi 0, %s46
    %s61 = sphi 0, %s47
    %s65 = sphi 0, %s65
    %s67 = sphi 0, %s65
    %s68 = sphi 0, %s67
    %s82 = sphi 0, %s68
    %s86 = sphi 0, %s86
    %s88 = sphi 0, %s86
    %s89 = sphi 0, %s88
    %s103 = sphi 0, %s89
    %s109 = sphi 0, %s111
    %s112 = sphi 0, %s109
    %s113 = sphi 0, %s112
    %s129 = sphi 0, %s113
  $region4: #{stage_forward_pallas.18} parent=0 // loop_header_branch
    %13 = sbr.rel (%p11) target = $region8
  $region5: #{stage_forward_pallas.18} parent=0 // loop_body
    %s15 = ssub.s32 %s10, 1
    %s16 = ssub.s32 %s10, 2
    %s17 = sadd.s32 %s10, 1
    %s18 = ssub.s32 %s10, %s17
    %p19 = scmp.eq.s32.totalorder %s18, 0
    %s21 = sadd.s32 %s20, 1
    %s22 = scalar_select %p19, %s20, %s21
    %p25 = pneg %p19
    %p26 = scmp.eq.s32.totalorder %s10, 1
    %p27 = por %p25, %p26
    %p28 = scmp.ne.s32.totalorder %s20, %s23
    %p29 = scmp.eq.s32.totalorder %s10, 0
    %p30 = por %p28, %p29
    %p31 = scmp.ne.s32.totalorder %s20, %s23
    %p32 = scmp.eq.s32.totalorder %s15, 1
    %p33 = por %p31, %p32
    %p34 = scmp.ne.s32.totalorder %s23, %s24
    %p35 = scmp.eq.s32.totalorder %s15, 0
    %p36 = por %p34, %p35
    %p37 = scmp.ne.s32.totalorder %s23, %s24
    %p38 = scmp.eq.s32.totalorder %s16, 1
    %p39 = por %p37, %p38
    %p41 = scmp.ne.s32.totalorder %s24, %s40
    %p42 = scmp.eq.s32.totalorder %s16, 0
    %p43 = por %p41, %p42
    %s45 = sadd.s32 %s44, 1
    %p48 = scmp.eq.s32.totalorder %s10, 1
    %p49 = scmp.ne.s32.totalorder %s44, %s46
    %p50 = scmp.eq.s32.totalorder %s10, 0
    %p51 = por %p49, %p50
    %p52 = scmp.ne.s32.totalorder %s44, %s46
    %p53 = scmp.eq.s32.totalorder %s15, 1
    %p54 = por %p52, %p53
    %p55 = scmp.ne.s32.totalorder %s46, %s47
    %p56 = scmp.eq.s32.totalorder %s15, 0
    %p57 = por %p55, %p56
    %p58 = scmp.ne.s32.totalorder %s46, %s47
    %p59 = scmp.eq.s32.totalorder %s16, 1
    %p60 = por %p58, %p59
    %p62 = scmp.ne.s32.totalorder %s47, %s61
    %p63 = scmp.eq.s32.totalorder %s16, 0
    %p64 = por %p62, %p63
    %s66 = sadd.s32 %s65, 1
    %p69 = scmp.eq.s32.totalorder %s10, 1
    %p70 = scmp.ne.s32.totalorder %s65, %s67
    %p71 = scmp.eq.s32.totalorder %s10, 0
    %p72 = por %p70, %p71
    %p73 = scmp.ne.s32.totalorder %s65, %s67
    %p74 = scmp.eq.s32.totalorder %s15, 1
    %p75 = por %p73, %p74
    %p76 = scmp.ne.s32.totalorder %s67, %s68
    %p77 = scmp.eq.s32.totalorder %s15, 0
    %p78 = por %p76, %p77
    %p79 = scmp.ne.s32.totalorder %s67, %s68
    %p80 = scmp.eq.s32.totalorder %s16, 1
    %p81 = por %p79, %p80
    %p83 = scmp.ne.s32.totalorder %s68, %s82
    %p84 = scmp.eq.s32.totalorder %s16, 0
    %p85 = por %p83, %p84
    %s87 = sadd.s32 %s86, 1
    %p90 = scmp.eq.s32.totalorder %s10, 1
    %p91 = scmp.ne.s32.totalorder %s86, %s88
    %p92 = scmp.eq.s32.totalorder %s10, 0
    %p93 = por %p91, %p92
    %p94 = scmp.ne.s32.totalorder %s86, %s88
    %p95 = scmp.eq.s32.totalorder %s15, 1
    %p96 = por %p94, %p95
    %p97 = scmp.ne.s32.totalorder %s88, %s89
    %p98 = scmp.eq.s32.totalorder %s15, 0
    %p99 = por %p97, %p98
    %p100 = scmp.ne.s32.totalorder %s88, %s89
    %p101 = scmp.eq.s32.totalorder %s16, 1
    %p102 = por %p100, %p101
    %p104 = scmp.ne.s32.totalorder %s89, %s103
    %p105 = scmp.eq.s32.totalorder %s16, 0
    %p106 = por %p104, %p105
    %s107 = ssub.s32 %s10, %s17
    %p108 = scmp.eq.s32.totalorder %s107, 0
    %s110 = sadd.s32 %s109, 1
    %s111 = scalar_select %p108, %s109, %s110
    %p114 = pneg %p108
    %p115 = scmp.eq.s32.totalorder %s10, 1
    %p116 = por %p114, %p115
    %p117 = scmp.ne.s32.totalorder %s109, %s112
    %p118 = scmp.eq.s32.totalorder %s10, 0
    %p119 = por %p117, %p118
    %p120 = scmp.ne.s32.totalorder %s109, %s112
    %p121 = scmp.eq.s32.totalorder %s15, 1
    %p122 = por %p120, %p121
    %p123 = scmp.ne.s32.totalorder %s112, %s113
    %p124 = scmp.eq.s32.totalorder %s15, 0
    %p125 = por %p123, %p124
    %p126 = scmp.ne.s32.totalorder %s112, %s113
    %p127 = scmp.eq.s32.totalorder %s16, 1
    %p128 = por %p126, %p127
    %p130 = scmp.ne.s32.totalorder %s113, %s129
    %p131 = scmp.eq.s32.totalorder %s16, 0
    %p132 = por %p130, %p131
    %p133 = scmp.le.s32.totalorder 1, %s10
    %p134 = scmp.lt.s32.totalorder %s10, 3
    %p135 = pnand %p133, %p134
    %p136 = pneg %p135
    // Predicated region
    $region9: #{stage_forward_pallas.18} parent=5 // pred_check
      _
    $region10: #{stage_forward_pallas.18} parent=5 // pred_check_branch
      %138 = sbr.rel (%p135) target = $region12
    $region11: #{stage_forward_pallas.18} parent=5 // pred_region
      %s139 = ssub.s32 %s10, 1
      // Predicated region
      $region13: #{stage_forward_pallas.18} parent=11 // pred_check
        %p140 = pneg %p57
      $region14: #{stage_forward_pallas.18} parent=11 // pred_check_branch
        %142 = sbr.rel (%p140) target = $region16
      $region15: #{stage_forward_pallas.18} parent=11 // pred_region
        _
      $region16: #{stage_forward_pallas.18} parent=11 // pred_fallthru
        _
      // Predicated region
      $region17: #{stage_forward_pallas.18} parent=11 // pred_check
        %p143 = pneg %p78
      $region18: #{stage_forward_pallas.18} parent=11 // pred_check_branch
        %145 = sbr.rel (%p143) target = $region20
      $region19: #{stage_forward_pallas.18} parent=11 // pred_region
        _
      $region20: #{stage_forward_pallas.18} parent=11 // pred_fallthru
        _
      // Predicated region
      $region21: #{stage_forward_pallas.18} parent=11 // pred_check
        %p146 = pneg %p99
      $region22: #{stage_forward_pallas.18} parent=11 // pred_check_branch
        %148 = sbr.rel (%p146) target = $region24
      $region23: #{stage_forward_pallas.18} parent=11 // pred_region
        _
      $region24: #{stage_forward_pallas.18} parent=11 // pred_fallthru
        _
    $region12: #{stage_forward_pallas.18} parent=5 // pred_fallthru
      _
    %p149 = scmp.lt.s32.totalorder %s10, 2
    // Predicated region
    $region25: #{stage_forward_pallas.18} parent=5 // pred_check
      %p150 = pneg %p149
    $region26: #{stage_forward_pallas.18} parent=5 // pred_check_branch
      %152 = sbr.rel (%p150) target = $region28
    $region27: #{stage_forward_pallas.18} parent=5 // pred_region
      // Predicated region
      $region29: #{stage_forward_pallas.18} parent=27 // pred_check
        %p153 = pneg %p30
      $region30: #{stage_forward_pallas.18} parent=27 // pred_check_branch
        %155 = sbr.rel (%p153) target = $region32
      $region31: #{stage_forward_pallas.18} parent=27 // pred_region
        %p156 = scmp.lt.s32.totalorder %s10, 1
        %s157 = scalar_select %p156, %s10, 1
        %s158 = smul.addr %s157, 4
        %s159 = scalar_lea.vmem %s0, %s158
      $region32: #{stage_forward_pallas.18} parent=27 // pred_fallthru
        _
    $region28: #{stage_forward_pallas.18} parent=5 // pred_fallthru
      _
    %p160 = scmp.le.s32.totalorder 1, %s10
    %p161 = scmp.lt.s32.totalorder %s10, 3
    %p162 = pnand %p160, %p161
    %p163 = pneg %p162
    // Predicated region
    $region33: #{stage_forward_pallas.18} parent=5 // pred_check
      _
    $region34: #{stage_forward_pallas.18} parent=5 // pred_check_branch
      %165 = sbr.rel (%p162) target = $region36
    $region35: #{stage_forward_pallas.18} parent=5 // pred_region
      %s166 = ssub.s32 %s10, 1
      %p167 = scmp.lt.s32.totalorder %s15, 1
      %s168 = scalar_select %p167, %s15, 1
      %s169 = smul.addr %s168, 4
      %s170 = scalar_lea.vmem %s0, %s169
      %p171 = pneg %p36
      %p172 = pneg %p33
      %p173 = pneg %p57
      %p174 = pneg %p54
      %p175 = pneg %p78
      %p176 = pneg %p75
      %p177 = pneg %p99
      %p178 = pneg %p96
      %p179 = pneg %p125
      %p180 = pneg %p122
      %p181 = scmp.lt.s32.totalorder %s15, 1
      %s182 = scalar_select %p181, %s15, 1
      %s183 = smul.addr %s182, 4
      %s184 = scalar_lea.vmem %s4, %s183
      %p185 = scmp.lt.s32.totalorder %s15, 1
      %s186 = scalar_select %p185, %s15, 1
      %s187 = smul.addr %s186, 4
      %s188 = scalar_lea.vmem %s0, %s187
      %p189 = scmp.lt.s32.totalorder %s15, 1
      %s190 = scalar_select %p189, %s15, 1
      %s191 = smul.addr %s190, 4
      %s192 = scalar_lea.vmem %s4, %s191
      %v193 = vld [vmem:[%s188] sm:$0xf]
      %v194 = vld [vmem:[%s1] sm:$0xf]
      %vm195 = vcmask 31744
      %v197 = vsel %vm195, %v194, 0
      %vm199 = vcmask 1043456
      %v201 = vsel %vm199, %v193, 0
      %203 = vmatprep.subr.mxu0 0.0
      %204 = vmatpush1.msra.mxu0 0.0
      %205 = vmatprep.subr.mxu0 0.0
      %206 = vmatpush1.msra.mxu0 0.0
      %207 = vmatprep.subr.mxu0 0.0
      %208 = vmatpush1.msra.mxu0 0.0
      %209 = vmatprep.subr.mxu0 0.0
      %210 = vmatpush1.msra.mxu0 0.0
      %211 = vmatprep.subr.mxu0 0.0
      %212 = vmatpush1.msra.mxu0 0.0
      %213 = vmatprep.subr.mxu0 0.0
      %214 = vmatpush1.msra.mxu0 0.0
      %215 = vmatprep.subr.mxu0 0.0
      %216 = vmatpush1.msra.mxu0 0.0
      %217 = vmatprep.subr.mxu0 0.0
      %218 = vmatpush1.msra.mxu0 0.0
      %219 = vmatprep.subr.mxu0 0.0
      %220 = vmatpush1.msra.mxu0 0.0
      %221 = vmatprep.subr.mxu0 0.0
      %222 = vmatpush1.msra.mxu0 0.0
      %223 = vmatprep.subr.mxu0 0.0
      %224 = vmatpush1.msra.mxu0 0.0
      %225 = vmatprep.subr.mxu0 0.0
      %226 = vmatpush1.msra.mxu0 0.0
      %227 = vmatprep.subr.mxu0 0.0
      %228 = vmatpush1.msra.mxu0 0.0
      %229 = vmatprep.subr.mxu0 0.0
      %230 = vmatpush1.msra.mxu0 0.0
      %231 = vmatprep.subr.mxu0 0.0
      %232 = vmatpush1.msra.mxu0 0.0
      %233 = vmatprep.subr.mxu0 0.0
      %234 = vmatpush1.msra.mxu0 %v201
      %235 = vmatprep.subr.mxu0 0.0
      %236 = vmatpush2.msra.mxu0 0.0
      %237 = vmatprep.subr.mxu0 0.0
      %238 = vmatpush2.msra.mxu0 0.0
      %239 = vmatprep.subr.mxu0 0.0
      %240 = vmatpush2.msra.mxu0 0.0
      %241 = vmatprep.subr.mxu0 0.0
      %242 = vmatpush2.msra.mxu0 0.0
      %243 = vmatprep.subr.mxu0 0.0
      %244 = vmatpush2.msra.mxu0 0.0
      %245 = vmatprep.subr.mxu0 0.0
      %246 = vmatpush2.msra.mxu0 0.0
      %247 = vmatprep.subr.mxu0 0.0
      %248 = vmatpush2.msra.mxu0 0.0
      %249 = vmatprep.subr.mxu0 0.0
      %250 = vmatpush2.msra.mxu0 0.0
      %251 = vmatprep.subr.mxu0 0.0
      %252 = vmatpush2.msra.mxu0 0.0
      %253 = vmatprep.subr.mxu0 0.0
      %254 = vmatpush2.msra.mxu0 0.0
      %255 = vmatprep.subr.mxu0 0.0
      %256 = vmatpush2.msra.mxu0 0.0
      %257 = vmatprep.subr.mxu0 0.0
      %258 = vmatpush2.msra.mxu0 0.0
      %259 = vmatprep.subr.mxu0 0.0
      %260 = vmatpush2.msra.mxu0 0.0
      %261 = vmatprep.subr.mxu0 0.0
      %262 = vmatpush2.msra.mxu0 0.0
      %263 = vmatprep.subr.mxu0 0.0
      %264 = vmatpush2.msra.mxu0 0.0
      %265 = vmatprep.subr.mxu0 0.0
      %266 = vmatpush2.msra.mxu0 0.0
      %267 = vmatprep.mubr.f32.mxu0 0.0
      %268 = vmatmul.mubr.f32.gmra.mxu0 %v197
      %v269 = vpop.f32.mrf.mxu0
      %v270 = vadd.f32 0.0, %v269
      %v271 = vpop.f32.mrf.mxu0
      %272 = vdwg.mxu0
      %v273 = vld [vmem:[%s2] sm:$0xf]
      %275 = vset.pattern.permute.xlu0 0
      %276 = vperm.xlu0 %275, %v273
      %v277 = vpop.permute.xlu0 %276
      %v279 = vmul.f32 %v270, %v277
      %v280 = vld [vmem:[%s3] sm:$0xf]
      %282 = vset.pattern.permute.xlu0 0
      %283 = vperm.xlu0 %282, %v280
      %v284 = vpop.permute.xlu0 %283
      %v286 = vadd.f32 %v279, %v284
      %v287 = vmax.f32 %v286, 0.0
      %vm288 = vcmask 519168
      %289 = vst.msk [vmem:[%s192] sm:$0xf] %vm288, %v287
      %p290 = scmp.lt.s32.totalorder %s15, 1
      %s291 = scalar_select %p290, %s15, 1
      %s292 = smul.addr %s291, 4
      %s293 = scalar_lea.vmem %s4, %s292
      // Predicated region
      $region37: #{stage_forward_pallas.18} parent=35 // pred_check
        %p294 = pneg %p122
      $region38: #{stage_forward_pallas.18} parent=35 // pred_check_branch
        %296 = sbr.rel (%p294) target = $region40
      $region39: #{stage_forward_pallas.18} parent=35 // pred_region
        _
      $region40: #{stage_forward_pallas.18} parent=35 // pred_fallthru
        _
    $region36: #{stage_forward_pallas.18} parent=5 // pred_fallthru
      _
    %p297 = scmp.le.s32.totalorder 2, %s10
    // Predicated region
    $region41: #{stage_forward_pallas.18} parent=5 // pred_check
      %p298 = pneg %p297
    $region42: #{stage_forward_pallas.18} parent=5 // pred_check_branch
      %300 = sbr.rel (%p298) target = $region44
    $region43: #{stage_forward_pallas.18} parent=5 // pred_region
      %s301 = ssub.s32 %s10, 2
      // Predicated region
      $region45: #{stage_forward_pallas.18} parent=43 // pred_check
        %p302 = pneg %p128
      $region46: #{stage_forward_pallas.18} parent=43 // pred_check_branch
        %304 = sbr.rel (%p302) target = $region48
      $region47: #{stage_forward_pallas.18} parent=43 // pred_region
        %p305 = scmp.lt.s32.totalorder %s16, 1
        %s306 = scalar_select %p305, %s16, 1
        %s307 = smul.addr %s306, 4
        %s308 = scalar_lea.vmem %s4, %s307
      $region48: #{stage_forward_pallas.18} parent=43 // pred_fallthru
        _
    $region44: #{stage_forward_pallas.18} parent=5 // pred_fallthru
      _
  $region6: #{stage_forward_pallas.18} parent=0 // loop_footer
    %s14 = sadd.s32 1, %s10
  $region7: #{stage_forward_pallas.18} parent=0 // loop_footer_branch
    %9 = sbr.rel target = $region3
  $region8: #{stage_forward_pallas.18} parent=0 // loop_exit
    _

</llo_original>
